<compile_context>
chip_gen: v7x
topology: tpu7x:2x2x1
jax: 0.10.0
libtpu: 0.0.40
codegen_flags: <defaults>
</compile_context>

<pallas_src>
import functools

import jax
import jax.numpy as jnp
from jax.experimental import pallas as pl
from jax.experimental.pallas import tpu as pltpu


# ----------------------------------------------------------------------------
# Small helpers
# ----------------------------------------------------------------------------
def _round_up(x, m):
    return ((x + m - 1) // m) * m


def _pick_tile(n, candidates):
    for c in candidates:
        if c <= n and n % c == 0:
            return c
    return n


def _vmem_capacity_bytes():
    """Physical VMEM per core; conservative 64 MiB (v7x) fallback."""
    try:
        info = pltpu.get_tpu_info()
        for name in ("vmem_capacity_bytes", "vmem_bytes", "vmem_size_bytes"):
            v = getattr(info, name, None)
            if v:
                return int(v)
    except Exception:
        pass
    return 64 * 1024 * 1024


# ----------------------------------------------------------------------------
# Kernel 1a: resident-G propagation (G kept in VMEM across all layers)
# ----------------------------------------------------------------------------
def _prop_resident_kernel(g_ref, e_ref, out_ref, *, n_layers):
    g = g_ref[...]                       # [N, N] bf16, VMEM-resident
    e = e_ref[...]                       # [N, Dp] f32 (layer-0 / ego emb)
    acc = e
    for _ in range(n_layers):            # static unroll (n_layers is tiny)
        e = jnp.dot(g, e.astype(jnp.bfloat16),
                    preferred_element_type=jnp.float32)
        acc = acc + e
    out_ref[...] = acc * (1.0 / float(n_layers + 1))


def _propagate_resident(graph_bf16, all_emb, n_layers, *, vmem_limit_bytes):
    N, Dp = all_emb.shape
    return pl.pallas_call(
        functools.partial(_prop_resident_kernel, n_layers=n_layers),
        out_shape=jax.ShapeDtypeStruct((N, Dp), jnp.float32),
        grid_spec=pltpu.PrefetchScalarGridSpec(
            num_scalar_prefetch=0,
            grid=(1,),
            in_specs=[
                pl.BlockSpec((N, N), lambda i: (0, 0)),
                pl.BlockSpec((N, Dp), lambda i: (0, 0)),
            ],
            out_specs=pl.BlockSpec((N, Dp), lambda i: (0, 0)),
        ),
        compiler_params=pltpu.CompilerParams(
            dimension_semantics=("arbitrary",),
            vmem_limit_bytes=int(vmem_limit_bytes),
        ),
    )(graph_bf16, all_emb)


# ----------------------------------------------------------------------------
# Kernel 1b: tiled/streamed propagation (one layer:  out = G @ e)
# ----------------------------------------------------------------------------
def _prop_tiled_kernel(g_ref, e_ref, out_ref, acc_ref):
    k = pl.program_id(1)

    @pl.when(k == 0)
    def _():
        acc_ref[...] = jnp.zeros_like(acc_ref)

    acc_ref[...] += jnp.dot(g_ref[...], e_ref[...],
                            preferred_element_type=jnp.float32)

    @pl.when(k == pl.num_programs(1) - 1)
    def _():
        out_ref[...] = acc_ref[...].astype(out_ref.dtype)


def _propagate_tiled(graph_bf16, all_emb, n_layers, *, tm=None, tk=None):
    N, Dp = all_emb.shape
    if tm is None:
        tm = _pick_tile(N, (256, 128, 64, 32, 16, 8))
    if tk is None:
        tk = _pick_tile(N, (512, 256, 128))

    cap = _vmem_capacity_bytes()
    # double-buffered G/e/out tiles + f32 accumulator
    need = 2 * (tm * tk * 2 + tk * Dp * 2 + tm * Dp * 4) + tm * Dp * 4
    vmem_limit = min(cap - (4 << 20), max(2 * need, 32 << 20))

    cost = pl.CostEstimate(
        flops=2 * N * N * Dp,
        transcendentals=0,
        bytes_accessed=N * N * 2 + N * Dp * 2 + N * Dp * 4,
    )

    layer = pl.pallas_call(
        _prop_tiled_kernel,
        out_shape=jax.ShapeDtypeStruct((N, Dp), jnp.float32),
        grid_spec=pltpu.PrefetchScalarGridSpec(
            num_scalar_prefetch=0,
            grid=(N // tm, N // tk),
            in_specs=[
                pl.BlockSpec((tm, tk), lambda i, k: (i, k)),   # G tile
                pl.BlockSpec((tk, Dp), lambda i, k: (k, 0)),   # e K-slice
            ],
            out_specs=pl.BlockSpec((tm, Dp), lambda i, k: (i, 0)),
            scratch_shapes=[pltpu.VMEM((tm, Dp), jnp.float32)],
        ),
        compiler_params=pltpu.CompilerParams(
            dimension_semantics=("parallel", "arbitrary"),
            vmem_limit_bytes=int(vmem_limit),
        ),
        cost_estimate=cost,
    )

    acc = all_emb
    e = all_emb
    for _ in range(n_layers):
        e = layer(graph_bf16, e.astype(jnp.bfloat16))  # f32 output
        acc = acc + e
    return acc * (1.0 / float(n_layers + 1))


def lightgcn_propagate(graph_bf16, all_emb, n_layers, *, force_tiled=False):
    """Mean over (n_layers+1) LightGCN propagation layers (padded shapes)."""
    N, Dp = all_emb.shape
    assert graph_bf16.shape == (N, N)
    cap = _vmem_capacity_bytes()
    # resident needs ~2x G (pipeline buffers) + a few copies of e
    resident_bytes = 2 * N * N * 2 + 6 * N * Dp * 4
    if (not force_tiled) and resident_bytes <= cap - (16 << 20):
        vmem_limit = min(cap - (4 << 20), max(resident_bytes + (8 << 20), 32 << 20))
        return _propagate_resident(graph_bf16, all_emb, n_layers,
                                   vmem_limit_bytes=vmem_limit)
    return _propagate_tiled(graph_bf16, all_emb, n_layers)


# ----------------------------------------------------------------------------
# Kernel 2: forward() scoring  gamma[b] = sum_d u[b, d] * i[b, d]
#           (lane-dense: inputs transposed to [D, B], output [1, B])
# ----------------------------------------------------------------------------
def _score_kernel(ut_ref, it_ref, out_ref):
    out_ref[...] = jnp.sum(ut_ref[...] * it_ref[...], axis=0, keepdims=True)


def lightgcn_score(users_emb, items_emb):
    B, D = users_emb.shape
    B_pad = _round_up(B, 128)
    ut = jnp.zeros((D, B_pad), jnp.float32).at[:, :B].set(users_emb.T)
    it = jnp.zeros((D, B_pad), jnp.float32).at[:, :B].set(items_emb.T)
    tb = _pick_tile(B_pad, (512, 256, 128))
    gamma = pl.pallas_call(
        _score_kernel,
        out_shape=jax.ShapeDtypeStruct((1, B_pad), jnp.float32),
        grid_spec=pltpu.PrefetchScalarGridSpec(
            num_scalar_prefetch=0,
            grid=(B_pad // tb,),
            in_specs=[
                pl.BlockSpec((D, tb), lambda i: (0, i)),
                pl.BlockSpec((D, tb), lambda i: (0, i)),
            ],
            out_specs=pl.BlockSpec((1, tb), lambda i: (0, i)),
        ),
        compiler_params=pltpu.CompilerParams(
            dimension_semantics=("parallel",),
        ),
    )(ut, it)
    return gamma[0, :B]


# ----------------------------------------------------------------------------
# Model wrapper (parameter setup + glue in plain JAX)
# ----------------------------------------------------------------------------
class LightGCNPallas:
    def __init__(self, num_users, num_items, latent_dim, n_layers, graph,
                 user_emb, item_emb, *, force_tiled=False):
        self.num_users = num_users
        self.num_items = num_items
        self.latent_dim = latent_dim
        self.n_layers = n_layers
        self.force_tiled = force_tiled
        self.N = num_users + num_items
        # pad to multiples of 128 so tiles satisfy (8,128) and stores are
        # lane-dense; zero padding is exact (zero rows/cols stay zero).
        self.N_pad = _round_up(self.N, 128)
        self.D_pad = _round_up(latent_dim, 128)

        g = jnp.zeros((self.N_pad, self.N_pad), jnp.float32)
        g = g.at[: self.N, : self.N].set(graph.astype(jnp.float32))
        self.graph_bf16 = g.astype(jnp.bfloat16)   # bf16 G, f32 accumulation

        self.user_emb = user_emb.astype(jnp.float32)   # [num_users, D]
        self.item_emb = item_emb.astype(jnp.float32)   # [num_items, D]

    def _padded_ego(self):
        all_emb = jnp.concatenate([self.user_emb, self.item_emb], axis=0)
        e0 = jnp.zeros((self.N_pad, self.D_pad), jnp.float32)
        return e0.at[: self.N, : self.latent_dim].set(all_emb)

    def computer(self):
        light_out = lightgcn_propagate(self.graph_bf16, self._padded_ego(),
                                       self.n_layers,
                                       force_tiled=self.force_tiled)
        light_out = light_out[: self.N, : self.latent_dim]
        users = light_out[: self.num_users]
        items = light_out[self.num_users:]
        return users, items

    def forward(self, users, items):
        all_users, all_items = self.computer()
        users_emb = jnp.take(all_users, users, axis=0)   # gather (glue)
        items_emb = jnp.take(all_items, items, axis=0)   # gather (glue)
        return lightgcn_score(users_emb, items_emb)


# ----------------------------------------------------------------------------
# Pure-JAX reference (same bf16-input / f32-accumulate numerics as kernels)
# ----------------------------------------------------------------------------
def _reference_forward(graph, user_emb, item_emb, n_layers, num_users,
                       users, items):
    g = graph.astype(jnp.bfloat16).astype(jnp.float32)
    all_emb = jnp.concatenate([user_emb, item_emb], axis=0)
    acc = all_emb
    e = all_emb
    for _ in range(n_layers):
        e = jnp.dot(g, e.astype(jnp.bfloat16).astype(jnp.float32),
                    preferred_element_type=jnp.float32)
        acc = acc + e
    light_out = acc / float(n_layers + 1)
    u = light_out[:num_users][users]
    i = light_out[num_users:][items]
    return jnp.sum(u * i, axis=1)


if __name__ == "__main__":
    # Small, deterministic synthetic setup
    num_users, num_items = 384, 384
    latent_dim = 32            # config['latent_dim_rec']
    n_layers = 3               # config['lightGCN_n_layers']
    N = num_users + num_items  # 768 (multiple of 128)
    B = 64                     # batch of (user, item) pairs

    key = jax.random.PRNGKey(0)
    k_u, k_i, k_r = jax.random.split(key, 3)

    # nn.init.normal_(std=0.1) on both embedding tables
    user_emb = (0.1 * jax.random.normal(k_u, (num_users, latent_dim))).astype(jnp.float32)
    item_emb = (0.1 * jax.random.normal(k_i, (num_items, latent_dim))).astype(jnp.float32)

    # Synthetic bipartite interaction matrix R, then symmetric-normalized
    # adjacency G = D^-1/2 [[0, R], [R^T, 0]] D^-1/2  (dataset.getSparseGraph()).
    R = (jax.random.uniform(k_r, (num_users, num_items)) < 0.05).astype(jnp.float32)
    A = jnp.zeros((N, N), jnp.float32)
    A = A.at[:num_users, num_users:].set(R)
    A = A.at[num_users:, :num_users].set(R.T)
    deg = A.sum(axis=1)
    d_inv_sqrt = jnp.where(deg > 0, 1.0 / jnp.sqrt(jnp.maximum(deg, 1e-12)), 0.0)
    graph = (d_inv_sqrt[:, None] * A) * d_inv_sqrt[None, :]

    users = jnp.arange(B, dtype=jnp.int32) % num_users
    items = (jnp.arange(B, dtype=jnp.int32) * 7) % num_items

    ref = _reference_forward(graph, user_emb, item_emb, n_layers, num_users,
                             users, items)

    # Path 1: auto-selected (resident-G at this size)
    model = LightGCNPallas(num_users, num_items, latent_dim, n_layers,
                           graph, user_emb, item_emb)
    gamma = jax.block_until_ready(model.forward(users, items))
    assert gamma.shape == (B,)
    assert jnp.allclose(gamma, ref, atol=1e-3, rtol=1e-2), (gamma, ref)

    # Path 2: force the tiled / pipelined streaming propagation
    model_tiled = LightGCNPallas(num_users, num_items, latent_dim, n_layers,
                                 graph, user_emb, item_emb, force_tiled=True)
    gamma_t = jax.block_until_ready(model_tiled.forward(users, items))
    assert gamma_t.shape == (B,)
    assert jnp.allclose(gamma_t, ref, atol=1e-3, rtol=1e-2), (gamma_t, ref)

    print("KERNEL_OK")
</pallas_src>

<mosaic_0001>
module attributes {stable_mosaic.version = 11 : i64} {
  func.func @_prop_resident_kernel(%arg0: i32, %arg1: memref<768x768xbf16, #tpu.memory_space<vmem>>, %arg2: memref<768x128xf32, #tpu.memory_space<vmem>>, %arg3: memref<768x128xf32, #tpu.memory_space<vmem>>) attributes {dimension_semantics = [#tpu.dimension_semantics<arbitrary>], iteration_bounds = array<i64: 1>, scalar_prefetch = 0 : i64, scratch_operands = 0 : i64, tpu.core_type = #tpu.core_type<tc>, window_params = [{pipeline_mode = #tpu.pipeline_mode<synchronous>, transform_indices = @transform_0, window_bounds = array<i64: 768, 768>}, {pipeline_mode = #tpu.pipeline_mode<synchronous>, transform_indices = @transform_1, window_bounds = array<i64: 768, 128>}, {pipeline_mode = #tpu.pipeline_mode<synchronous>, transform_indices = @transform_2, window_bounds = array<i64: 768, 128>}]} {
    %c0 = arith.constant 0 : index
    %c0_0 = arith.constant 0 : index
    %0 = vector.load %arg1[%c0, %c0_0] : memref<768x768xbf16, #tpu.memory_space<vmem>>, vector<768x768xbf16>
    %c0_1 = arith.constant 0 : index
    %c0_2 = arith.constant 0 : index
    %1 = vector.load %arg2[%c0_1, %c0_2] : memref<768x128xf32, #tpu.memory_space<vmem>>, vector<768x128xf32>
    %2 = arith.truncf %1 : vector<768x128xf32> to vector<768x128xbf16>
    %cst = arith.constant dense<0.000000e+00> : vector<768x128xf32>
    %3 = tpu.matmul %0, %2, %cst {dimension_numbers = #tpu.dot_dimension_numbers<[1], [0], [0], [1], [0, 0, 1, 1], [], []>} : vector<768x768xbf16>, vector<768x128xbf16>, vector<768x128xf32> -> vector<768x128xf32>
    %4 = arith.addf %1, %3 : vector<768x128xf32>
    %5 = arith.truncf %3 : vector<768x128xf32> to vector<768x128xbf16>
    %cst_3 = arith.constant dense<0.000000e+00> : vector<768x128xf32>
    %6 = tpu.matmul %0, %5, %cst_3 {dimension_numbers = #tpu.dot_dimension_numbers<[1], [0], [0], [1], [0, 0, 1, 1], [], []>} : vector<768x768xbf16>, vector<768x128xbf16>, vector<768x128xf32> -> vector<768x128xf32>
    %7 = arith.addf %4, %6 : vector<768x128xf32>
    %8 = arith.truncf %6 : vector<768x128xf32> to vector<768x128xbf16>
    %cst_4 = arith.constant dense<0.000000e+00> : vector<768x128xf32>
    %9 = tpu.matmul %0, %8, %cst_4 {dimension_numbers = #tpu.dot_dimension_numbers<[1], [0], [0], [1], [0, 0, 1, 1], [], []>} : vector<768x768xbf16>, vector<768x128xbf16>, vector<768x128xf32> -> vector<768x128xf32>
    %10 = arith.addf %7, %9 : vector<768x128xf32>
    %cst_5 = arith.constant 2.500000e-01 : f32
    %11 = vector.broadcast %cst_5 : f32 to vector<768x128xf32>
    %12 = arith.mulf %10, %11 : vector<768x128xf32>
    %c0_6 = arith.constant 0 : index
    %c0_7 = arith.constant 0 : index
    %13 = vector.load %arg3[%c0_6, %c0_7] : memref<768x128xf32, #tpu.memory_space<vmem>>, vector<768x128xf32>
    tpu.vector_store %arg3[%c0_6, %c0_7], %12 {strides = array<i32>} : memref<768x128xf32, #tpu.memory_space<vmem>>, vector<768x128xf32>,
    return
  }
  func.func @transform_0(%arg0: i32) -> (i32, i32) {
    %c0_i32 = arith.constant 0 : i32
    %c0_i32_0 = arith.constant 0 : i32
    %c0_i32_1 = arith.constant 0 : i32
    return %c0_i32, %c0_i32_0 : i32, i32
  }
  func.func @transform_1(%arg0: i32) -> (i32, i32) {
    %c0_i32 = arith.constant 0 : i32
    %c0_i32_0 = arith.constant 0 : i32
    %c0_i32_1 = arith.constant 0 : i32
    return %c0_i32, %c0_i32_0 : i32, i32
  }
  func.func @transform_2(%arg0: i32) -> (i32, i32) {
    %c0_i32 = arith.constant 0 : i32
    %c0_i32_0 = arith.constant 0 : i32
    %c0_i32_1 = arith.constant 0 : i32
    return %c0_i32, %c0_i32_0 : i32, i32
  }
}

</mosaic_0001>

<llo_original>
// kernel: tpu_custom_call.1
$region0: #{tpu_custom_call.1}
  #allocation0 [shape = 'u32[]', space=smem, size = 0x4, offset = 0x4, fixed_abs, tag = 'smem constant byte address 0x4 - core index']
  #allocation1 [shape = 'u32[144,128]{1,0:T(1,128)}', space=vmem, size = 0x12000, scoped, tag = 'internal scratch']
  %s0 = inlined_call_operand.hbm [shape: bf16[768,768], index: 0, kind: input, shape index: {}]
  %s1 = inlined_call_operand.hbm [shape: f32[768,128], index: 1, kind: input, shape index: {}]
  %s2 = inlined_call_operand.hbm [shape: f32[768,128], index: 2, kind: output, shape index: {}]
  %s3 = sld [smem:[#allocation0]]
  $region26: #{tpu_custom_call.1} parent=0
    _
  %s5 = ssub.s32 1, %s3
  %s6 = scalar_select 0, %s5, %s3
  $region1: #{tpu_custom_call.1} parent=0
    #allocation2 [shape = 'u8[1179648]{0}', space=vmem, size = 0x120000, scoped, tag = 'input window, operand 0, single buffered']
    #allocation3 [shape = 's32[1]{0}', space=sflag, size = 0x4, scoped, tag = 'scoped memory for tpu_custom_call.1']
    #allocation4 [shape = 's32[1]{0}', space=sflag, size = 0x4, scoped, tag = 'scoped memory for tpu_custom_call.1']
    #allocation5 [shape = 'u8[393216]{0}', space=vmem, size = 0x60000, scoped, tag = 'input window, operand 1, single buffered']
    #allocation6 [shape = 's32[1]{0}', space=sflag, size = 0x4, scoped, tag = 'scoped memory for tpu_custom_call.1']
    #allocation7 [shape = 'u8[393216]{0}', space=vmem, size = 0x60000, scoped, tag = 'output window, operand 0, single buffered']
    %7 = vsyncpa [#allocation3], 0
    %8 = vsyncpa [#allocation6], 0
    %9 = vsyncpa [#allocation4], 0
    // Predicated region
    $region2: #{tpu_custom_call.1} parent=1 // pred_check
      _
    $region3: #{tpu_custom_call.1} parent=1 // pred_check_branch
      %11 = sbr.rel (0) target = $region5
    $region4: #{tpu_custom_call.1} parent=1 // pred_region
      %s13 = ssub.s32 36864, 36864
      %14 = vsyncadd [#allocation3], %s13
      %s15 = sshll.u32 [#allocation2], 4
      %s16 = int_to_ptr.vmem [resolvable:$true] %s15
      %21 = dma.hbm_to_vmem [thread:$0]  %s0, 36864, %s16, [#allocation3], 384, 384, 24
    $region5: #{tpu_custom_call.1} parent=1 // pred_fallthru
      _
    // Predicated region
    $region6: #{tpu_custom_call.1} parent=1 // pred_check
      _
    $region7: #{tpu_custom_call.1} parent=1 // pred_check_branch
      %23 = sbr.rel (0) target = $region9
    $region8: #{tpu_custom_call.1} parent=1 // pred_region
      %s25 = ssub.s32 12288, 12288
      %26 = vsyncadd [#allocation6], %s25
      %s27 = sshll.u32 [#allocation5], 4
      %s28 = int_to_ptr.vmem [resolvable:$true] %s27
      %33 = dma.hbm_to_vmem [thread:$0]  %s1, 12288, %s28, [#allocation6], 128, 128, 8
    $region9: #{tpu_custom_call.1} parent=1 // pred_fallthru
      _
    // Predicated region
    $region10: #{tpu_custom_call.1} parent=1 // pred_check
      _
    $region11: #{tpu_custom_call.1} parent=1 // pred_check_branch
      %35 = sbr.rel (0) target = $region13
    $region12: #{tpu_custom_call.1} parent=1 // pred_region
      %36 = dma.done [#allocation3], 36864
    $region13: #{tpu_custom_call.1} parent=1 // pred_fallthru
      _
    // Predicated region
    $region14: #{tpu_custom_call.1} parent=1 // pred_check
      _
    $region15: #{tpu_custom_call.1} parent=1 // pred_check_branch
      %38 = sbr.rel (0) target = $region17
    $region16: #{tpu_custom_call.1} parent=1 // pred_region
      %39 = dma.done [#allocation6], 12288
    $region17: #{tpu_custom_call.1} parent=1 // pred_fallthru
      _
    %v41 = vld [vmem:[#allocation2] sm:$0xff]
    %v42 = vld [vmem:[#allocation2 + $0x8] sm:$0xff]
    %v43 = vld [vmem:[#allocation2 + $0x10] sm:$0xff]
    %v44 = vld [vmem:[#allocation2 + $0x18] sm:$0xff]
    %v45 = vld [vmem:[#allocation2 + $0x20] sm:$0xff]
    %v46 = vld [vmem:[#allocation2 + $0x28] sm:$0xff]
    %v47 = vld [vmem:[#allocation2 + $0x30] sm:$0xff]
    %v48 = vld [vmem:[#allocation2 + $0x38] sm:$0xff]
    %v49 = vld [vmem:[#allocation2 + $0x40] sm:$0xff]
    %v50 = vld [vmem:[#allocation2 + $0x48] sm:$0xff]
    %v51 = vld [vmem:[#allocation2 + $0x50] sm:$0xff]
    %v52 = vld [vmem:[#allocation2 + $0x58] sm:$0xff]
    %v53 = vld [vmem:[#allocation2 + $0x60] sm:$0xff]
    %v54 = vld [vmem:[#allocation2 + $0x68] sm:$0xff]
    %v55 = vld [vmem:[#allocation2 + $0x70] sm:$0xff]
    %v56 = vld [vmem:[#allocation2 + $0x78] sm:$0xff]
    %v57 = vld [vmem:[#allocation2 + $0x80] sm:$0xff]
    %v58 = vld [vmem:[#allocation2 + $0x88] sm:$0xff]
    %v59 = vld [vmem:[#allocation2 + $0x90] sm:$0xff]
    %v60 = vld [vmem:[#allocation2 + $0x98] sm:$0xff]
    %v61 = vld [vmem:[#allocation2 + $0xa0] sm:$0xff]
    %v62 = vld [vmem:[#allocation2 + $0xa8] sm:$0xff]
    %v63 = vld [vmem:[#allocation2 + $0xb0] sm:$0xff]
    %v64 = vld [vmem:[#allocation2 + $0xb8] sm:$0xff]
    %v65 = vld [vmem:[#allocation2 + $0xc0] sm:$0xff]
    %v66 = vld [vmem:[#allocation2 + $0xc8] sm:$0xff]
    %v67 = vld [vmem:[#allocation2 + $0xd0] sm:$0xff]
    %v68 = vld [vmem:[#allocation2 + $0xd8] sm:$0xff]
    %v69 = vld [vmem:[#allocation2 + $0xe0] sm:$0xff]
    %v70 = vld [vmem:[#allocation2 + $0xe8] sm:$0xff]
    %v71 = vld [vmem:[#allocation2 + $0xf0] sm:$0xff]
    %v72 = vld [vmem:[#allocation2 + $0xf8] sm:$0xff]
    %v73 = vld [vmem:[#allocation2 + $0x100] sm:$0xff]
    %v74 = vld [vmem:[#allocation2 + $0x108] sm:$0xff]
    %v75 = vld [vmem:[#allocation2 + $0x110] sm:$0xff]
    %v76 = vld [vmem:[#allocation2 + $0x118] sm:$0xff]
    %v77 = vld [vmem:[#allocation2 + $0x120] sm:$0xff]
    %v78 = vld [vmem:[#allocation2 + $0x128] sm:$0xff]
    %v79 = vld [vmem:[#allocation2 + $0x130] sm:$0xff]
    %v80 = vld [vmem:[#allocation2 + $0x138] sm:$0xff]
    %v81 = vld [vmem:[#allocation2 + $0x140] sm:$0xff]
    %v82 = vld [vmem:[#allocation2 + $0x148] sm:$0xff]
    %v83 = vld [vmem:[#allocation2 + $0x150] sm:$0xff]
    %v84 = vld [vmem:[#allocation2 + $0x158] sm:$0xff]
    %v85 = vld [vmem:[#allocation2 + $0x160] sm:$0xff]
    %v86 = vld [vmem:[#allocation2 + $0x168] sm:$0xff]
    %v87 = vld [vmem:[#allocation2 + $0x170] sm:$0xff]
    %v88 = vld [vmem:[#allocation2 + $0x178] sm:$0xff]
    %v89 = vld [vmem:[#allocation2 + $0x180] sm:$0xff]
    %v90 = vld [vmem:[#allocation2 + $0x188] sm:$0xff]
    %v91 = vld [vmem:[#allocation2 + $0x190] sm:$0xff]
    %v92 = vld [vmem:[#allocation2 + $0x198] sm:$0xff]
    %v93 = vld [vmem:[#allocation2 + $0x1a0] sm:$0xff]
    %v94 = vld [vmem:[#allocation2 + $0x1a8] sm:$0xff]
    %v95 = vld [vmem:[#allocation2 + $0x1b0] sm:$0xff]
    %v96 = vld [vmem:[#allocation2 + $0x1b8] sm:$0xff]
    %v97 = vld [vmem:[#allocation2 + $0x1c0] sm:$0xff]
    %v98 = vld [vmem:[#allocation2 + $0x1c8] sm:$0xff]
    %v99 = vld [vmem:[#allocation2 + $0x1d0] sm:$0xff]
    %v100 = vld [vmem:[#allocation2 + $0x1d8] sm:$0xff]
    %v101 = vld [vmem:[#allocation2 + $0x1e0] sm:$0xff]
    %v102 = vld [vmem:[#allocation2 + $0x1e8] sm:$0xff]
    %v103 = vld [vmem:[#allocation2 + $0x1f0] sm:$0xff]
    %v104 = vld [vmem:[#allocation2 + $0x1f8] sm:$0xff]
    %v105 = vld [vmem:[#allocation2 + $0x200] sm:$0xff]
    %v106 = vld [vmem:[#allocation2 + $0x208] sm:$0xff]
    %v107 = vld [vmem:[#allocation2 + $0x210] sm:$0xff]
    %v108 = vld [vmem:[#allocation2 + $0x218] sm:$0xff]
    %v109 = vld [vmem:[#allocation2 + $0x220] sm:$0xff]
    %v110 = vld [vmem:[#allocation2 + $0x228] sm:$0xff]
    %v111 = vld [vmem:[#allocation2 + $0x230] sm:$0xff]
    %v112 = vld [vmem:[#allocation2 + $0x238] sm:$0xff]
    %v113 = vld [vmem:[#allocation2 + $0x240] sm:$0xff]
    %v114 = vld [vmem:[#allocation2 + $0x248] sm:$0xff]
    %v115 = vld [vmem:[#allocation2 + $0x250] sm:$0xff]
    %v116 = vld [vmem:[#allocation2 + $0x258] sm:$0xff]
    %v117 = vld [vmem:[#allocation2 + $0x260] sm:$0xff]
    %v118 = vld [vmem:[#allocation2 + $0x268] sm:$0xff]
    %v119 = vld [vmem:[#allocation2 + $0x270] sm:$0xff]
    %v120 = vld [vmem:[#allocation2 + $0x278] sm:$0xff]
    %v121 = vld [vmem:[#allocation2 + $0x280] sm:$0xff]
    %v122 = vld [vmem:[#allocation2 + $0x288] sm:$0xff]
    %v123 = vld [vmem:[#allocation2 + $0x290] sm:$0xff]
    %v124 = vld [vmem:[#allocation2 + $0x298] sm:$0xff]
    %v125 = vld [vmem:[#allocation2 + $0x2a0] sm:$0xff]
    %v126 = vld [vmem:[#allocation2 + $0x2a8] sm:$0xff]
    %v127 = vld [vmem:[#allocation2 + $0x2b0] sm:$0xff]
    %v128 = vld [vmem:[#allocation2 + $0x2b8] sm:$0xff]
    %v129 = vld [vmem:[#allocation2 + $0x2c0] sm:$0xff]
    %v130 = vld [vmem:[#allocation2 + $0x2c8] sm:$0xff]
    %v131 = vld [vmem:[#allocation2 + $0x2d0] sm:$0xff]
    %v132 = vld [vmem:[#allocation2 + $0x2d8] sm:$0xff]
    %v133 = vld [vmem:[#allocation2 + $0x2e0] sm:$0xff]
    %v134 = vld [vmem:[#allocation2 + $0x2e8] sm:$0xff]
    %v135 = vld [vmem:[#allocation2 + $0x2f0] sm:$0xff]
    %v136 = vld [vmem:[#allocation2 + $0x2f8] sm:$0xff]
    %v137 = vld [vmem:[#allocation2 + $0x300] sm:$0xff]
    %v138 = vld [vmem:[#allocation2 + $0x308] sm:$0xff]
    %v139 = vld [vmem:[#allocation2 + $0x310] sm:$0xff]
    %v140 = vld [vmem:[#allocation2 + $0x318] sm:$0xff]
    %v141 = vld [vmem:[#allocation2 + $0x320] sm:$0xff]
    %v142 = vld [vmem:[#allocation2 + $0x328] sm:$0xff]
    %v143 = vld [vmem:[#allocation2 + $0x330] sm:$0xff]
    %v144 = vld [vmem:[#allocation2 + $0x338] sm:$0xff]
    %v145 = vld [vmem:[#allocation2 + $0x340] sm:$0xff]
    %v146 = vld [vmem:[#allocation2 + $0x348] sm:$0xff]
    %v147 = vld [vmem:[#allocation2 + $0x350] sm:$0xff]
    %v148 = vld [vmem:[#allocation2 + $0x358] sm:$0xff]
    %v149 = vld [vmem:[#allocation2 + $0x360] sm:$0xff]
    %v150 = vld [vmem:[#allocation2 + $0x368] sm:$0xff]
    %v151 = vld [vmem:[#allocation2 + $0x370] sm:$0xff]
    %v152 = vld [vmem:[#allocation2 + $0x378] sm:$0xff]
    %v153 = vld [vmem:[#allocation2 + $0x380] sm:$0xff]
    %v154 = vld [vmem:[#allocation2 + $0x388] sm:$0xff]
    %v155 = vld [vmem:[#allocation2 + $0x390] sm:$0xff]
    %v156 = vld [vmem:[#allocation2 + $0x398] sm:$0xff]
    %v157 = vld [vmem:[#allocation2 + $0x3a0] sm:$0xff]
    %v158 = vld [vmem:[#allocation2 + $0x3a8] sm:$0xff]
    %v159 = vld [vmem:[#allocation2 + $0x3b0] sm:$0xff]
    %v160 = vld [vmem:[#allocation2 + $0x3b8] sm:$0xff]
    %v161 = vld [vmem:[#allocation2 + $0x3c0] sm:$0xff]
    %v162 = vld [vmem:[#allocation2 + $0x3c8] sm:$0xff]
    %v163 = vld [vmem:[#allocation2 + $0x3d0] sm:$0xff]
    %v164 = vld [vmem:[#allocation2 + $0x3d8] sm:$0xff]
    %v165 = vld [vmem:[#allocation2 + $0x3e0] sm:$0xff]
    %v166 = vld [vmem:[#allocation2 + $0x3e8] sm:$0xff]
    %v167 = vld [vmem:[#allocation2 + $0x3f0] sm:$0xff]
    %v168 = vld [vmem:[#allocation2 + $0x3f8] sm:$0xff]
    %v169 = vld [vmem:[#allocation2 + $0x400] sm:$0xff]
    %v170 = vld [vmem:[#allocation2 + $0x408] sm:$0xff]
    %v171 = vld [vmem:[#allocation2 + $0x410] sm:$0xff]
    %v172 = vld [vmem:[#allocation2 + $0x418] sm:$0xff]
    %v173 = vld [vmem:[#allocation2 + $0x420] sm:$0xff]
    %v174 = vld [vmem:[#allocation2 + $0x428] sm:$0xff]
    %v175 = vld [vmem:[#allocation2 + $0x430] sm:$0xff]
    %v176 = vld [vmem:[#allocation2 + $0x438] sm:$0xff]
    %v177 = vld [vmem:[#allocation2 + $0x440] sm:$0xff]
    %v178 = vld [vmem:[#allocation2 + $0x448] sm:$0xff]
    %v179 = vld [vmem:[#allocation2 + $0x450] sm:$0xff]
    %v180 = vld [vmem:[#allocation2 + $0x458] sm:$0xff]
    %v181 = vld [vmem:[#allocation2 + $0x460] sm:$0xff]
    %v182 = vld [vmem:[#allocation2 + $0x468] sm:$0xff]
    %v183 = vld [vmem:[#allocation2 + $0x470] sm:$0xff]
    %v184 = vld [vmem:[#allocation2 + $0x478] sm:$0xff]
    %v185 = vld [vmem:[#allocation2 + $0x480] sm:$0xff]
    %v186 = vld [vmem:[#allocation2 + $0x488] sm:$0xff]
    %v187 = vld [vmem:[#allocation2 + $0x490] sm:$0xff]
    %v188 = vld [vmem:[#allocation2 + $0x498] sm:$0xff]
    %v189 = vld [vmem:[#allocation2 + $0x4a0] sm:$0xff]
    %v190 = vld [vmem:[#allocation2 + $0x4a8] sm:$0xff]
    %v191 = vld [vmem:[#allocation2 + $0x4b0] sm:$0xff]
    %v192 = vld [vmem:[#allocation2 + $0x4b8] sm:$0xff]
    %v193 = vld [vmem:[#allocation2 + $0x4c0] sm:$0xff]
    %v194 = vld [vmem:[#allocation2 + $0x4c8] sm:$0xff]
    %v195 = vld [vmem:[#allocation2 + $0x4d0] sm:$0xff]
    %v196 = vld [vmem:[#allocation2 + $0x4d8] sm:$0xff]
    %v197 = vld [vmem:[#allocation2 + $0x4e0] sm:$0xff]
    %v198 = vld [vmem:[#allocation2 + $0x4e8] sm:$0xff]
    %v199 = vld [vmem:[#allocation2 + $0x4f0] sm:$0xff]
    %v200 = vld [vmem:[#allocation2 + $0x4f8] sm:$0xff]
    %v201 = vld [vmem:[#allocation2 + $0x500] sm:$0xff]
    %v202 = vld [vmem:[#allocation2 + $0x508] sm:$0xff]
    %v203 = vld [vmem:[#allocation2 + $0x510] sm:$0xff]
    %v204 = vld [vmem:[#allocation2 + $0x518] sm:$0xff]
    %v205 = vld [vmem:[#allocation2 + $0x520] sm:$0xff]
    %v206 = vld [vmem:[#allocation2 + $0x528] sm:$0xff]
    %v207 = vld [vmem:[#allocation2 + $0x530] sm:$0xff]
    %v208 = vld [vmem:[#allocation2 + $0x538] sm:$0xff]
    %v209 = vld [vmem:[#allocation2 + $0x540] sm:$0xff]
    %v210 = vld [vmem:[#allocation2 + $0x548] sm:$0xff]
    %v211 = vld [vmem:[#allocation2 + $0x550] sm:$0xff]
    %v212 = vld [vmem:[#allocation2 + $0x558] sm:$0xff]
    %v213 = vld [vmem:[#allocation2 + $0x560] sm:$0xff]
    %v214 = vld [vmem:[#allocation2 + $0x568] sm:$0xff]
    %v215 = vld [vmem:[#allocation2 + $0x570] sm:$0xff]
    %v216 = vld [vmem:[#allocation2 + $0x578] sm:$0xff]
    %v217 = vld [vmem:[#allocation2 + $0x580] sm:$0xff]
    %v218 = vld [vmem:[#allocation2 + $0x588] sm:$0xff]
    %v219 = vld [vmem:[#allocation2 + $0x590] sm:$0xff]
    %v220 = vld [vmem:[#allocation2 + $0x598] sm:$0xff]
    %v221 = vld [vmem:[#allocation2 + $0x5a0] sm:$0xff]
    %v222 = vld [vmem:[#allocation2 + $0x5a8] sm:$0xff]
    %v223 = vld [vmem:[#allocation2 + $0x5b0] sm:$0xff]
    %v224 = vld [vmem:[#allocation2 + $0x5b8] sm:$0xff]
    %v225 = vld [vmem:[#allocation2 + $0x5c0] sm:$0xff]
    %v226 = vld [vmem:[#allocation2 + $0x5c8] sm:$0xff]
    %v227 = vld [vmem:[#allocation2 + $0x5d0] sm:$0xff]
    %v228 = vld [vmem:[#allocation2 + $0x5d8] sm:$0xff]
    %v229 = vld [vmem:[#allocation2 + $0x5e0] sm:$0xff]
    %v230 = vld [vmem:[#allocation2 + $0x5e8] sm:$0xff]
    %v231 = vld [vmem:[#allocation2 + $0x5f0] sm:$0xff]
    %v232 = vld [vmem:[#allocation2 + $0x5f8] sm:$0xff]
    %v233 = vld [vmem:[#allocation2 + $0x600] sm:$0xff]
    %v234 = vld [vmem:[#allocation2 + $0x608] sm:$0xff]
    %v235 = vld [vmem:[#allocation2 + $0x610] sm:$0xff]
    %v236 = vld [vmem:[#allocation2 + $0x618] sm:$0xff]
    %v237 = vld [vmem:[#allocation2 + $0x620] sm:$0xff]
    %v238 = vld [vmem:[#allocation2 + $0x628] sm:$0xff]
    %v239 = vld [vmem:[#allocation2 + $0x630] sm:$0xff]
    %v240 = vld [vmem:[#allocation2 + $0x638] sm:$0xff]
    %v241 = vld [vmem:[#allocation2 + $0x640] sm:$0xff]
    %v242 = vld [vmem:[#allocation2 + $0x648] sm:$0xff]
    %v243 = vld [vmem:[#allocation2 + $0x650] sm:$0xff]
    %v244 = vld [vmem:[#allocation2 + $0x658] sm:$0xff]
    %v245 = vld [vmem:[#allocation2 + $0x660] sm:$0xff]
    %v246 = vld [vmem:[#allocation2 + $0x668] sm:$0xff]
    %v247 = vld [vmem:[#allocation2 + $0x670] sm:$0xff]
    %v248 = vld [vmem:[#allocation2 + $0x678] sm:$0xff]
    %v249 = vld [vmem:[#allocation2 + $0x680] sm:$0xff]
    %v250 = vld [vmem:[#allocation2 + $0x688] sm:$0xff]
    %v251 = vld [vmem:[#allocation2 + $0x690] sm:$0xff]
    %v252 = vld [vmem:[#allocation2 + $0x698] sm:$0xff]
    %v253 = vld [vmem:[#allocation2 + $0x6a0] sm:$0xff]
    %v254 = vld [vmem:[#allocation2 + $0x6a8] sm:$0xff]
    %v255 = vld [vmem:[#allocation2 + $0x6b0] sm:$0xff]
    %v256 = vld [vmem:[#allocation2 + $0x6b8] sm:$0xff]
    %v257 = vld [vmem:[#allocation2 + $0x6c0] sm:$0xff]
    %v258 = vld [vmem:[#allocation2 + $0x6c8] sm:$0xff]
    %v259 = vld [vmem:[#allocation2 + $0x6d0] sm:$0xff]
    %v260 = vld [vmem:[#allocation2 + $0x6d8] sm:$0xff]
    %v261 = vld [vmem:[#allocation2 + $0x6e0] sm:$0xff]
    %v262 = vld [vmem:[#allocation2 + $0x6e8] sm:$0xff]
    %v263 = vld [vmem:[#allocation2 + $0x6f0] sm:$0xff]
    %v264 = vld [vmem:[#allocation2 + $0x6f8] sm:$0xff]
    %v265 = vld [vmem:[#allocation2 + $0x700] sm:$0xff]
    %v266 = vld [vmem:[#allocation2 + $0x708] sm:$0xff]
    %v267 = vld [vmem:[#allocation2 + $0x710] sm:$0xff]
    %v268 = vld [vmem:[#allocation2 + $0x718] sm:$0xff]
    %v269 = vld [vmem:[#allocation2 + $0x720] sm:$0xff]
    %v270 = vld [vmem:[#allocation2 + $0x728] sm:$0xff]
    %v271 = vld [vmem:[#allocation2 + $0x730] sm:$0xff]
    %v272 = vld [vmem:[#allocation2 + $0x738] sm:$0xff]
    %v273 = vld [vmem:[#allocation2 + $0x740] sm:$0xff]
    %v274 = vld [vmem:[#allocation2 + $0x748] sm:$0xff]
    %v275 = vld [vmem:[#allocation2 + $0x750] sm:$0xff]
    %v276 = vld [vmem:[#allocation2 + $0x758] sm:$0xff]
    %v277 = vld [vmem:[#allocation2 + $0x760] sm:$0xff]
    %v278 = vld [vmem:[#allocation2 + $0x768] sm:$0xff]
    %v279 = vld [vmem:[#allocation2 + $0x770] sm:$0xff]
    %v280 = vld [vmem:[#allocation2 + $0x778] sm:$0xff]
    %v281 = vld [vmem:[#allocation2 + $0x780] sm:$0xff]
    %v282 = vld [vmem:[#allocation2 + $0x788] sm:$0xff]
    %v283 = vld [vmem:[#allocation2 + $0x790] sm:$0xff]
    %v284 = vld [vmem:[#allocation2 + $0x798] sm:$0xff]
    %v285 = vld [vmem:[#allocation2 + $0x7a0] sm:$0xff]
    %v286 = vld [vmem:[#allocation2 + $0x7a8] sm:$0xff]
    %v287 = vld [vmem:[#allocation2 + $0x7b0] sm:$0xff]
    %v288 = vld [vmem:[#allocation2 + $0x7b8] sm:$0xff]
    %v289 = vld [vmem:[#allocation2 + $0x7c0] sm:$0xff]
    %v290 = vld [vmem:[#allocation2 + $0x7c8] sm:$0xff]
    %v291 = vld [vmem:[#allocation2 + $0x7d0] sm:$0xff]
    %v292 = vld [vmem:[#allocation2 + $0x7d8] sm:$0xff]
    %v293 = vld [vmem:[#allocation2 + $0x7e0] sm:$0xff]
    %v294 = vld [vmem:[#allocation2 + $0x7e8] sm:$0xff]
    %v295 = vld [vmem:[#allocation2 + $0x7f0] sm:$0xff]
    %v296 = vld [vmem:[#allocation2 + $0x7f8] sm:$0xff]
    %v297 = vld [vmem:[#allocation2 + $0x800] sm:$0xff]
    %v298 = vld [vmem:[#allocation2 + $0x808] sm:$0xff]
    %v299 = vld [vmem:[#allocation2 + $0x810] sm:$0xff]
    %v300 = vld [vmem:[#allocation2 + $0x818] sm:$0xff]
    %v301 = vld [vmem:[#allocation2 + $0x820] sm:$0xff]
    %v302 = vld [vmem:[#allocation2 + $0x828] sm:$0xff]
    %v303 = vld [vmem:[#allocation2 + $0x830] sm:$0xff]
    %v304 = vld [vmem:[#allocation2 + $0x838] sm:$0xff]
    %v305 = vld [vmem:[#allocation2 + $0x840] sm:$0xff]
    %v306 = vld [vmem:[#allocation2 + $0x848] sm:$0xff]
    %v307 = vld [vmem:[#allocation2 + $0x850] sm:$0xff]
    %v308 = vld [vmem:[#allocation2 + $0x858] sm:$0xff]
    %v309 = vld [vmem:[#allocation2 + $0x860] sm:$0xff]
    %v310 = vld [vmem:[#allocation2 + $0x868] sm:$0xff]
    %v311 = vld [vmem:[#allocation2 + $0x870] sm:$0xff]
    %v312 = vld [vmem:[#allocation2 + $0x878] sm:$0xff]
    %v313 = vld [vmem:[#allocation2 + $0x880] sm:$0xff]
    %v314 = vld [vmem:[#allocation2 + $0x888] sm:$0xff]
    %v315 = vld [vmem:[#allocation2 + $0x890] sm:$0xff]
    %v316 = vld [vmem:[#allocation2 + $0x898] sm:$0xff]
    %v317 = vld [vmem:[#allocation2 + $0x8a0] sm:$0xff]
    %v318 = vld [vmem:[#allocation2 + $0x8a8] sm:$0xff]
    %v319 = vld [vmem:[#allocation2 + $0x8b0] sm:$0xff]
    %v320 = vld [vmem:[#allocation2 + $0x8b8] sm:$0xff]
    %v321 = vld [vmem:[#allocation2 + $0x8c0] sm:$0xff]
    %v322 = vld [vmem:[#allocation2 + $0x8c8] sm:$0xff]
    %v323 = vld [vmem:[#allocation2 + $0x8d0] sm:$0xff]
    %v324 = vld [vmem:[#allocation2 + $0x8d8] sm:$0xff]
    %v325 = vld [vmem:[#allocation2 + $0x8e0] sm:$0xff]
    %v326 = vld [vmem:[#allocation2 + $0x8e8] sm:$0xff]
    %v327 = vld [vmem:[#allocation2 + $0x8f0] sm:$0xff]
    %v328 = vld [vmem:[#allocation2 + $0x8f8] sm:$0xff]
    %v329 = vld [vmem:[#allocation5] sm:$0xff]
    %v330 = vld [vmem:[#allocation5 + $0x8] sm:$0xff]
    %v331 = vld [vmem:[#allocation5 + $0x10] sm:$0xff]
    %v332 = vld [vmem:[#allocation5 + $0x18] sm:$0xff]
    %v333 = vld [vmem:[#allocation5 + $0x20] sm:$0xff]
    %v334 = vld [vmem:[#allocation5 + $0x28] sm:$0xff]
    %v335 = vld [vmem:[#allocation5 + $0x30] sm:$0xff]
    %v336 = vld [vmem:[#allocation5 + $0x38] sm:$0xff]
    %v337 = vld [vmem:[#allocation5 + $0x40] sm:$0xff]
    %v338 = vld [vmem:[#allocation5 + $0x48] sm:$0xff]
    %v339 = vld [vmem:[#allocation5 + $0x50] sm:$0xff]
    %v340 = vld [vmem:[#allocation5 + $0x58] sm:$0xff]
    %v341 = vld [vmem:[#allocation5 + $0x60] sm:$0xff]
    %v342 = vld [vmem:[#allocation5 + $0x68] sm:$0xff]
    %v343 = vld [vmem:[#allocation5 + $0x70] sm:$0xff]
    %v344 = vld [vmem:[#allocation5 + $0x78] sm:$0xff]
    %v345 = vld [vmem:[#allocation5 + $0x80] sm:$0xff]
    %v346 = vld [vmem:[#allocation5 + $0x88] sm:$0xff]
    %v347 = vld [vmem:[#allocation5 + $0x90] sm:$0xff]
    %v348 = vld [vmem:[#allocation5 + $0x98] sm:$0xff]
    %v349 = vld [vmem:[#allocation5 + $0xa0] sm:$0xff]
    %v350 = vld [vmem:[#allocation5 + $0xa8] sm:$0xff]
    %v351 = vld [vmem:[#allocation5 + $0xb0] sm:$0xff]
    %v352 = vld [vmem:[#allocation5 + $0xb8] sm:$0xff]
    %v353 = vld [vmem:[#allocation5 + $0xc0] sm:$0xff]
    %v354 = vld [vmem:[#allocation5 + $0xc8] sm:$0xff]
    %v355 = vld [vmem:[#allocation5 + $0xd0] sm:$0xff]
    %v356 = vld [vmem:[#allocation5 + $0xd8] sm:$0xff]
    %v357 = vld [vmem:[#allocation5 + $0xe0] sm:$0xff]
    %v358 = vld [vmem:[#allocation5 + $0xe8] sm:$0xff]
    %v359 = vld [vmem:[#allocation5 + $0xf0] sm:$0xff]
    %v360 = vld [vmem:[#allocation5 + $0xf8] sm:$0xff]
    %v361 = vld [vmem:[#allocation5 + $0x100] sm:$0xff]
    %v362 = vld [vmem:[#allocation5 + $0x108] sm:$0xff]
    %v363 = vld [vmem:[#allocation5 + $0x110] sm:$0xff]
    %v364 = vld [vmem:[#allocation5 + $0x118] sm:$0xff]
    %v365 = vld [vmem:[#allocation5 + $0x120] sm:$0xff]
    %v366 = vld [vmem:[#allocation5 + $0x128] sm:$0xff]
    %v367 = vld [vmem:[#allocation5 + $0x130] sm:$0xff]
    %v368 = vld [vmem:[#allocation5 + $0x138] sm:$0xff]
    %v369 = vld [vmem:[#allocation5 + $0x140] sm:$0xff]
    %v370 = vld [vmem:[#allocation5 + $0x148] sm:$0xff]
    %v371 = vld [vmem:[#allocation5 + $0x150] sm:$0xff]
    %v372 = vld [vmem:[#allocation5 + $0x158] sm:$0xff]
    %v373 = vld [vmem:[#allocation5 + $0x160] sm:$0xff]
    %v374 = vld [vmem:[#allocation5 + $0x168] sm:$0xff]
    %v375 = vld [vmem:[#allocation5 + $0x170] sm:$0xff]
    %v376 = vld [vmem:[#allocation5 + $0x178] sm:$0xff]
    %v377 = vld [vmem:[#allocation5 + $0x180] sm:$0xff]
    %v378 = vld [vmem:[#allocation5 + $0x188] sm:$0xff]
    %v379 = vld [vmem:[#allocation5 + $0x190] sm:$0xff]
    %v380 = vld [vmem:[#allocation5 + $0x198] sm:$0xff]
    %v381 = vld [vmem:[#allocation5 + $0x1a0] sm:$0xff]
    %v382 = vld [vmem:[#allocation5 + $0x1a8] sm:$0xff]
    %v383 = vld [vmem:[#allocation5 + $0x1b0] sm:$0xff]
    %v384 = vld [vmem:[#allocation5 + $0x1b8] sm:$0xff]
    %v385 = vld [vmem:[#allocation5 + $0x1c0] sm:$0xff]
    %v386 = vld [vmem:[#allocation5 + $0x1c8] sm:$0xff]
    %v387 = vld [vmem:[#allocation5 + $0x1d0] sm:$0xff]
    %v388 = vld [vmem:[#allocation5 + $0x1d8] sm:$0xff]
    %v389 = vld [vmem:[#allocation5 + $0x1e0] sm:$0xff]
    %v390 = vld [vmem:[#allocation5 + $0x1e8] sm:$0xff]
    %v391 = vld [vmem:[#allocation5 + $0x1f0] sm:$0xff]
    %v392 = vld [vmem:[#allocation5 + $0x1f8] sm:$0xff]
    %v393 = vld [vmem:[#allocation5 + $0x200] sm:$0xff]
    %v394 = vld [vmem:[#allocation5 + $0x208] sm:$0xff]
    %v395 = vld [vmem:[#allocation5 + $0x210] sm:$0xff]
    %v396 = vld [vmem:[#allocation5 + $0x218] sm:$0xff]
    %v397 = vld [vmem:[#allocation5 + $0x220] sm:$0xff]
    %v398 = vld [vmem:[#allocation5 + $0x228] sm:$0xff]
    %v399 = vld [vmem:[#allocation5 + $0x230] sm:$0xff]
    %v400 = vld [vmem:[#allocation5 + $0x238] sm:$0xff]
    %v401 = vld [vmem:[#allocation5 + $0x240] sm:$0xff]
    %v402 = vld [vmem:[#allocation5 + $0x248] sm:$0xff]
    %v403 = vld [vmem:[#allocation5 + $0x250] sm:$0xff]
    %v404 = vld [vmem:[#allocation5 + $0x258] sm:$0xff]
    %v405 = vld [vmem:[#allocation5 + $0x260] sm:$0xff]
    %v406 = vld [vmem:[#allocation5 + $0x268] sm:$0xff]
    %v407 = vld [vmem:[#allocation5 + $0x270] sm:$0xff]
    %v408 = vld [vmem:[#allocation5 + $0x278] sm:$0xff]
    %v409 = vld [vmem:[#allocation5 + $0x280] sm:$0xff]
    %v410 = vld [vmem:[#allocation5 + $0x288] sm:$0xff]
    %v411 = vld [vmem:[#allocation5 + $0x290] sm:$0xff]
    %v412 = vld [vmem:[#allocation5 + $0x298] sm:$0xff]
    %v413 = vld [vmem:[#allocation5 + $0x2a0] sm:$0xff]
    %v414 = vld [vmem:[#allocation5 + $0x2a8] sm:$0xff]
    %v415 = vld [vmem:[#allocation5 + $0x2b0] sm:$0xff]
    %v416 = vld [vmem:[#allocation5 + $0x2b8] sm:$0xff]
    %v417 = vld [vmem:[#allocation5 + $0x2c0] sm:$0xff]
    %v418 = vld [vmem:[#allocation5 + $0x2c8] sm:$0xff]
    %v419 = vld [vmem:[#allocation5 + $0x2d0] sm:$0xff]
    %v420 = vld [vmem:[#allocation5 + $0x2d8] sm:$0xff]
    %v421 = vld [vmem:[#allocation5 + $0x2e0] sm:$0xff]
    %v422 = vld [vmem:[#allocation5 + $0x2e8] sm:$0xff]
    %v423 = vld [vmem:[#allocation5 + $0x2f0] sm:$0xff]
    %v424 = vld [vmem:[#allocation5 + $0x2f8] sm:$0xff]
    %v425 = vpack.c.bf16 %v330, %v329
    %v426 = vpack.c.bf16 %v332, %v331
    %v427 = vpack.c.bf16 %v334, %v333
    %v428 = vpack.c.bf16 %v336, %v335
    %v429 = vpack.c.bf16 %v338, %v337
    %v430 = vpack.c.bf16 %v340, %v339
    %v431 = vpack.c.bf16 %v342, %v341
    %v432 = vpack.c.bf16 %v344, %v343
    %v433 = vpack.c.bf16 %v346, %v345
    %v434 = vpack.c.bf16 %v348, %v347
    %v435 = vpack.c.bf16 %v350, %v349
    %v436 = vpack.c.bf16 %v352, %v351
    %v437 = vpack.c.bf16 %v354, %v353
    %v438 = vpack.c.bf16 %v356, %v355
    %v439 = vpack.c.bf16 %v358, %v357
    %v440 = vpack.c.bf16 %v360, %v359
    %v441 = vpack.c.bf16 %v362, %v361
    %v442 = vpack.c.bf16 %v364, %v363
    %v443 = vpack.c.bf16 %v366, %v365
    %v444 = vpack.c.bf16 %v368, %v367
    %v445 = vpack.c.bf16 %v370, %v369
    %v446 = vpack.c.bf16 %v372, %v371
    %v447 = vpack.c.bf16 %v374, %v373
    %v448 = vpack.c.bf16 %v376, %v375
    %v449 = vpack.c.bf16 %v378, %v377
    %v450 = vpack.c.bf16 %v380, %v379
    %v451 = vpack.c.bf16 %v382, %v381
    %v452 = vpack.c.bf16 %v384, %v383
    %v453 = vpack.c.bf16 %v386, %v385
    %v454 = vpack.c.bf16 %v388, %v387
    %v455 = vpack.c.bf16 %v390, %v389
    %v456 = vpack.c.bf16 %v392, %v391
    %v457 = vpack.c.bf16 %v394, %v393
    %v458 = vpack.c.bf16 %v396, %v395
    %v459 = vpack.c.bf16 %v398, %v397
    %v460 = vpack.c.bf16 %v400, %v399
    %v461 = vpack.c.bf16 %v402, %v401
    %v462 = vpack.c.bf16 %v404, %v403
    %v463 = vpack.c.bf16 %v406, %v405
    %v464 = vpack.c.bf16 %v408, %v407
    %v465 = vpack.c.bf16 %v410, %v409
    %v466 = vpack.c.bf16 %v412, %v411
    %v467 = vpack.c.bf16 %v414, %v413
    %v468 = vpack.c.bf16 %v416, %v415
    %v469 = vpack.c.bf16 %v418, %v417
    %v470 = vpack.c.bf16 %v420, %v419
    %v471 = vpack.c.bf16 %v422, %v421
    %v472 = vpack.c.bf16 %v424, %v423
    %v761 = vunpack.c.l.b16 %v41
    %v762 = vunpack.c.h.b16 %v41
    %v763 = vunpack.c.l.b16 %v42
    %v764 = vunpack.c.h.b16 %v42
    %v765 = vunpack.c.l.b16 %v43
    %v766 = vunpack.c.h.b16 %v43
    %v767 = vunpack.c.l.b16 %v44
    %v768 = vunpack.c.h.b16 %v44
    %v769 = vunpack.c.l.b16 %v45
    %v770 = vunpack.c.h.b16 %v45
    %v771 = vunpack.c.l.b16 %v46
    %v772 = vunpack.c.h.b16 %v46
    %v773 = vunpack.c.l.b16 %v47
    %v774 = vunpack.c.h.b16 %v47
    %v775 = vunpack.c.l.b16 %v48
    %v776 = vunpack.c.h.b16 %v48
    %v777 = vunpack.c.l.b16 %v49
    %v778 = vunpack.c.h.b16 %v49
    %v779 = vunpack.c.l.b16 %v50
    %v780 = vunpack.c.h.b16 %v50
    %v781 = vunpack.c.l.b16 %v51
    %v782 = vunpack.c.h.b16 %v51
    %v783 = vunpack.c.l.b16 %v52
    %v784 = vunpack.c.h.b16 %v52
    %v785 = vunpack.c.l.b16 %v53
    %v786 = vunpack.c.h.b16 %v53
    %v787 = vunpack.c.l.b16 %v54
    %v788 = vunpack.c.h.b16 %v54
    %v789 = vunpack.c.l.b16 %v55
    %v790 = vunpack.c.h.b16 %v55
    %v791 = vunpack.c.l.b16 %v56
    %v792 = vunpack.c.h.b16 %v56
    %v793 = vunpack.c.l.b16 %v57
    %v794 = vunpack.c.h.b16 %v57
    %v795 = vunpack.c.l.b16 %v58
    %v796 = vunpack.c.h.b16 %v58
    %v797 = vunpack.c.l.b16 %v59
    %v798 = vunpack.c.h.b16 %v59
    %v799 = vunpack.c.l.b16 %v60
    %v800 = vunpack.c.h.b16 %v60
    %v801 = vunpack.c.l.b16 %v61
    %v802 = vunpack.c.h.b16 %v61
    %v803 = vunpack.c.l.b16 %v62
    %v804 = vunpack.c.h.b16 %v62
    %v805 = vunpack.c.l.b16 %v63
    %v806 = vunpack.c.h.b16 %v63
    %v807 = vunpack.c.l.b16 %v64
    %v808 = vunpack.c.h.b16 %v64
    %v809 = vunpack.c.l.b16 %v65
    %v810 = vunpack.c.h.b16 %v65
    %v811 = vunpack.c.l.b16 %v66
    %v812 = vunpack.c.h.b16 %v66
    %v813 = vunpack.c.l.b16 %v67
    %v814 = vunpack.c.h.b16 %v67
    %v815 = vunpack.c.l.b16 %v68
    %v816 = vunpack.c.h.b16 %v68
    %v817 = vunpack.c.l.b16 %v69
    %v818 = vunpack.c.h.b16 %v69
    %v819 = vunpack.c.l.b16 %v70
    %v820 = vunpack.c.h.b16 %v70
    %v821 = vunpack.c.l.b16 %v71
    %v822 = vunpack.c.h.b16 %v71
    %v823 = vunpack.c.l.b16 %v72
    %v824 = vunpack.c.h.b16 %v72
    %v825 = vunpack.c.l.b16 %v73
    %v826 = vunpack.c.h.b16 %v73
    %v827 = vunpack.c.l.b16 %v74
    %v828 = vunpack.c.h.b16 %v74
    %v829 = vunpack.c.l.b16 %v75
    %v830 = vunpack.c.h.b16 %v75
    %v831 = vunpack.c.l.b16 %v76
    %v832 = vunpack.c.h.b16 %v76
    %v833 = vunpack.c.l.b16 %v77
    %v834 = vunpack.c.h.b16 %v77
    %v835 = vunpack.c.l.b16 %v78
    %v836 = vunpack.c.h.b16 %v78
    %v837 = vunpack.c.l.b16 %v79
    %v838 = vunpack.c.h.b16 %v79
    %v839 = vunpack.c.l.b16 %v80
    %v840 = vunpack.c.h.b16 %v80
    %v841 = vunpack.c.l.b16 %v81
    %v842 = vunpack.c.h.b16 %v81
    %v843 = vunpack.c.l.b16 %v82
    %v844 = vunpack.c.h.b16 %v82
    %v845 = vunpack.c.l.b16 %v83
    %v846 = vunpack.c.h.b16 %v83
    %v847 = vunpack.c.l.b16 %v84
    %v848 = vunpack.c.h.b16 %v84
    %v849 = vunpack.c.l.b16 %v85
    %v850 = vunpack.c.h.b16 %v85
    %v851 = vunpack.c.l.b16 %v86
    %v852 = vunpack.c.h.b16 %v86
    %v853 = vunpack.c.l.b16 %v87
    %v854 = vunpack.c.h.b16 %v87
    %v855 = vunpack.c.l.b16 %v88
    %v856 = vunpack.c.h.b16 %v88
    %v857 = vunpack.c.l.b16 %v89
    %v858 = vunpack.c.h.b16 %v89
    %v859 = vunpack.c.l.b16 %v90
    %v860 = vunpack.c.h.b16 %v90
    %v861 = vunpack.c.l.b16 %v91
    %v862 = vunpack.c.h.b16 %v91
    %v863 = vunpack.c.l.b16 %v92
    %v864 = vunpack.c.h.b16 %v92
    %v865 = vunpack.c.l.b16 %v93
    %v866 = vunpack.c.h.b16 %v93
    %v867 = vunpack.c.l.b16 %v94
    %v868 = vunpack.c.h.b16 %v94
    %v869 = vunpack.c.l.b16 %v95
    %v870 = vunpack.c.h.b16 %v95
    %v871 = vunpack.c.l.b16 %v96
    %v872 = vunpack.c.h.b16 %v96
    %v873 = vunpack.c.l.b16 %v97
    %v874 = vunpack.c.h.b16 %v97
    %v875 = vunpack.c.l.b16 %v98
    %v876 = vunpack.c.h.b16 %v98
    %v877 = vunpack.c.l.b16 %v99
    %v878 = vunpack.c.h.b16 %v99
    %v879 = vunpack.c.l.b16 %v100
    %v880 = vunpack.c.h.b16 %v100
    %v881 = vunpack.c.l.b16 %v101
    %v882 = vunpack.c.h.b16 %v101
    %v883 = vunpack.c.l.b16 %v102
    %v884 = vunpack.c.h.b16 %v102
    %v885 = vunpack.c.l.b16 %v103
    %v886 = vunpack.c.h.b16 %v103
    %v887 = vunpack.c.l.b16 %v104
    %v888 = vunpack.c.h.b16 %v104
    %v889 = vunpack.c.l.b16 %v105
    %v890 = vunpack.c.h.b16 %v105
    %v891 = vunpack.c.l.b16 %v106
    %v892 = vunpack.c.h.b16 %v106
    %v893 = vunpack.c.l.b16 %v107
    %v894 = vunpack.c.h.b16 %v107
    %v895 = vunpack.c.l.b16 %v108
    %v896 = vunpack.c.h.b16 %v108
    %v897 = vunpack.c.l.b16 %v109
    %v898 = vunpack.c.h.b16 %v109
    %v899 = vunpack.c.l.b16 %v110
    %v900 = vunpack.c.h.b16 %v110
    %v901 = vunpack.c.l.b16 %v111
    %v902 = vunpack.c.h.b16 %v111
    %v903 = vunpack.c.l.b16 %v112
    %v904 = vunpack.c.h.b16 %v112
    %v905 = vunpack.c.l.b16 %v113
    %v906 = vunpack.c.h.b16 %v113
    %v907 = vunpack.c.l.b16 %v114
    %v908 = vunpack.c.h.b16 %v114
    %v909 = vunpack.c.l.b16 %v115
    %v910 = vunpack.c.h.b16 %v115
    %v911 = vunpack.c.l.b16 %v116
    %v912 = vunpack.c.h.b16 %v116
    %v913 = vunpack.c.l.b16 %v117
    %v914 = vunpack.c.h.b16 %v117
    %v915 = vunpack.c.l.b16 %v118
    %v916 = vunpack.c.h.b16 %v118
    %v917 = vunpack.c.l.b16 %v119
    %v918 = vunpack.c.h.b16 %v119
    %v919 = vunpack.c.l.b16 %v120
    %v920 = vunpack.c.h.b16 %v120
    %v921 = vunpack.c.l.b16 %v121
    %v922 = vunpack.c.h.b16 %v121
    %v923 = vunpack.c.l.b16 %v122
    %v924 = vunpack.c.h.b16 %v122
    %v925 = vunpack.c.l.b16 %v123
    %v926 = vunpack.c.h.b16 %v123
    %v927 = vunpack.c.l.b16 %v124
    %v928 = vunpack.c.h.b16 %v124
    %v929 = vunpack.c.l.b16 %v125
    %v930 = vunpack.c.h.b16 %v125
    %v931 = vunpack.c.l.b16 %v126
    %v932 = vunpack.c.h.b16 %v126
    %v933 = vunpack.c.l.b16 %v127
    %v934 = vunpack.c.h.b16 %v127
    %v935 = vunpack.c.l.b16 %v128
    %v936 = vunpack.c.h.b16 %v128
    %v937 = vunpack.c.l.b16 %v129
    %v938 = vunpack.c.h.b16 %v129
    %v939 = vunpack.c.l.b16 %v130
    %v940 = vunpack.c.h.b16 %v130
    %v941 = vunpack.c.l.b16 %v131
    %v942 = vunpack.c.h.b16 %v131
    %v943 = vunpack.c.l.b16 %v132
    %v944 = vunpack.c.h.b16 %v132
    %v945 = vunpack.c.l.b16 %v133
    %v946 = vunpack.c.h.b16 %v133
    %v947 = vunpack.c.l.b16 %v134
    %v948 = vunpack.c.h.b16 %v134
    %v949 = vunpack.c.l.b16 %v135
    %v950 = vunpack.c.h.b16 %v135
    %v951 = vunpack.c.l.b16 %v136
    %v952 = vunpack.c.h.b16 %v136
    %v953 = vunpack.c.l.b16 %v137
    %v954 = vunpack.c.h.b16 %v137
    %v955 = vunpack.c.l.b16 %v138
    %v956 = vunpack.c.h.b16 %v138
    %v957 = vunpack.c.l.b16 %v139
    %v958 = vunpack.c.h.b16 %v139
    %v959 = vunpack.c.l.b16 %v140
    %v960 = vunpack.c.h.b16 %v140
    %v961 = vunpack.c.l.b16 %v141
    %v962 = vunpack.c.h.b16 %v141
    %v963 = vunpack.c.l.b16 %v142
    %v964 = vunpack.c.h.b16 %v142
    %v965 = vunpack.c.l.b16 %v143
    %v966 = vunpack.c.h.b16 %v143
    %v967 = vunpack.c.l.b16 %v144
    %v968 = vunpack.c.h.b16 %v144
    %v969 = vunpack.c.l.b16 %v145
    %v970 = vunpack.c.h.b16 %v145
    %v971 = vunpack.c.l.b16 %v146
    %v972 = vunpack.c.h.b16 %v146
    %v973 = vunpack.c.l.b16 %v147
    %v974 = vunpack.c.h.b16 %v147
    %v975 = vunpack.c.l.b16 %v148
    %v976 = vunpack.c.h.b16 %v148
    %v977 = vunpack.c.l.b16 %v149
    %v978 = vunpack.c.h.b16 %v149
    %v979 = vunpack.c.l.b16 %v150
    %v980 = vunpack.c.h.b16 %v150
    %v981 = vunpack.c.l.b16 %v151
    %v982 = vunpack.c.h.b16 %v151
    %v983 = vunpack.c.l.b16 %v152
    %v984 = vunpack.c.h.b16 %v152
    %v985 = vunpack.c.l.b16 %v153
    %v986 = vunpack.c.h.b16 %v153
    %v987 = vunpack.c.l.b16 %v154
    %v988 = vunpack.c.h.b16 %v154
    %v989 = vunpack.c.l.b16 %v155
    %v990 = vunpack.c.h.b16 %v155
    %v991 = vunpack.c.l.b16 %v156
    %v992 = vunpack.c.h.b16 %v156
    %v993 = vunpack.c.l.b16 %v157
    %v994 = vunpack.c.h.b16 %v157
    %v995 = vunpack.c.l.b16 %v158
    %v996 = vunpack.c.h.b16 %v158
    %v997 = vunpack.c.l.b16 %v159
    %v998 = vunpack.c.h.b16 %v159
    %v999 = vunpack.c.l.b16 %v160
    %v1000 = vunpack.c.h.b16 %v160
    %v1001 = vunpack.c.l.b16 %v161
    %v1002 = vunpack.c.h.b16 %v161
    %v1003 = vunpack.c.l.b16 %v162
    %v1004 = vunpack.c.h.b16 %v162
    %v1005 = vunpack.c.l.b16 %v163
    %v1006 = vunpack.c.h.b16 %v163
    %v1007 = vunpack.c.l.b16 %v164
    %v1008 = vunpack.c.h.b16 %v164
    %v1009 = vunpack.c.l.b16 %v165
    %v1010 = vunpack.c.h.b16 %v165
    %v1011 = vunpack.c.l.b16 %v166
    %v1012 = vunpack.c.h.b16 %v166
    %v1013 = vunpack.c.l.b16 %v167
    %v1014 = vunpack.c.h.b16 %v167
    %v1015 = vunpack.c.l.b16 %v168
    %v1016 = vunpack.c.h.b16 %v168
    %v1017 = vunpack.c.l.b16 %v169
    %v1018 = vunpack.c.h.b16 %v169
    %v1019 = vunpack.c.l.b16 %v170
    %v1020 = vunpack.c.h.b16 %v170
    %v1021 = vunpack.c.l.b16 %v171
    %v1022 = vunpack.c.h.b16 %v171
    %v1023 = vunpack.c.l.b16 %v172
    %v1024 = vunpack.c.h.b16 %v172
    %v1025 = vunpack.c.l.b16 %v173
    %v1026 = vunpack.c.h.b16 %v173
    %v1027 = vunpack.c.l.b16 %v174
    %v1028 = vunpack.c.h.b16 %v174
    %v1029 = vunpack.c.l.b16 %v175
    %v1030 = vunpack.c.h.b16 %v175
    %v1031 = vunpack.c.l.b16 %v176
    %v1032 = vunpack.c.h.b16 %v176
    %v1033 = vunpack.c.l.b16 %v177
    %v1034 = vunpack.c.h.b16 %v177
    %v1035 = vunpack.c.l.b16 %v178
    %v1036 = vunpack.c.h.b16 %v178
    %v1037 = vunpack.c.l.b16 %v179
    %v1038 = vunpack.c.h.b16 %v179
    %v1039 = vunpack.c.l.b16 %v180
    %v1040 = vunpack.c.h.b16 %v180
    %v1041 = vunpack.c.l.b16 %v181
    %v1042 = vunpack.c.h.b16 %v181
    %v1043 = vunpack.c.l.b16 %v182
    %v1044 = vunpack.c.h.b16 %v182
    %v1045 = vunpack.c.l.b16 %v183
    %v1046 = vunpack.c.h.b16 %v183
    %v1047 = vunpack.c.l.b16 %v184
    %v1048 = vunpack.c.h.b16 %v184
    %v1049 = vunpack.c.l.b16 %v185
    %v1050 = vunpack.c.h.b16 %v185
    %v1051 = vunpack.c.l.b16 %v186
    %v1052 = vunpack.c.h.b16 %v186
    %v1053 = vunpack.c.l.b16 %v187
    %v1054 = vunpack.c.h.b16 %v187
    %v1055 = vunpack.c.l.b16 %v188
    %v1056 = vunpack.c.h.b16 %v188
    %v1057 = vunpack.c.l.b16 %v189
    %v1058 = vunpack.c.h.b16 %v189
    %v1059 = vunpack.c.l.b16 %v190
    %v1060 = vunpack.c.h.b16 %v190
    %v1061 = vunpack.c.l.b16 %v191
    %v1062 = vunpack.c.h.b16 %v191
    %v1063 = vunpack.c.l.b16 %v192
    %v1064 = vunpack.c.h.b16 %v192
    %v1065 = vunpack.c.l.b16 %v193
    %v1066 = vunpack.c.h.b16 %v193
    %v1067 = vunpack.c.l.b16 %v194
    %v1068 = vunpack.c.h.b16 %v194
    %v1069 = vunpack.c.l.b16 %v195
    %v1070 = vunpack.c.h.b16 %v195
    %v1071 = vunpack.c.l.b16 %v196
    %v1072 = vunpack.c.h.b16 %v196
    %v1073 = vunpack.c.l.b16 %v197
    %v1074 = vunpack.c.h.b16 %v197
    %v1075 = vunpack.c.l.b16 %v198
    %v1076 = vunpack.c.h.b16 %v198
    %v1077 = vunpack.c.l.b16 %v199
    %v1078 = vunpack.c.h.b16 %v199
    %v1079 = vunpack.c.l.b16 %v200
    %v1080 = vunpack.c.h.b16 %v200
    %v1081 = vunpack.c.l.b16 %v201
    %v1082 = vunpack.c.h.b16 %v201
    %v1083 = vunpack.c.l.b16 %v202
    %v1084 = vunpack.c.h.b16 %v202
    %v1085 = vunpack.c.l.b16 %v203
    %v1086 = vunpack.c.h.b16 %v203
    %v1087 = vunpack.c.l.b16 %v204
    %v1088 = vunpack.c.h.b16 %v204
    %v1089 = vunpack.c.l.b16 %v205
    %v1090 = vunpack.c.h.b16 %v205
    %v1091 = vunpack.c.l.b16 %v206
    %v1092 = vunpack.c.h.b16 %v206
    %v1093 = vunpack.c.l.b16 %v207
    %v1094 = vunpack.c.h.b16 %v207
    %v1095 = vunpack.c.l.b16 %v208
    %v1096 = vunpack.c.h.b16 %v208
    %v1097 = vunpack.c.l.b16 %v209
    %v1098 = vunpack.c.h.b16 %v209
    %v1099 = vunpack.c.l.b16 %v210
    %v1100 = vunpack.c.h.b16 %v210
    %v1101 = vunpack.c.l.b16 %v211
    %v1102 = vunpack.c.h.b16 %v211
    %v1103 = vunpack.c.l.b16 %v212
    %v1104 = vunpack.c.h.b16 %v212
    %v1105 = vunpack.c.l.b16 %v213
    %v1106 = vunpack.c.h.b16 %v213
    %v1107 = vunpack.c.l.b16 %v214
    %v1108 = vunpack.c.h.b16 %v214
    %v1109 = vunpack.c.l.b16 %v215
    %v1110 = vunpack.c.h.b16 %v215
    %v1111 = vunpack.c.l.b16 %v216
    %v1112 = vunpack.c.h.b16 %v216
    %v1113 = vunpack.c.l.b16 %v217
    %v1114 = vunpack.c.h.b16 %v217
    %v1115 = vunpack.c.l.b16 %v218
    %v1116 = vunpack.c.h.b16 %v218
    %v1117 = vunpack.c.l.b16 %v219
    %v1118 = vunpack.c.h.b16 %v219
    %v1119 = vunpack.c.l.b16 %v220
    %v1120 = vunpack.c.h.b16 %v220
    %v1121 = vunpack.c.l.b16 %v221
    %v1122 = vunpack.c.h.b16 %v221
    %v1123 = vunpack.c.l.b16 %v222
    %v1124 = vunpack.c.h.b16 %v222
    %v1125 = vunpack.c.l.b16 %v223
    %v1126 = vunpack.c.h.b16 %v223
    %v1127 = vunpack.c.l.b16 %v224
    %v1128 = vunpack.c.h.b16 %v224
    %v1129 = vunpack.c.l.b16 %v225
    %v1130 = vunpack.c.h.b16 %v225
    %v1131 = vunpack.c.l.b16 %v226
    %v1132 = vunpack.c.h.b16 %v226
    %v1133 = vunpack.c.l.b16 %v227
    %v1134 = vunpack.c.h.b16 %v227
    %v1135 = vunpack.c.l.b16 %v228
    %v1136 = vunpack.c.h.b16 %v228
    %v1137 = vunpack.c.l.b16 %v229
    %v1138 = vunpack.c.h.b16 %v229
    %v1139 = vunpack.c.l.b16 %v230
    %v1140 = vunpack.c.h.b16 %v230
    %v1141 = vunpack.c.l.b16 %v231
    %v1142 = vunpack.c.h.b16 %v231
    %v1143 = vunpack.c.l.b16 %v232
    %v1144 = vunpack.c.h.b16 %v232
    %v1145 = vunpack.c.l.b16 %v233
    %v1146 = vunpack.c.h.b16 %v233
    %v1147 = vunpack.c.l.b16 %v234
    %v1148 = vunpack.c.h.b16 %v234
    %v1149 = vunpack.c.l.b16 %v235
    %v1150 = vunpack.c.h.b16 %v235
    %v1151 = vunpack.c.l.b16 %v236
    %v1152 = vunpack.c.h.b16 %v236
    %v1153 = vunpack.c.l.b16 %v237
    %v1154 = vunpack.c.h.b16 %v237
    %v1155 = vunpack.c.l.b16 %v238
    %v1156 = vunpack.c.h.b16 %v238
    %v1157 = vunpack.c.l.b16 %v239
    %v1158 = vunpack.c.h.b16 %v239
    %v1159 = vunpack.c.l.b16 %v240
    %v1160 = vunpack.c.h.b16 %v240
    %v1161 = vunpack.c.l.b16 %v241
    %v1162 = vunpack.c.h.b16 %v241
    %v1163 = vunpack.c.l.b16 %v242
    %v1164 = vunpack.c.h.b16 %v242
    %v1165 = vunpack.c.l.b16 %v243
    %v1166 = vunpack.c.h.b16 %v243
    %v1167 = vunpack.c.l.b16 %v244
    %v1168 = vunpack.c.h.b16 %v244
    %v1169 = vunpack.c.l.b16 %v245
    %v1170 = vunpack.c.h.b16 %v245
    %v1171 = vunpack.c.l.b16 %v246
    %v1172 = vunpack.c.h.b16 %v246
    %v1173 = vunpack.c.l.b16 %v247
    %v1174 = vunpack.c.h.b16 %v247
    %v1175 = vunpack.c.l.b16 %v248
    %v1176 = vunpack.c.h.b16 %v248
    %v1177 = vunpack.c.l.b16 %v249
    %v1178 = vunpack.c.h.b16 %v249
    %v1179 = vunpack.c.l.b16 %v250
    %v1180 = vunpack.c.h.b16 %v250
    %v1181 = vunpack.c.l.b16 %v251
    %v1182 = vunpack.c.h.b16 %v251
    %v1183 = vunpack.c.l.b16 %v252
    %v1184 = vunpack.c.h.b16 %v252
    %v1185 = vunpack.c.l.b16 %v253
    %v1186 = vunpack.c.h.b16 %v253
    %v1187 = vunpack.c.l.b16 %v254
    %v1188 = vunpack.c.h.b16 %v254
    %v1189 = vunpack.c.l.b16 %v255
    %v1190 = vunpack.c.h.b16 %v255
    %v1191 = vunpack.c.l.b16 %v256
    %v1192 = vunpack.c.h.b16 %v256
    %v1193 = vunpack.c.l.b16 %v257
    %v1194 = vunpack.c.h.b16 %v257
    %v1195 = vunpack.c.l.b16 %v258
    %v1196 = vunpack.c.h.b16 %v258
    %v1197 = vunpack.c.l.b16 %v259
    %v1198 = vunpack.c.h.b16 %v259
    %v1199 = vunpack.c.l.b16 %v260
    %v1200 = vunpack.c.h.b16 %v260
    %v1201 = vunpack.c.l.b16 %v261
    %v1202 = vunpack.c.h.b16 %v261
    %v1203 = vunpack.c.l.b16 %v262
    %v1204 = vunpack.c.h.b16 %v262
    %v1205 = vunpack.c.l.b16 %v263
    %v1206 = vunpack.c.h.b16 %v263
    %v1207 = vunpack.c.l.b16 %v264
    %v1208 = vunpack.c.h.b16 %v264
    %v1209 = vunpack.c.l.b16 %v265
    %v1210 = vunpack.c.h.b16 %v265
    %v1211 = vunpack.c.l.b16 %v266
    %v1212 = vunpack.c.h.b16 %v266
    %v1213 = vunpack.c.l.b16 %v267
    %v1214 = vunpack.c.h.b16 %v267
    %v1215 = vunpack.c.l.b16 %v268
    %v1216 = vunpack.c.h.b16 %v268
    %v1217 = vunpack.c.l.b16 %v269
    %v1218 = vunpack.c.h.b16 %v269
    %v1219 = vunpack.c.l.b16 %v270
    %v1220 = vunpack.c.h.b16 %v270
    %v1221 = vunpack.c.l.b16 %v271
    %v1222 = vunpack.c.h.b16 %v271
    %v1223 = vunpack.c.l.b16 %v272
    %v1224 = vunpack.c.h.b16 %v272
    %v1225 = vunpack.c.l.b16 %v273
    %v1226 = vunpack.c.h.b16 %v273
    %v1227 = vunpack.c.l.b16 %v274
    %v1228 = vunpack.c.h.b16 %v274
    %v1229 = vunpack.c.l.b16 %v275
    %v1230 = vunpack.c.h.b16 %v275
    %v1231 = vunpack.c.l.b16 %v276
    %v1232 = vunpack.c.h.b16 %v276
    %v1233 = vunpack.c.l.b16 %v277
    %v1234 = vunpack.c.h.b16 %v277
    %v1235 = vunpack.c.l.b16 %v278
    %v1236 = vunpack.c.h.b16 %v278
    %v1237 = vunpack.c.l.b16 %v279
    %v1238 = vunpack.c.h.b16 %v279
    %v1239 = vunpack.c.l.b16 %v280
    %v1240 = vunpack.c.h.b16 %v280
    %v1241 = vunpack.c.l.b16 %v281
    %v1242 = vunpack.c.h.b16 %v281
    %v1243 = vunpack.c.l.b16 %v282
    %v1244 = vunpack.c.h.b16 %v282
    %v1245 = vunpack.c.l.b16 %v283
    %v1246 = vunpack.c.h.b16 %v283
    %v1247 = vunpack.c.l.b16 %v284
    %v1248 = vunpack.c.h.b16 %v284
    %v1249 = vunpack.c.l.b16 %v285
    %v1250 = vunpack.c.h.b16 %v285
    %v1251 = vunpack.c.l.b16 %v286
    %v1252 = vunpack.c.h.b16 %v286
    %v1253 = vunpack.c.l.b16 %v287
    %v1254 = vunpack.c.h.b16 %v287
    %v1255 = vunpack.c.l.b16 %v288
    %v1256 = vunpack.c.h.b16 %v288
    %v1257 = vunpack.c.l.b16 %v289
    %v1258 = vunpack.c.h.b16 %v289
    %v1259 = vunpack.c.l.b16 %v290
    %v1260 = vunpack.c.h.b16 %v290
    %v1261 = vunpack.c.l.b16 %v291
    %v1262 = vunpack.c.h.b16 %v291
    %v1263 = vunpack.c.l.b16 %v292
    %v1264 = vunpack.c.h.b16 %v292
    %v1265 = vunpack.c.l.b16 %v293
    %v1266 = vunpack.c.h.b16 %v293
    %v1267 = vunpack.c.l.b16 %v294
    %v1268 = vunpack.c.h.b16 %v294
    %v1269 = vunpack.c.l.b16 %v295
    %v1270 = vunpack.c.h.b16 %v295
    %v1271 = vunpack.c.l.b16 %v296
    %v1272 = vunpack.c.h.b16 %v296
    %v1273 = vunpack.c.l.b16 %v297
    %v1274 = vunpack.c.h.b16 %v297
    %v1275 = vunpack.c.l.b16 %v298
    %v1276 = vunpack.c.h.b16 %v298
    %v1277 = vunpack.c.l.b16 %v299
    %v1278 = vunpack.c.h.b16 %v299
    %v1279 = vunpack.c.l.b16 %v300
    %v1280 = vunpack.c.h.b16 %v300
    %v1281 = vunpack.c.l.b16 %v301
    %v1282 = vunpack.c.h.b16 %v301
    %v1283 = vunpack.c.l.b16 %v302
    %v1284 = vunpack.c.h.b16 %v302
    %v1285 = vunpack.c.l.b16 %v303
    %v1286 = vunpack.c.h.b16 %v303
    %v1287 = vunpack.c.l.b16 %v304
    %v1288 = vunpack.c.h.b16 %v304
    %v1289 = vunpack.c.l.b16 %v305
    %v1290 = vunpack.c.h.b16 %v305
    %v1291 = vunpack.c.l.b16 %v306
    %v1292 = vunpack.c.h.b16 %v306
    %v1293 = vunpack.c.l.b16 %v307
    %v1294 = vunpack.c.h.b16 %v307
    %v1295 = vunpack.c.l.b16 %v308
    %v1296 = vunpack.c.h.b16 %v308
    %v1297 = vunpack.c.l.b16 %v309
    %v1298 = vunpack.c.h.b16 %v309
    %v1299 = vunpack.c.l.b16 %v310
    %v1300 = vunpack.c.h.b16 %v310
    %v1301 = vunpack.c.l.b16 %v311
    %v1302 = vunpack.c.h.b16 %v311
    %v1303 = vunpack.c.l.b16 %v312
    %v1304 = vunpack.c.h.b16 %v312
    %v1305 = vunpack.c.l.b16 %v313
    %v1306 = vunpack.c.h.b16 %v313
    %v1307 = vunpack.c.l.b16 %v314
    %v1308 = vunpack.c.h.b16 %v314
    %v1309 = vunpack.c.l.b16 %v315
    %v1310 = vunpack.c.h.b16 %v315
    %v1311 = vunpack.c.l.b16 %v316
    %v1312 = vunpack.c.h.b16 %v316
    %v1313 = vunpack.c.l.b16 %v317
    %v1314 = vunpack.c.h.b16 %v317
    %v1315 = vunpack.c.l.b16 %v318
    %v1316 = vunpack.c.h.b16 %v318
    %v1317 = vunpack.c.l.b16 %v319
    %v1318 = vunpack.c.h.b16 %v319
    %v1319 = vunpack.c.l.b16 %v320
    %v1320 = vunpack.c.h.b16 %v320
    %v1321 = vunpack.c.l.b16 %v321
    %v1322 = vunpack.c.h.b16 %v321
    %v1323 = vunpack.c.l.b16 %v322
    %v1324 = vunpack.c.h.b16 %v322
    %v1325 = vunpack.c.l.b16 %v323
    %v1326 = vunpack.c.h.b16 %v323
    %v1327 = vunpack.c.l.b16 %v324
    %v1328 = vunpack.c.h.b16 %v324
    %v1329 = vunpack.c.l.b16 %v325
    %v1330 = vunpack.c.h.b16 %v325
    %v1331 = vunpack.c.l.b16 %v326
    %v1332 = vunpack.c.h.b16 %v326
    %v1333 = vunpack.c.l.b16 %v327
    %v1334 = vunpack.c.h.b16 %v327
    %v1335 = vunpack.c.l.b16 %v328
    %v1336 = vunpack.c.h.b16 %v328
    %v1337 = vpack.c.b16 %v767, %v761
    %v1338 = vpack.c.b16 %v768, %v762
    %v1339 = vpack.c.b16 %v769, %v763
    %v1340 = vpack.c.b16 %v770, %v764
    %v1341 = vpack.c.b16 %v771, %v765
    %v1342 = vpack.c.b16 %v772, %v766
    %v1343 = vpack.c.b16 %v779, %v773
    %v1344 = vpack.c.b16 %v780, %v774
    %v1345 = vpack.c.b16 %v781, %v775
    %v1346 = vpack.c.b16 %v782, %v776
    %v1347 = vpack.c.b16 %v783, %v777
    %v1348 = vpack.c.b16 %v784, %v778
    %v1349 = vpack.c.b16 %v791, %v785
    %v1350 = vpack.c.b16 %v792, %v786
    %v1351 = vpack.c.b16 %v793, %v787
    %v1352 = vpack.c.b16 %v794, %v788
    %v1353 = vpack.c.b16 %v795, %v789
    %v1354 = vpack.c.b16 %v796, %v790
    %v1355 = vpack.c.b16 %v803, %v797
    %v1356 = vpack.c.b16 %v804, %v798
    %v1357 = vpack.c.b16 %v805, %v799
    %v1358 = vpack.c.b16 %v806, %v800
    %v1359 = vpack.c.b16 %v807, %v801
    %v1360 = vpack.c.b16 %v808, %v802
    %v1361 = vpack.c.b16 %v815, %v809
    %v1362 = vpack.c.b16 %v816, %v810
    %v1363 = vpack.c.b16 %v817, %v811
    %v1364 = vpack.c.b16 %v818, %v812
    %v1365 = vpack.c.b16 %v819, %v813
    %v1366 = vpack.c.b16 %v820, %v814
    %v1367 = vpack.c.b16 %v827, %v821
    %v1368 = vpack.c.b16 %v828, %v822
    %v1369 = vpack.c.b16 %v829, %v823
    %v1370 = vpack.c.b16 %v830, %v824
    %v1371 = vpack.c.b16 %v831, %v825
    %v1372 = vpack.c.b16 %v832, %v826
    %v1373 = vpack.c.b16 %v839, %v833
    %v1374 = vpack.c.b16 %v840, %v834
    %v1375 = vpack.c.b16 %v841, %v835
    %v1376 = vpack.c.b16 %v842, %v836
    %v1377 = vpack.c.b16 %v843, %v837
    %v1378 = vpack.c.b16 %v844, %v838
    %v1379 = vpack.c.b16 %v851, %v845
    %v1380 = vpack.c.b16 %v852, %v846
    %v1381 = vpack.c.b16 %v853, %v847
    %v1382 = vpack.c.b16 %v854, %v848
    %v1383 = vpack.c.b16 %v855, %v849
    %v1384 = vpack.c.b16 %v856, %v850
    %v1385 = vpack.c.b16 %v863, %v857
    %v1386 = vpack.c.b16 %v864, %v858
    %v1387 = vpack.c.b16 %v865, %v859
    %v1388 = vpack.c.b16 %v866, %v860
    %v1389 = vpack.c.b16 %v867, %v861
    %v1390 = vpack.c.b16 %v868, %v862
    %v1391 = vpack.c.b16 %v875, %v869
    %v1392 = vpack.c.b16 %v876, %v870
    %v1393 = vpack.c.b16 %v877, %v871
    %v1394 = vpack.c.b16 %v878, %v872
    %v1395 = vpack.c.b16 %v879, %v873
    %v1396 = vpack.c.b16 %v880, %v874
    %v1397 = vpack.c.b16 %v887, %v881
    %v1398 = vpack.c.b16 %v888, %v882
    %v1399 = vpack.c.b16 %v889, %v883
    %v1400 = vpack.c.b16 %v890, %v884
    %v1401 = vpack.c.b16 %v891, %v885
    %v1402 = vpack.c.b16 %v892, %v886
    %v1403 = vpack.c.b16 %v899, %v893
    %v1404 = vpack.c.b16 %v900, %v894
    %v1405 = vpack.c.b16 %v901, %v895
    %v1406 = vpack.c.b16 %v902, %v896
    %v1407 = vpack.c.b16 %v903, %v897
    %v1408 = vpack.c.b16 %v904, %v898
    %v1409 = vpack.c.b16 %v911, %v905
    %v1410 = vpack.c.b16 %v912, %v906
    %v1411 = vpack.c.b16 %v913, %v907
    %v1412 = vpack.c.b16 %v914, %v908
    %v1413 = vpack.c.b16 %v915, %v909
    %v1414 = vpack.c.b16 %v916, %v910
    %v1415 = vpack.c.b16 %v923, %v917
    %v1416 = vpack.c.b16 %v924, %v918
    %v1417 = vpack.c.b16 %v925, %v919
    %v1418 = vpack.c.b16 %v926, %v920
    %v1419 = vpack.c.b16 %v927, %v921
    %v1420 = vpack.c.b16 %v928, %v922
    %v1421 = vpack.c.b16 %v935, %v929
    %v1422 = vpack.c.b16 %v936, %v930
    %v1423 = vpack.c.b16 %v937, %v931
    %v1424 = vpack.c.b16 %v938, %v932
    %v1425 = vpack.c.b16 %v939, %v933
    %v1426 = vpack.c.b16 %v940, %v934
    %v1427 = vpack.c.b16 %v947, %v941
    %v1428 = vpack.c.b16 %v948, %v942
    %v1429 = vpack.c.b16 %v949, %v943
    %v1430 = vpack.c.b16 %v950, %v944
    %v1431 = vpack.c.b16 %v951, %v945
    %v1432 = vpack.c.b16 %v952, %v946
    %v1433 = vpack.c.b16 %v959, %v953
    %v1434 = vpack.c.b16 %v960, %v954
    %v1435 = vpack.c.b16 %v961, %v955
    %v1436 = vpack.c.b16 %v962, %v956
    %v1437 = vpack.c.b16 %v963, %v957
    %v1438 = vpack.c.b16 %v964, %v958
    %v1439 = vpack.c.b16 %v971, %v965
    %v1440 = vpack.c.b16 %v972, %v966
    %v1441 = vpack.c.b16 %v973, %v967
    %v1442 = vpack.c.b16 %v974, %v968
    %v1443 = vpack.c.b16 %v975, %v969
    %v1444 = vpack.c.b16 %v976, %v970
    %v1445 = vpack.c.b16 %v983, %v977
    %v1446 = vpack.c.b16 %v984, %v978
    %v1447 = vpack.c.b16 %v985, %v979
    %v1448 = vpack.c.b16 %v986, %v980
    %v1449 = vpack.c.b16 %v987, %v981
    %v1450 = vpack.c.b16 %v988, %v982
    %v1451 = vpack.c.b16 %v995, %v989
    %v1452 = vpack.c.b16 %v996, %v990
    %v1453 = vpack.c.b16 %v997, %v991
    %v1454 = vpack.c.b16 %v998, %v992
    %v1455 = vpack.c.b16 %v999, %v993
    %v1456 = vpack.c.b16 %v1000, %v994
    %v1457 = vpack.c.b16 %v1007, %v1001
    %v1458 = vpack.c.b16 %v1008, %v1002
    %v1459 = vpack.c.b16 %v1009, %v1003
    %v1460 = vpack.c.b16 %v1010, %v1004
    %v1461 = vpack.c.b16 %v1011, %v1005
    %v1462 = vpack.c.b16 %v1012, %v1006
    %v1463 = vpack.c.b16 %v1019, %v1013
    %v1464 = vpack.c.b16 %v1020, %v1014
    %v1465 = vpack.c.b16 %v1021, %v1015
    %v1466 = vpack.c.b16 %v1022, %v1016
    %v1467 = vpack.c.b16 %v1023, %v1017
    %v1468 = vpack.c.b16 %v1024, %v1018
    %v1469 = vpack.c.b16 %v1031, %v1025
    %v1470 = vpack.c.b16 %v1032, %v1026
    %v1471 = vpack.c.b16 %v1033, %v1027
    %v1472 = vpack.c.b16 %v1034, %v1028
    %v1473 = vpack.c.b16 %v1035, %v1029
    %v1474 = vpack.c.b16 %v1036, %v1030
    %v1475 = vpack.c.b16 %v1043, %v1037
    %v1476 = vpack.c.b16 %v1044, %v1038
    %v1477 = vpack.c.b16 %v1045, %v1039
    %v1478 = vpack.c.b16 %v1046, %v1040
    %v1479 = vpack.c.b16 %v1047, %v1041
    %v1480 = vpack.c.b16 %v1048, %v1042
    %v1481 = vpack.c.b16 %v1055, %v1049
    %v1482 = vpack.c.b16 %v1056, %v1050
    %v1483 = vpack.c.b16 %v1057, %v1051
    %v1484 = vpack.c.b16 %v1058, %v1052
    %v1485 = vpack.c.b16 %v1059, %v1053
    %v1486 = vpack.c.b16 %v1060, %v1054
    %v1487 = vpack.c.b16 %v1067, %v1061
    %v1488 = vpack.c.b16 %v1068, %v1062
    %v1489 = vpack.c.b16 %v1069, %v1063
    %v1490 = vpack.c.b16 %v1070, %v1064
    %v1491 = vpack.c.b16 %v1071, %v1065
    %v1492 = vpack.c.b16 %v1072, %v1066
    %v1493 = vpack.c.b16 %v1079, %v1073
    %v1494 = vpack.c.b16 %v1080, %v1074
    %v1495 = vpack.c.b16 %v1081, %v1075
    %v1496 = vpack.c.b16 %v1082, %v1076
    %v1497 = vpack.c.b16 %v1083, %v1077
    %v1498 = vpack.c.b16 %v1084, %v1078
    %v1499 = vpack.c.b16 %v1091, %v1085
    %v1500 = vpack.c.b16 %v1092, %v1086
    %v1501 = vpack.c.b16 %v1093, %v1087
    %v1502 = vpack.c.b16 %v1094, %v1088
    %v1503 = vpack.c.b16 %v1095, %v1089
    %v1504 = vpack.c.b16 %v1096, %v1090
    %v1505 = vpack.c.b16 %v1103, %v1097
    %v1506 = vpack.c.b16 %v1104, %v1098
    %v1507 = vpack.c.b16 %v1105, %v1099
    %v1508 = vpack.c.b16 %v1106, %v1100
    %v1509 = vpack.c.b16 %v1107, %v1101
    %v1510 = vpack.c.b16 %v1108, %v1102
    %v1511 = vpack.c.b16 %v1115, %v1109
    %v1512 = vpack.c.b16 %v1116, %v1110
    %v1513 = vpack.c.b16 %v1117, %v1111
    %v1514 = vpack.c.b16 %v1118, %v1112
    %v1515 = vpack.c.b16 %v1119, %v1113
    %v1516 = vpack.c.b16 %v1120, %v1114
    %v1517 = vpack.c.b16 %v1127, %v1121
    %v1518 = vpack.c.b16 %v1128, %v1122
    %v1519 = vpack.c.b16 %v1129, %v1123
    %v1520 = vpack.c.b16 %v1130, %v1124
    %v1521 = vpack.c.b16 %v1131, %v1125
    %v1522 = vpack.c.b16 %v1132, %v1126
    %v1523 = vpack.c.b16 %v1139, %v1133
    %v1524 = vpack.c.b16 %v1140, %v1134
    %v1525 = vpack.c.b16 %v1141, %v1135
    %v1526 = vpack.c.b16 %v1142, %v1136
    %v1527 = vpack.c.b16 %v1143, %v1137
    %v1528 = vpack.c.b16 %v1144, %v1138
    %v1529 = vpack.c.b16 %v1151, %v1145
    %v1530 = vpack.c.b16 %v1152, %v1146
    %v1531 = vpack.c.b16 %v1153, %v1147
    %v1532 = vpack.c.b16 %v1154, %v1148
    %v1533 = vpack.c.b16 %v1155, %v1149
    %v1534 = vpack.c.b16 %v1156, %v1150
    %v1535 = vpack.c.b16 %v1163, %v1157
    %v1536 = vpack.c.b16 %v1164, %v1158
    %v1537 = vpack.c.b16 %v1165, %v1159
    %v1538 = vpack.c.b16 %v1166, %v1160
    %v1539 = vpack.c.b16 %v1167, %v1161
    %v1540 = vpack.c.b16 %v1168, %v1162
    %v1541 = vpack.c.b16 %v1175, %v1169
    %v1542 = vpack.c.b16 %v1176, %v1170
    %v1543 = vpack.c.b16 %v1177, %v1171
    %v1544 = vpack.c.b16 %v1178, %v1172
    %v1545 = vpack.c.b16 %v1179, %v1173
    %v1546 = vpack.c.b16 %v1180, %v1174
    %v1547 = vpack.c.b16 %v1187, %v1181
    %v1548 = vpack.c.b16 %v1188, %v1182
    %v1549 = vpack.c.b16 %v1189, %v1183
    %v1550 = vpack.c.b16 %v1190, %v1184
    %v1551 = vpack.c.b16 %v1191, %v1185
    %v1552 = vpack.c.b16 %v1192, %v1186
    %v1553 = vpack.c.b16 %v1199, %v1193
    %v1554 = vpack.c.b16 %v1200, %v1194
    %v1555 = vpack.c.b16 %v1201, %v1195
    %v1556 = vpack.c.b16 %v1202, %v1196
    %v1557 = vpack.c.b16 %v1203, %v1197
    %v1558 = vpack.c.b16 %v1204, %v1198
    %v1559 = vpack.c.b16 %v1211, %v1205
    %v1560 = vpack.c.b16 %v1212, %v1206
    %v1561 = vpack.c.b16 %v1213, %v1207
    %v1562 = vpack.c.b16 %v1214, %v1208
    %v1563 = vpack.c.b16 %v1215, %v1209
    %v1564 = vpack.c.b16 %v1216, %v1210
    %v1565 = vpack.c.b16 %v1223, %v1217
    %v1566 = vpack.c.b16 %v1224, %v1218
    %v1567 = vpack.c.b16 %v1225, %v1219
    %v1568 = vpack.c.b16 %v1226, %v1220
    %v1569 = vpack.c.b16 %v1227, %v1221
    %v1570 = vpack.c.b16 %v1228, %v1222
    %v1571 = vpack.c.b16 %v1235, %v1229
    %v1572 = vpack.c.b16 %v1236, %v1230
    %v1573 = vpack.c.b16 %v1237, %v1231
    %v1574 = vpack.c.b16 %v1238, %v1232
    %v1575 = vpack.c.b16 %v1239, %v1233
    %v1576 = vpack.c.b16 %v1240, %v1234
    %v1577 = vpack.c.b16 %v1247, %v1241
    %v1578 = vpack.c.b16 %v1248, %v1242
    %v1579 = vpack.c.b16 %v1249, %v1243
    %v1580 = vpack.c.b16 %v1250, %v1244
    %v1581 = vpack.c.b16 %v1251, %v1245
    %v1582 = vpack.c.b16 %v1252, %v1246
    %v1583 = vpack.c.b16 %v1259, %v1253
    %v1584 = vpack.c.b16 %v1260, %v1254
    %v1585 = vpack.c.b16 %v1261, %v1255
    %v1586 = vpack.c.b16 %v1262, %v1256
    %v1587 = vpack.c.b16 %v1263, %v1257
    %v1588 = vpack.c.b16 %v1264, %v1258
    %v1589 = vpack.c.b16 %v1271, %v1265
    %v1590 = vpack.c.b16 %v1272, %v1266
    %v1591 = vpack.c.b16 %v1273, %v1267
    %v1592 = vpack.c.b16 %v1274, %v1268
    %v1593 = vpack.c.b16 %v1275, %v1269
    %v1594 = vpack.c.b16 %v1276, %v1270
    %v1595 = vpack.c.b16 %v1283, %v1277
    %v1596 = vpack.c.b16 %v1284, %v1278
    %v1597 = vpack.c.b16 %v1285, %v1279
    %v1598 = vpack.c.b16 %v1286, %v1280
    %v1599 = vpack.c.b16 %v1287, %v1281
    %v1600 = vpack.c.b16 %v1288, %v1282
    %v1601 = vpack.c.b16 %v1295, %v1289
    %v1602 = vpack.c.b16 %v1296, %v1290
    %v1603 = vpack.c.b16 %v1297, %v1291
    %v1604 = vpack.c.b16 %v1298, %v1292
    %v1605 = vpack.c.b16 %v1299, %v1293
    %v1606 = vpack.c.b16 %v1300, %v1294
    %v1607 = vpack.c.b16 %v1307, %v1301
    %v1608 = vpack.c.b16 %v1308, %v1302
    %v1609 = vpack.c.b16 %v1309, %v1303
    %v1610 = vpack.c.b16 %v1310, %v1304
    %v1611 = vpack.c.b16 %v1311, %v1305
    %v1612 = vpack.c.b16 %v1312, %v1306
    %v1613 = vpack.c.b16 %v1319, %v1313
    %v1614 = vpack.c.b16 %v1320, %v1314
    %v1615 = vpack.c.b16 %v1321, %v1315
    %v1616 = vpack.c.b16 %v1322, %v1316
    %v1617 = vpack.c.b16 %v1323, %v1317
    %v1618 = vpack.c.b16 %v1324, %v1318
    %v1619 = vpack.c.b16 %v1331, %v1325
    %v1620 = vpack.c.b16 %v1332, %v1326
    %v1621 = vpack.c.b16 %v1333, %v1327
    %v1622 = vpack.c.b16 %v1334, %v1328
    %v1623 = vpack.c.b16 %v1335, %v1329
    %v1624 = vpack.c.b16 %v1336, %v1330
    %1913 = vmatprep.subr.bf16.mxu0 0
    %1914 = vmatpush1.bf16.msra.mxu0 %v425
    %1915 = vmatprep.subr.bf16.mxu0 0
    %1916 = vmatpush1.bf16.msra.mxu0 %v426
    %1917 = vmatprep.subr.bf16.mxu0 0
    %1918 = vmatpush1.bf16.msra.mxu0 %v427
    %1919 = vmatprep.subr.bf16.mxu0 0
    %1920 = vmatpush1.bf16.msra.mxu0 %v428
    %1921 = vmatprep.subr.bf16.mxu0 0
    %1922 = vmatpush1.bf16.msra.mxu0 %v429
    %1923 = vmatprep.subr.bf16.mxu0 0
    %1924 = vmatpush1.bf16.msra.mxu0 %v430
    %1925 = vmatprep.subr.bf16.mxu0 0
    %1926 = vmatpush1.bf16.msra.mxu0 %v431
    %1927 = vmatprep.subr.bf16.mxu0 0
    %1928 = vmatpush1.bf16.msra.mxu0 %v432
    %1929 = vmatprep.subr.bf16.mxu0 0
    %1930 = vmatpush1.bf16.msra.mxu0 %v433
    %1931 = vmatprep.subr.bf16.mxu0 0
    %1932 = vmatpush1.bf16.msra.mxu0 %v434
    %1933 = vmatprep.subr.bf16.mxu0 0
    %1934 = vmatpush1.bf16.msra.mxu0 %v435
    %1935 = vmatprep.subr.bf16.mxu0 0
    %1936 = vmatpush1.bf16.msra.mxu0 %v436
    %1937 = vmatprep.subr.bf16.mxu0 0
    %1938 = vmatpush1.bf16.msra.mxu0 %v437
    %1939 = vmatprep.subr.bf16.mxu0 0
    %1940 = vmatpush1.bf16.msra.mxu0 %v438
    %1941 = vmatprep.subr.bf16.mxu0 0
    %1942 = vmatpush1.bf16.msra.mxu0 %v439
    %1943 = vmatprep.subr.bf16.mxu0 0
    %1944 = vmatpush1.bf16.msra.mxu0 %v440
    %1945 = vmatprep.mubr.bf16.mxu0 %v1338
    %1946 = vmatmul.mubr.bf16.gmra.mrb[0].mxu0 %v1337
    %v1947 = vpop.f32.mrb[0].mxu0
    %v1948 = vadd.f32 0.0, %v1947
    %v1949 = vpop.f32.mrb[0].mxu0
    %v1950 = vpop.f32.mrb[0].mxu0
    %v1951 = vadd.f32 0.0, %v1950
    %v1952 = vpop.f32.mrb[0].mxu0
    %1953 = vmatprep.mubr.bf16.mxu0 %v1344
    %1954 = vmatmul.mubr.bf16.gmra.mrb[0].mxu0 %v1343
    %v1955 = vpop.f32.mrb[0].mxu0
    %v1956 = vadd.f32 0.0, %v1955
    %v1957 = vpop.f32.mrb[0].mxu0
    %v1958 = vpop.f32.mrb[0].mxu0
    %v1959 = vadd.f32 0.0, %v1958
    %v1960 = vpop.f32.mrb[0].mxu0
    %1961 = vmatprep.mubr.bf16.mxu0 %v1350
    %1962 = vmatmul.mubr.bf16.gmra.mrb[0].mxu0 %v1349
    %v1963 = vpop.f32.mrb[0].mxu0
    %v1964 = vadd.f32 0.0, %v1963
    %v1965 = vpop.f32.mrb[0].mxu0
    %v1966 = vpop.f32.mrb[0].mxu0
    %v1967 = vadd.f32 0.0, %v1966
    %v1968 = vpop.f32.mrb[0].mxu0
    %1969 = vmatprep.mubr.bf16.mxu0 %v1356
    %1970 = vmatmul.mubr.bf16.gmra.mrb[0].mxu0 %v1355
    %v1971 = vpop.f32.mrb[0].mxu0
    %v1972 = vadd.f32 0.0, %v1971
    %v1973 = vpop.f32.mrb[0].mxu0
    %v1974 = vpop.f32.mrb[0].mxu0
    %v1975 = vadd.f32 0.0, %v1974
    %v1976 = vpop.f32.mrb[0].mxu0
    %1977 = vmatprep.mubr.bf16.mxu0 %v1362
    %1978 = vmatmul.mubr.bf16.gmra.mrb[0].mxu0 %v1361
    %v1979 = vpop.f32.mrb[0].mxu0
    %v1980 = vadd.f32 0.0, %v1979
    %v1981 = vpop.f32.mrb[0].mxu0
    %v1982 = vpop.f32.mrb[0].mxu0
    %v1983 = vadd.f32 0.0, %v1982
    %v1984 = vpop.f32.mrb[0].mxu0
    %1985 = vmatprep.mubr.bf16.mxu0 %v1368
    %1986 = vmatmul.mubr.bf16.gmra.mrb[0].mxu0 %v1367
    %v1987 = vpop.f32.mrb[0].mxu0
    %v1988 = vadd.f32 0.0, %v1987
    %v1989 = vpop.f32.mrb[0].mxu0
    %v1990 = vpop.f32.mrb[0].mxu0
    %v1991 = vadd.f32 0.0, %v1990
    %v1992 = vpop.f32.mrb[0].mxu0
    %1993 = vmatprep.mubr.bf16.mxu0 %v1374
    %1994 = vmatmul.mubr.bf16.gmra.mrb[0].mxu0 %v1373
    %v1995 = vpop.f32.mrb[0].mxu0
    %v1996 = vadd.f32 0.0, %v1995
    %v1997 = vpop.f32.mrb[0].mxu0
    %v1998 = vpop.f32.mrb[0].mxu0
    %v1999 = vadd.f32 0.0, %v1998
    %v2000 = vpop.f32.mrb[0].mxu0
    %2001 = vmatprep.mubr.bf16.mxu0 %v1380
    %2002 = vmatmul.mubr.bf16.gmra.mrb[0].mxu0 %v1379
    %v2003 = vpop.f32.mrb[0].mxu0
    %v2004 = vadd.f32 0.0, %v2003
    %v2005 = vpop.f32.mrb[0].mxu0
    %v2006 = vpop.f32.mrb[0].mxu0
    %v2007 = vadd.f32 0.0, %v2006
    %v2008 = vpop.f32.mrb[0].mxu0
    %2009 = vmatprep.mubr.bf16.mxu0 %v1386
    %2010 = vmatmul.mubr.bf16.gmra.mrb[0].mxu0 %v1385
    %v2011 = vpop.f32.mrb[0].mxu0
    %v2012 = vadd.f32 0.0, %v2011
    %v2013 = vpop.f32.mrb[0].mxu0
    %v2014 = vpop.f32.mrb[0].mxu0
    %v2015 = vadd.f32 0.0, %v2014
    %v2016 = vpop.f32.mrb[0].mxu0
    %2017 = vmatprep.mubr.bf16.mxu0 %v1392
    %2018 = vmatmul.mubr.bf16.gmra.mrb[0].mxu0 %v1391
    %v2019 = vpop.f32.mrb[0].mxu0
    %v2020 = vadd.f32 0.0, %v2019
    %v2021 = vpop.f32.mrb[0].mxu0
    %v2022 = vpop.f32.mrb[0].mxu0
    %v2023 = vadd.f32 0.0, %v2022
    %v2024 = vpop.f32.mrb[0].mxu0
    %2025 = vmatprep.mubr.bf16.mxu0 %v1398
    %2026 = vmatmul.mubr.bf16.gmra.mrb[0].mxu0 %v1397
    %v2027 = vpop.f32.mrb[0].mxu0
    %v2028 = vadd.f32 0.0, %v2027
    %v2029 = vpop.f32.mrb[0].mxu0
    %v2030 = vpop.f32.mrb[0].mxu0
    %v2031 = vadd.f32 0.0, %v2030
    %v2032 = vpop.f32.mrb[0].mxu0
    %2033 = vmatprep.mubr.bf16.mxu0 %v1404
    %2034 = vmatmul.mubr.bf16.gmra.mrb[0].mxu0 %v1403
    %v2035 = vpop.f32.mrb[0].mxu0
    %v2036 = vadd.f32 0.0, %v2035
    %v2037 = vpop.f32.mrb[0].mxu0
    %v2038 = vpop.f32.mrb[0].mxu0
    %v2039 = vadd.f32 0.0, %v2038
    %v2040 = vpop.f32.mrb[0].mxu0
    %2041 = vmatprep.mubr.bf16.mxu0 %v1410
    %2042 = vmatmul.mubr.bf16.gmra.mrb[0].mxu0 %v1409
    %v2043 = vpop.f32.mrb[0].mxu0
    %v2044 = vadd.f32 0.0, %v2043
    %v2045 = vpop.f32.mrb[0].mxu0
    %v2046 = vpop.f32.mrb[0].mxu0
    %v2047 = vadd.f32 0.0, %v2046
    %v2048 = vpop.f32.mrb[0].mxu0
    %2049 = vmatprep.mubr.bf16.mxu0 %v1416
    %2050 = vmatmul.mubr.bf16.gmra.mrb[0].mxu0 %v1415
    %v2051 = vpop.f32.mrb[0].mxu0
    %v2052 = vadd.f32 0.0, %v2051
    %v2053 = vpop.f32.mrb[0].mxu0
    %v2054 = vpop.f32.mrb[0].mxu0
    %v2055 = vadd.f32 0.0, %v2054
    %v2056 = vpop.f32.mrb[0].mxu0
    %2057 = vmatprep.mubr.bf16.mxu0 %v1422
    %2058 = vmatmul.mubr.bf16.gmra.mrb[0].mxu0 %v1421
    %v2059 = vpop.f32.mrb[0].mxu0
    %v2060 = vadd.f32 0.0, %v2059
    %v2061 = vpop.f32.mrb[0].mxu0
    %v2062 = vpop.f32.mrb[0].mxu0
    %v2063 = vadd.f32 0.0, %v2062
    %v2064 = vpop.f32.mrb[0].mxu0
    %2065 = vmatprep.mubr.bf16.mxu0 %v1428
    %2066 = vmatmul.mubr.bf16.gmra.mrb[0].mxu0 %v1427
    %v2067 = vpop.f32.mrb[0].mxu0
    %v2068 = vadd.f32 0.0, %v2067
    %v2069 = vpop.f32.mrb[0].mxu0
    %v2070 = vpop.f32.mrb[0].mxu0
    %v2071 = vadd.f32 0.0, %v2070
    %v2072 = vpop.f32.mrb[0].mxu0
    %2073 = vmatprep.mubr.bf16.mxu0 %v1434
    %2074 = vmatmul.mubr.bf16.gmra.mrb[0].mxu0 %v1433
    %v2075 = vpop.f32.mrb[0].mxu0
    %v2076 = vadd.f32 0.0, %v2075
    %v2077 = vpop.f32.mrb[0].mxu0
    %v2078 = vpop.f32.mrb[0].mxu0
    %v2079 = vadd.f32 0.0, %v2078
    %v2080 = vpop.f32.mrb[0].mxu0
    %2081 = vmatprep.mubr.bf16.mxu0 %v1440
    %2082 = vmatmul.mubr.bf16.gmra.mrb[0].mxu0 %v1439
    %v2083 = vpop.f32.mrb[0].mxu0
    %v2084 = vadd.f32 0.0, %v2083
    %v2085 = vpop.f32.mrb[0].mxu0
    %v2086 = vpop.f32.mrb[0].mxu0
    %v2087 = vadd.f32 0.0, %v2086
    %v2088 = vpop.f32.mrb[0].mxu0
    %2089 = vmatprep.mubr.bf16.mxu0 %v1446
    %2090 = vmatmul.mubr.bf16.gmra.mrb[0].mxu0 %v1445
    %v2091 = vpop.f32.mrb[0].mxu0
    %v2092 = vadd.f32 0.0, %v2091
    %v2093 = vpop.f32.mrb[0].mxu0
    %v2094 = vpop.f32.mrb[0].mxu0
    %v2095 = vadd.f32 0.0, %v2094
    %v2096 = vpop.f32.mrb[0].mxu0
    %2097 = vmatprep.mubr.bf16.mxu0 %v1452
    %2098 = vmatmul.mubr.bf16.gmra.mrb[0].mxu0 %v1451
    %v2099 = vpop.f32.mrb[0].mxu0
    %v2100 = vadd.f32 0.0, %v2099
    %v2101 = vpop.f32.mrb[0].mxu0
    %v2102 = vpop.f32.mrb[0].mxu0
    %v2103 = vadd.f32 0.0, %v2102
    %v2104 = vpop.f32.mrb[0].mxu0
    %2105 = vmatprep.mubr.bf16.mxu0 %v1458
    %2106 = vmatmul.mubr.bf16.gmra.mrb[0].mxu0 %v1457
    %v2107 = vpop.f32.mrb[0].mxu0
    %v2108 = vadd.f32 0.0, %v2107
    %v2109 = vpop.f32.mrb[0].mxu0
    %v2110 = vpop.f32.mrb[0].mxu0
    %v2111 = vadd.f32 0.0, %v2110
    %v2112 = vpop.f32.mrb[0].mxu0
    %2113 = vmatprep.mubr.bf16.mxu0 %v1464
    %2114 = vmatmul.mubr.bf16.gmra.mrb[0].mxu0 %v1463
    %v2115 = vpop.f32.mrb[0].mxu0
    %v2116 = vadd.f32 0.0, %v2115
    %v2117 = vpop.f32.mrb[0].mxu0
    %v2118 = vpop.f32.mrb[0].mxu0
    %v2119 = vadd.f32 0.0, %v2118
    %v2120 = vpop.f32.mrb[0].mxu0
    %2121 = vmatprep.mubr.bf16.mxu0 %v1470
    %2122 = vmatmul.mubr.bf16.gmra.mrb[0].mxu0 %v1469
    %v2123 = vpop.f32.mrb[0].mxu0
    %v2124 = vadd.f32 0.0, %v2123
    %v2125 = vpop.f32.mrb[0].mxu0
    %v2126 = vpop.f32.mrb[0].mxu0
    %v2127 = vadd.f32 0.0, %v2126
    %v2128 = vpop.f32.mrb[0].mxu0
    %2129 = vmatprep.mubr.bf16.mxu0 %v1476
    %2130 = vmatmul.mubr.bf16.gmra.mrb[0].mxu0 %v1475
    %v2131 = vpop.f32.mrb[0].mxu0
    %v2132 = vadd.f32 0.0, %v2131
    %v2133 = vpop.f32.mrb[0].mxu0
    %v2134 = vpop.f32.mrb[0].mxu0
    %v2135 = vadd.f32 0.0, %v2134
    %v2136 = vpop.f32.mrb[0].mxu0
    %2137 = vmatprep.mubr.bf16.mxu0 %v1482
    %2138 = vmatmul.mubr.bf16.gmra.mrb[0].mxu0 %v1481
    %v2139 = vpop.f32.mrb[0].mxu0
    %v2140 = vadd.f32 0.0, %v2139
    %v2141 = vpop.f32.mrb[0].mxu0
    %v2142 = vpop.f32.mrb[0].mxu0
    %v2143 = vadd.f32 0.0, %v2142
    %v2144 = vpop.f32.mrb[0].mxu0
    %2145 = vmatprep.mubr.bf16.mxu0 %v1488
    %2146 = vmatmul.mubr.bf16.gmra.mrb[0].mxu0 %v1487
    %v2147 = vpop.f32.mrb[0].mxu0
    %v2148 = vadd.f32 0.0, %v2147
    %v2149 = vpop.f32.mrb[0].mxu0
    %v2150 = vpop.f32.mrb[0].mxu0
    %v2151 = vadd.f32 0.0, %v2150
    %v2152 = vpop.f32.mrb[0].mxu0
    %2153 = vmatprep.mubr.bf16.mxu0 %v1494
    %2154 = vmatmul.mubr.bf16.gmra.mrb[0].mxu0 %v1493
    %v2155 = vpop.f32.mrb[0].mxu0
    %v2156 = vadd.f32 0.0, %v2155
    %v2157 = vpop.f32.mrb[0].mxu0
    %v2158 = vpop.f32.mrb[0].mxu0
    %v2159 = vadd.f32 0.0, %v2158
    %v2160 = vpop.f32.mrb[0].mxu0
    %2161 = vmatprep.mubr.bf16.mxu0 %v1500
    %2162 = vmatmul.mubr.bf16.gmra.mrb[0].mxu0 %v1499
    %v2163 = vpop.f32.mrb[0].mxu0
    %v2164 = vadd.f32 0.0, %v2163
    %v2165 = vpop.f32.mrb[0].mxu0
    %v2166 = vpop.f32.mrb[0].mxu0
    %v2167 = vadd.f32 0.0, %v2166
    %v2168 = vpop.f32.mrb[0].mxu0
    %2169 = vmatprep.mubr.bf16.mxu0 %v1506
    %2170 = vmatmul.mubr.bf16.gmra.mrb[0].mxu0 %v1505
    %v2171 = vpop.f32.mrb[0].mxu0
    %v2172 = vadd.f32 0.0, %v2171
    %v2173 = vpop.f32.mrb[0].mxu0
    %v2174 = vpop.f32.mrb[0].mxu0
    %v2175 = vadd.f32 0.0, %v2174
    %v2176 = vpop.f32.mrb[0].mxu0
    %2177 = vmatprep.mubr.bf16.mxu0 %v1512
    %2178 = vmatmul.mubr.bf16.gmra.mrb[0].mxu0 %v1511
    %v2179 = vpop.f32.mrb[0].mxu0
    %v2180 = vadd.f32 0.0, %v2179
    %v2181 = vpop.f32.mrb[0].mxu0
    %v2182 = vpop.f32.mrb[0].mxu0
    %v2183 = vadd.f32 0.0, %v2182
    %v2184 = vpop.f32.mrb[0].mxu0
    %2185 = vmatprep.mubr.bf16.mxu0 %v1518
    %2186 = vmatmul.mubr.bf16.gmra.mrb[0].mxu0 %v1517
    %v2187 = vpop.f32.mrb[0].mxu0
    %v2188 = vadd.f32 0.0, %v2187
    %v2189 = vpop.f32.mrb[0].mxu0
    %v2190 = vpop.f32.mrb[0].mxu0
    %v2191 = vadd.f32 0.0, %v2190
    %v2192 = vpop.f32.mrb[0].mxu0
    %2193 = vmatprep.mubr.bf16.mxu0 %v1524
    %2194 = vmatmul.mubr.bf16.gmra.mrb[0].mxu0 %v1523
    %v2195 = vpop.f32.mrb[0].mxu0
    %v2196 = vadd.f32 0.0, %v2195
    %v2197 = vpop.f32.mrb[0].mxu0
    %v2198 = vpop.f32.mrb[0].mxu0
    %v2199 = vadd.f32 0.0, %v2198
    %v2200 = vpop.f32.mrb[0].mxu0
    %2201 = vmatprep.mubr.bf16.mxu0 %v1530
    %2202 = vmatmul.mubr.bf16.gmra.mrb[0].mxu0 %v1529
    %v2203 = vpop.f32.mrb[0].mxu0
    %v2204 = vadd.f32 0.0, %v2203
    %v2205 = vpop.f32.mrb[0].mxu0
    %v2206 = vpop.f32.mrb[0].mxu0
    %v2207 = vadd.f32 0.0, %v2206
    %v2208 = vpop.f32.mrb[0].mxu0
    %2209 = vmatprep.mubr.bf16.mxu0 %v1536
    %2210 = vmatmul.mubr.bf16.gmra.mrb[0].mxu0 %v1535
    %v2211 = vpop.f32.mrb[0].mxu0
    %v2212 = vadd.f32 0.0, %v2211
    %v2213 = vpop.f32.mrb[0].mxu0
    %v2214 = vpop.f32.mrb[0].mxu0
    %v2215 = vadd.f32 0.0, %v2214
    %v2216 = vpop.f32.mrb[0].mxu0
    %2217 = vmatprep.mubr.bf16.mxu0 %v1542
    %2218 = vmatmul.mubr.bf16.gmra.mrb[0].mxu0 %v1541
    %v2219 = vpop.f32.mrb[0].mxu0
    %v2220 = vadd.f32 0.0, %v2219
    %v2221 = vpop.f32.mrb[0].mxu0
    %v2222 = vpop.f32.mrb[0].mxu0
    %v2223 = vadd.f32 0.0, %v2222
    %v2224 = vpop.f32.mrb[0].mxu0
    %2225 = vmatprep.mubr.bf16.mxu0 %v1548
    %2226 = vmatmul.mubr.bf16.gmra.mrb[0].mxu0 %v1547
    %v2227 = vpop.f32.mrb[0].mxu0
    %v2228 = vadd.f32 0.0, %v2227
    %v2229 = vpop.f32.mrb[0].mxu0
    %v2230 = vpop.f32.mrb[0].mxu0
    %v2231 = vadd.f32 0.0, %v2230
    %v2232 = vpop.f32.mrb[0].mxu0
    %2233 = vmatprep.mubr.bf16.mxu0 %v1554
    %2234 = vmatmul.mubr.bf16.gmra.mrb[0].mxu0 %v1553
    %v2235 = vpop.f32.mrb[0].mxu0
    %v2236 = vadd.f32 0.0, %v2235
    %v2237 = vpop.f32.mrb[0].mxu0
    %v2238 = vpop.f32.mrb[0].mxu0
    %v2239 = vadd.f32 0.0, %v2238
    %v2240 = vpop.f32.mrb[0].mxu0
    %2241 = vmatprep.mubr.bf16.mxu0 %v1560
    %2242 = vmatmul.mubr.bf16.gmra.mrb[0].mxu0 %v1559
    %v2243 = vpop.f32.mrb[0].mxu0
    %v2244 = vadd.f32 0.0, %v2243
    %v2245 = vpop.f32.mrb[0].mxu0
    %v2246 = vpop.f32.mrb[0].mxu0
    %v2247 = vadd.f32 0.0, %v2246
    %v2248 = vpop.f32.mrb[0].mxu0
    %2249 = vmatprep.mubr.bf16.mxu0 %v1566
    %2250 = vmatmul.mubr.bf16.gmra.mrb[0].mxu0 %v1565
    %v2251 = vpop.f32.mrb[0].mxu0
    %v2252 = vadd.f32 0.0, %v2251
    %v2253 = vpop.f32.mrb[0].mxu0
    %v2254 = vpop.f32.mrb[0].mxu0
    %v2255 = vadd.f32 0.0, %v2254
    %v2256 = vpop.f32.mrb[0].mxu0
    %2257 = vmatprep.mubr.bf16.mxu0 %v1572
    %2258 = vmatmul.mubr.bf16.gmra.mrb[0].mxu0 %v1571
    %v2259 = vpop.f32.mrb[0].mxu0
    %v2260 = vadd.f32 0.0, %v2259
    %v2261 = vpop.f32.mrb[0].mxu0
    %v2262 = vpop.f32.mrb[0].mxu0
    %v2263 = vadd.f32 0.0, %v2262
    %v2264 = vpop.f32.mrb[0].mxu0
    %2265 = vmatprep.mubr.bf16.mxu0 %v1578
    %2266 = vmatmul.mubr.bf16.gmra.mrb[0].mxu0 %v1577
    %v2267 = vpop.f32.mrb[0].mxu0
    %v2268 = vadd.f32 0.0, %v2267
    %v2269 = vpop.f32.mrb[0].mxu0
    %v2270 = vpop.f32.mrb[0].mxu0
    %v2271 = vadd.f32 0.0, %v2270
    %v2272 = vpop.f32.mrb[0].mxu0
    %2273 = vmatprep.mubr.bf16.mxu0 %v1584
    %2274 = vmatmul.mubr.bf16.gmra.mrb[0].mxu0 %v1583
    %v2275 = vpop.f32.mrb[0].mxu0
    %v2276 = vadd.f32 0.0, %v2275
    %v2277 = vpop.f32.mrb[0].mxu0
    %v2278 = vpop.f32.mrb[0].mxu0
    %v2279 = vadd.f32 0.0, %v2278
    %v2280 = vpop.f32.mrb[0].mxu0
    %2281 = vmatprep.mubr.bf16.mxu0 %v1590
    %2282 = vmatmul.mubr.bf16.gmra.mrb[0].mxu0 %v1589
    %v2283 = vpop.f32.mrb[0].mxu0
    %v2284 = vadd.f32 0.0, %v2283
    %v2285 = vpop.f32.mrb[0].mxu0
    %v2286 = vpop.f32.mrb[0].mxu0
    %v2287 = vadd.f32 0.0, %v2286
    %v2288 = vpop.f32.mrb[0].mxu0
    %2289 = vmatprep.mubr.bf16.mxu0 %v1596
    %2290 = vmatmul.mubr.bf16.gmra.mrb[0].mxu0 %v1595
    %v2291 = vpop.f32.mrb[0].mxu0
    %v2292 = vadd.f32 0.0, %v2291
    %v2293 = vpop.f32.mrb[0].mxu0
    %v2294 = vpop.f32.mrb[0].mxu0
    %v2295 = vadd.f32 0.0, %v2294
    %v2296 = vpop.f32.mrb[0].mxu0
    %2297 = vmatprep.mubr.bf16.mxu0 %v1602
    %2298 = vmatmul.mubr.bf16.gmra.mrb[0].mxu0 %v1601
    %v2299 = vpop.f32.mrb[0].mxu0
    %v2300 = vadd.f32 0.0, %v2299
    %v2301 = vpop.f32.mrb[0].mxu0
    %v2302 = vpop.f32.mrb[0].mxu0
    %v2303 = vadd.f32 0.0, %v2302
    %v2304 = vpop.f32.mrb[0].mxu0
    %2305 = vmatprep.mubr.bf16.mxu0 %v1608
    %2306 = vmatmul.mubr.bf16.gmra.mrb[0].mxu0 %v1607
    %v2307 = vpop.f32.mrb[0].mxu0
    %v2308 = vadd.f32 0.0, %v2307
    %v2309 = vpop.f32.mrb[0].mxu0
    %v2310 = vpop.f32.mrb[0].mxu0
    %v2311 = vadd.f32 0.0, %v2310
    %v2312 = vpop.f32.mrb[0].mxu0
    %2313 = vmatprep.mubr.bf16.mxu0 %v1614
    %2314 = vmatmul.mubr.bf16.gmra.mrb[0].mxu0 %v1613
    %v2315 = vpop.f32.mrb[0].mxu0
    %v2316 = vadd.f32 0.0, %v2315
    %v2317 = vpop.f32.mrb[0].mxu0
    %v2318 = vpop.f32.mrb[0].mxu0
    %v2319 = vadd.f32 0.0, %v2318
    %v2320 = vpop.f32.mrb[0].mxu0
    %2321 = vmatprep.mubr.bf16.mxu0 %v1620
    %2322 = vmatmul.mubr.bf16.gmra.mrb[0].mxu0 %v1619
    %v2323 = vpop.f32.mrb[0].mxu0
    %v2324 = vadd.f32 0.0, %v2323
    %v2325 = vpop.f32.mrb[0].mxu0
    %v2326 = vpop.f32.mrb[0].mxu0
    %v2327 = vadd.f32 0.0, %v2326
    %v2328 = vpop.f32.mrb[0].mxu0
    %2329 = vdwg.mxu0
    %2330 = vmatprep.subr.bf16.mxu0 0
    %2331 = vmatpush1.bf16.msra.mxu0 %v441
    %2332 = vmatprep.subr.bf16.mxu0 0
    %2333 = vmatpush1.bf16.msra.mxu0 %v442
    %2334 = vmatprep.subr.bf16.mxu0 0
    %2335 = vmatpush1.bf16.msra.mxu0 %v443
    %2336 = vmatprep.subr.bf16.mxu0 0
    %2337 = vmatpush1.bf16.msra.mxu0 %v444
    %2338 = vmatprep.subr.bf16.mxu0 0
    %2339 = vmatpush1.bf16.msra.mxu0 %v445
    %2340 = vmatprep.subr.bf16.mxu0 0
    %2341 = vmatpush1.bf16.msra.mxu0 %v446
    %2342 = vmatprep.subr.bf16.mxu0 0
    %2343 = vmatpush1.bf16.msra.mxu0 %v447
    %2344 = vmatprep.subr.bf16.mxu0 0
    %2345 = vmatpush1.bf16.msra.mxu0 %v448
    %2346 = vmatprep.subr.bf16.mxu0 0
    %2347 = vmatpush1.bf16.msra.mxu0 %v449
    %2348 = vmatprep.subr.bf16.mxu0 0
    %2349 = vmatpush1.bf16.msra.mxu0 %v450
    %2350 = vmatprep.subr.bf16.mxu0 0
    %2351 = vmatpush1.bf16.msra.mxu0 %v451
    %2352 = vmatprep.subr.bf16.mxu0 0
    %2353 = vmatpush1.bf16.msra.mxu0 %v452
    %2354 = vmatprep.subr.bf16.mxu0 0
    %2355 = vmatpush1.bf16.msra.mxu0 %v453
    %2356 = vmatprep.subr.bf16.mxu0 0
    %2357 = vmatpush1.bf16.msra.mxu0 %v454
    %2358 = vmatprep.subr.bf16.mxu0 0
    %2359 = vmatpush1.bf16.msra.mxu0 %v455
    %2360 = vmatprep.subr.bf16.mxu0 0
    %2361 = vmatpush1.bf16.msra.mxu0 %v456
    %2362 = vmatprep.mubr.bf16.mxu0 %v1340
    %2363 = vmatmul.mubr.bf16.gmra.mrb[0].mxu0 %v1339
    %v2364 = vpop.f32.mrb[0].mxu0
    %v2365 = vadd.f32 %v1948, %v2364
    %v2366 = vpop.f32.mrb[0].mxu0
    %v2367 = vpop.f32.mrb[0].mxu0
    %v2368 = vadd.f32 %v1951, %v2367
    %v2369 = vpop.f32.mrb[0].mxu0
    %2370 = vmatprep.mubr.bf16.mxu0 %v1346
    %2371 = vmatmul.mubr.bf16.gmra.mrb[0].mxu0 %v1345
    %v2372 = vpop.f32.mrb[0].mxu0
    %v2373 = vadd.f32 %v1956, %v2372
    %v2374 = vpop.f32.mrb[0].mxu0
    %v2375 = vpop.f32.mrb[0].mxu0
    %v2376 = vadd.f32 %v1959, %v2375
    %v2377 = vpop.f32.mrb[0].mxu0
    %2378 = vmatprep.mubr.bf16.mxu0 %v1352
    %2379 = vmatmul.mubr.bf16.gmra.mrb[0].mxu0 %v1351
    %v2380 = vpop.f32.mrb[0].mxu0
    %v2381 = vadd.f32 %v1964, %v2380
    %v2382 = vpop.f32.mrb[0].mxu0
    %v2383 = vpop.f32.mrb[0].mxu0
    %v2384 = vadd.f32 %v1967, %v2383
    %v2385 = vpop.f32.mrb[0].mxu0
    %2386 = vmatprep.mubr.bf16.mxu0 %v1358
    %2387 = vmatmul.mubr.bf16.gmra.mrb[0].mxu0 %v1357
    %v2388 = vpop.f32.mrb[0].mxu0
    %v2389 = vadd.f32 %v1972, %v2388
    %v2390 = vpop.f32.mrb[0].mxu0
    %v2391 = vpop.f32.mrb[0].mxu0
    %v2392 = vadd.f32 %v1975, %v2391
    %v2393 = vpop.f32.mrb[0].mxu0
    %2394 = vmatprep.mubr.bf16.mxu0 %v1364
    %2395 = vmatmul.mubr.bf16.gmra.mrb[0].mxu0 %v1363
    %v2396 = vpop.f32.mrb[0].mxu0
    %v2397 = vadd.f32 %v1980, %v2396
    %v2398 = vpop.f32.mrb[0].mxu0
    %v2399 = vpop.f32.mrb[0].mxu0
    %v2400 = vadd.f32 %v1983, %v2399
    %v2401 = vpop.f32.mrb[0].mxu0
    %2402 = vmatprep.mubr.bf16.mxu0 %v1370
    %2403 = vmatmul.mubr.bf16.gmra.mrb[0].mxu0 %v1369
    %v2404 = vpop.f32.mrb[0].mxu0
    %v2405 = vadd.f32 %v1988, %v2404
    %v2406 = vpop.f32.mrb[0].mxu0
    %v2407 = vpop.f32.mrb[0].mxu0
    %v2408 = vadd.f32 %v1991, %v2407
    %v2409 = vpop.f32.mrb[0].mxu0
    %2410 = vmatprep.mubr.bf16.mxu0 %v1376
    %2411 = vmatmul.mubr.bf16.gmra.mrb[0].mxu0 %v1375
    %v2412 = vpop.f32.mrb[0].mxu0
    %v2413 = vadd.f32 %v1996, %v2412
    %v2414 = vpop.f32.mrb[0].mxu0
    %v2415 = vpop.f32.mrb[0].mxu0
    %v2416 = vadd.f32 %v1999, %v2415
    %v2417 = vpop.f32.mrb[0].mxu0
    %2418 = vmatprep.mubr.bf16.mxu0 %v1382
    %2419 = vmatmul.mubr.bf16.gmra.mrb[0].mxu0 %v1381
    %v2420 = vpop.f32.mrb[0].mxu0
    %v2421 = vadd.f32 %v2004, %v2420
    %v2422 = vpop.f32.mrb[0].mxu0
    %v2423 = vpop.f32.mrb[0].mxu0
    %v2424 = vadd.f32 %v2007, %v2423
    %v2425 = vpop.f32.mrb[0].mxu0
    %2426 = vmatprep.mubr.bf16.mxu0 %v1388
    %2427 = vmatmul.mubr.bf16.gmra.mrb[0].mxu0 %v1387
    %v2428 = vpop.f32.mrb[0].mxu0
    %v2429 = vadd.f32 %v2012, %v2428
    %v2430 = vpop.f32.mrb[0].mxu0
    %v2431 = vpop.f32.mrb[0].mxu0
    %v2432 = vadd.f32 %v2015, %v2431
    %v2433 = vpop.f32.mrb[0].mxu0
    %2434 = vmatprep.mubr.bf16.mxu0 %v1394
    %2435 = vmatmul.mubr.bf16.gmra.mrb[0].mxu0 %v1393
    %v2436 = vpop.f32.mrb[0].mxu0
    %v2437 = vadd.f32 %v2020, %v2436
    %v2438 = vpop.f32.mrb[0].mxu0
    %v2439 = vpop.f32.mrb[0].mxu0
    %v2440 = vadd.f32 %v2023, %v2439
    %v2441 = vpop.f32.mrb[0].mxu0
    %2442 = vmatprep.mubr.bf16.mxu0 %v1400
    %2443 = vmatmul.mubr.bf16.gmra.mrb[0].mxu0 %v1399
    %v2444 = vpop.f32.mrb[0].mxu0
    %v2445 = vadd.f32 %v2028, %v2444
    %v2446 = vpop.f32.mrb[0].mxu0
    %v2447 = vpop.f32.mrb[0].mxu0
    %v2448 = vadd.f32 %v2031, %v2447
    %v2449 = vpop.f32.mrb[0].mxu0
    %2450 = vmatprep.mubr.bf16.mxu0 %v1406
    %2451 = vmatmul.mubr.bf16.gmra.mrb[0].mxu0 %v1405
    %v2452 = vpop.f32.mrb[0].mxu0
    %v2453 = vadd.f32 %v2036, %v2452
    %v2454 = vpop.f32.mrb[0].mxu0
    %v2455 = vpop.f32.mrb[0].mxu0
    %v2456 = vadd.f32 %v2039, %v2455
    %v2457 = vpop.f32.mrb[0].mxu0
    %2458 = vmatprep.mubr.bf16.mxu0 %v1412
    %2459 = vmatmul.mubr.bf16.gmra.mrb[0].mxu0 %v1411
    %v2460 = vpop.f32.mrb[0].mxu0
    %v2461 = vadd.f32 %v2044, %v2460
    %v2462 = vpop.f32.mrb[0].mxu0
    %v2463 = vpop.f32.mrb[0].mxu0
    %v2464 = vadd.f32 %v2047, %v2463
    %v2465 = vpop.f32.mrb[0].mxu0
    %2466 = vmatprep.mubr.bf16.mxu0 %v1418
    %2467 = vmatmul.mubr.bf16.gmra.mrb[0].mxu0 %v1417
    %v2468 = vpop.f32.mrb[0].mxu0
    %v2469 = vadd.f32 %v2052, %v2468
    %v2470 = vpop.f32.mrb[0].mxu0
    %v2471 = vpop.f32.mrb[0].mxu0
    %v2472 = vadd.f32 %v2055, %v2471
    %v2473 = vpop.f32.mrb[0].mxu0
    %2474 = vmatprep.mubr.bf16.mxu0 %v1424
    %2475 = vmatmul.mubr.bf16.gmra.mrb[0].mxu0 %v1423
    %v2476 = vpop.f32.mrb[0].mxu0
    %v2477 = vadd.f32 %v2060, %v2476
    %v2478 = vpop.f32.mrb[0].mxu0
    %v2479 = vpop.f32.mrb[0].mxu0
    %v2480 = vadd.f32 %v2063, %v2479
    %v2481 = vpop.f32.mrb[0].mxu0
    %2482 = vmatprep.mubr.bf16.mxu0 %v1430
    %2483 = vmatmul.mubr.bf16.gmra.mrb[0].mxu0 %v1429
    %v2484 = vpop.f32.mrb[0].mxu0
    %v2485 = vadd.f32 %v2068, %v2484
    %v2486 = vpop.f32.mrb[0].mxu0
    %v2487 = vpop.f32.mrb[0].mxu0
    %v2488 = vadd.f32 %v2071, %v2487
    %v2489 = vpop.f32.mrb[0].mxu0
    %2490 = vmatprep.mubr.bf16.mxu0 %v1436
    %2491 = vmatmul.mubr.bf16.gmra.mrb[0].mxu0 %v1435
    %v2492 = vpop.f32.mrb[0].mxu0
    %v2493 = vadd.f32 %v2076, %v2492
    %v2494 = vpop.f32.mrb[0].mxu0
    %v2495 = vpop.f32.mrb[0].mxu0
    %v2496 = vadd.f32 %v2079, %v2495
    %v2497 = vpop.f32.mrb[0].mxu0
    %2498 = vmatprep.mubr.bf16.mxu0 %v1442
    %2499 = vmatmul.mubr.bf16.gmra.mrb[0].mxu0 %v1441
    %v2500 = vpop.f32.mrb[0].mxu0
    %v2501 = vadd.f32 %v2084, %v2500
    %v2502 = vpop.f32.mrb[0].mxu0
    %v2503 = vpop.f32.mrb[0].mxu0
    %v2504 = vadd.f32 %v2087, %v2503
    %v2505 = vpop.f32.mrb[0].mxu0
    %2506 = vmatprep.mubr.bf16.mxu0 %v1448
    %2507 = vmatmul.mubr.bf16.gmra.mrb[0].mxu0 %v1447
    %v2508 = vpop.f32.mrb[0].mxu0
    %v2509 = vadd.f32 %v2092, %v2508
    %v2510 = vpop.f32.mrb[0].mxu0
    %v2511 = vpop.f32.mrb[0].mxu0
    %v2512 = vadd.f32 %v2095, %v2511
    %v2513 = vpop.f32.mrb[0].mxu0
    %2514 = vmatprep.mubr.bf16.mxu0 %v1454
    %2515 = vmatmul.mubr.bf16.gmra.mrb[0].mxu0 %v1453
    %v2516 = vpop.f32.mrb[0].mxu0
    %v2517 = vadd.f32 %v2100, %v2516
    %v2518 = vpop.f32.mrb[0].mxu0
    %v2519 = vpop.f32.mrb[0].mxu0
    %v2520 = vadd.f32 %v2103, %v2519
    %v2521 = vpop.f32.mrb[0].mxu0
    %2522 = vmatprep.mubr.bf16.mxu0 %v1460
    %2523 = vmatmul.mubr.bf16.gmra.mrb[0].mxu0 %v1459
    %v2524 = vpop.f32.mrb[0].mxu0
    %v2525 = vadd.f32 %v2108, %v2524
    %v2526 = vpop.f32.mrb[0].mxu0
    %v2527 = vpop.f32.mrb[0].mxu0
    %v2528 = vadd.f32 %v2111, %v2527
    %v2529 = vpop.f32.mrb[0].mxu0
    %2530 = vmatprep.mubr.bf16.mxu0 %v1466
    %2531 = vmatmul.mubr.bf16.gmra.mrb[0].mxu0 %v1465
    %v2532 = vpop.f32.mrb[0].mxu0
    %v2533 = vadd.f32 %v2116, %v2532
    %v2534 = vpop.f32.mrb[0].mxu0
    %v2535 = vpop.f32.mrb[0].mxu0
    %v2536 = vadd.f32 %v2119, %v2535
    %v2537 = vpop.f32.mrb[0].mxu0
    %2538 = vmatprep.mubr.bf16.mxu0 %v1472
    %2539 = vmatmul.mubr.bf16.gmra.mrb[0].mxu0 %v1471
    %v2540 = vpop.f32.mrb[0].mxu0
    %v2541 = vadd.f32 %v2124, %v2540
    %v2542 = vpop.f32.mrb[0].mxu0
    %v2543 = vpop.f32.mrb[0].mxu0
    %v2544 = vadd.f32 %v2127, %v2543
    %v2545 = vpop.f32.mrb[0].mxu0
    %2546 = vmatprep.mubr.bf16.mxu0 %v1478
    %2547 = vmatmul.mubr.bf16.gmra.mrb[0].mxu0 %v1477
    %v2548 = vpop.f32.mrb[0].mxu0
    %v2549 = vadd.f32 %v2132, %v2548
    %v2550 = vpop.f32.mrb[0].mxu0
    %v2551 = vpop.f32.mrb[0].mxu0
    %v2552 = vadd.f32 %v2135, %v2551
    %v2553 = vpop.f32.mrb[0].mxu0
    %2554 = vmatprep.mubr.bf16.mxu0 %v1484
    %2555 = vmatmul.mubr.bf16.gmra.mrb[0].mxu0 %v1483
    %v2556 = vpop.f32.mrb[0].mxu0
    %v2557 = vadd.f32 %v2140, %v2556
    %v2558 = vpop.f32.mrb[0].mxu0
    %v2559 = vpop.f32.mrb[0].mxu0
    %v2560 = vadd.f32 %v2143, %v2559
    %v2561 = vpop.f32.mrb[0].mxu0
    %2562 = vmatprep.mubr.bf16.mxu0 %v1490
    %2563 = vmatmul.mubr.bf16.gmra.mrb[0].mxu0 %v1489
    %v2564 = vpop.f32.mrb[0].mxu0
    %v2565 = vadd.f32 %v2148, %v2564
    %v2566 = vpop.f32.mrb[0].mxu0
    %v2567 = vpop.f32.mrb[0].mxu0
    %v2568 = vadd.f32 %v2151, %v2567
    %v2569 = vpop.f32.mrb[0].mxu0
    %2570 = vmatprep.mubr.bf16.mxu0 %v1496
    %2571 = vmatmul.mubr.bf16.gmra.mrb[0].mxu0 %v1495
    %v2572 = vpop.f32.mrb[0].mxu0
    %v2573 = vadd.f32 %v2156, %v2572
    %v2574 = vpop.f32.mrb[0].mxu0
    %v2575 = vpop.f32.mrb[0].mxu0
    %v2576 = vadd.f32 %v2159, %v2575
    %v2577 = vpop.f32.mrb[0].mxu0
    %2578 = vmatprep.mubr.bf16.mxu0 %v1502
    %2579 = vmatmul.mubr.bf16.gmra.mrb[0].mxu0 %v1501
    %v2580 = vpop.f32.mrb[0].mxu0
    %v2581 = vadd.f32 %v2164, %v2580
    %v2582 = vpop.f32.mrb[0].mxu0
    %v2583 = vpop.f32.mrb[0].mxu0
    %v2584 = vadd.f32 %v2167, %v2583
    %v2585 = vpop.f32.mrb[0].mxu0
    %2586 = vmatprep.mubr.bf16.mxu0 %v1508
    %2587 = vmatmul.mubr.bf16.gmra.mrb[0].mxu0 %v1507
    %v2588 = vpop.f32.mrb[0].mxu0
    %v2589 = vadd.f32 %v2172, %v2588
    %v2590 = vpop.f32.mrb[0].mxu0
    %v2591 = vpop.f32.mrb[0].mxu0
    %v2592 = vadd.f32 %v2175, %v2591
    %v2593 = vpop.f32.mrb[0].mxu0
    %2594 = vmatprep.mubr.bf16.mxu0 %v1514
    %2595 = vmatmul.mubr.bf16.gmra.mrb[0].mxu0 %v1513
    %v2596 = vpop.f32.mrb[0].mxu0
    %v2597 = vadd.f32 %v2180, %v2596
    %v2598 = vpop.f32.mrb[0].mxu0
    %v2599 = vpop.f32.mrb[0].mxu0
    %v2600 = vadd.f32 %v2183, %v2599
    %v2601 = vpop.f32.mrb[0].mxu0
    %2602 = vmatprep.mubr.bf16.mxu0 %v1520
    %2603 = vmatmul.mubr.bf16.gmra.mrb[0].mxu0 %v1519
    %v2604 = vpop.f32.mrb[0].mxu0
    %v2605 = vadd.f32 %v2188, %v2604
    %v2606 = vpop.f32.mrb[0].mxu0
    %v2607 = vpop.f32.mrb[0].mxu0
    %v2608 = vadd.f32 %v2191, %v2607
    %v2609 = vpop.f32.mrb[0].mxu0
    %2610 = vmatprep.mubr.bf16.mxu0 %v1526
    %2611 = vmatmul.mubr.bf16.gmra.mrb[0].mxu0 %v1525
    %v2612 = vpop.f32.mrb[0].mxu0
    %v2613 = vadd.f32 %v2196, %v2612
    %v2614 = vpop.f32.mrb[0].mxu0
    %v2615 = vpop.f32.mrb[0].mxu0
    %v2616 = vadd.f32 %v2199, %v2615
    %v2617 = vpop.f32.mrb[0].mxu0
    %2618 = vmatprep.mubr.bf16.mxu0 %v1532
    %2619 = vmatmul.mubr.bf16.gmra.mrb[0].mxu0 %v1531
    %v2620 = vpop.f32.mrb[0].mxu0
    %v2621 = vadd.f32 %v2204, %v2620
    %v2622 = vpop.f32.mrb[0].mxu0
    %v2623 = vpop.f32.mrb[0].mxu0
    %v2624 = vadd.f32 %v2207, %v2623
    %v2625 = vpop.f32.mrb[0].mxu0
    %2626 = vmatprep.mubr.bf16.mxu0 %v1538
    %2627 = vmatmul.mubr.bf16.gmra.mrb[0].mxu0 %v1537
    %v2628 = vpop.f32.mrb[0].mxu0
    %v2629 = vadd.f32 %v2212, %v2628
    %v2630 = vpop.f32.mrb[0].mxu0
    %v2631 = vpop.f32.mrb[0].mxu0
    %v2632 = vadd.f32 %v2215, %v2631
    %v2633 = vpop.f32.mrb[0].mxu0
    %2634 = vmatprep.mubr.bf16.mxu0 %v1544
    %2635 = vmatmul.mubr.bf16.gmra.mrb[0].mxu0 %v1543
    %v2636 = vpop.f32.mrb[0].mxu0
    %v2637 = vadd.f32 %v2220, %v2636
    %v2638 = vpop.f32.mrb[0].mxu0
    %v2639 = vpop.f32.mrb[0].mxu0
    %v2640 = vadd.f32 %v2223, %v2639
    %v2641 = vpop.f32.mrb[0].mxu0
    %2642 = vmatprep.mubr.bf16.mxu0 %v1550
    %2643 = vmatmul.mubr.bf16.gmra.mrb[0].mxu0 %v1549
    %v2644 = vpop.f32.mrb[0].mxu0
    %v2645 = vadd.f32 %v2228, %v2644
    %v2646 = vpop.f32.mrb[0].mxu0
    %v2647 = vpop.f32.mrb[0].mxu0
    %v2648 = vadd.f32 %v2231, %v2647
    %v2649 = vpop.f32.mrb[0].mxu0
    %2650 = vmatprep.mubr.bf16.mxu0 %v1556
    %2651 = vmatmul.mubr.bf16.gmra.mrb[0].mxu0 %v1555
    %v2652 = vpop.f32.mrb[0].mxu0
    %v2653 = vadd.f32 %v2236, %v2652
    %v2654 = vpop.f32.mrb[0].mxu0
    %v2655 = vpop.f32.mrb[0].mxu0
    %v2656 = vadd.f32 %v2239, %v2655
    %v2657 = vpop.f32.mrb[0].mxu0
    %2658 = vmatprep.mubr.bf16.mxu0 %v1562
    %2659 = vmatmul.mubr.bf16.gmra.mrb[0].mxu0 %v1561
    %v2660 = vpop.f32.mrb[0].mxu0
    %v2661 = vadd.f32 %v2244, %v2660
    %v2662 = vpop.f32.mrb[0].mxu0
    %v2663 = vpop.f32.mrb[0].mxu0
    %v2664 = vadd.f32 %v2247, %v2663
    %v2665 = vpop.f32.mrb[0].mxu0
    %2666 = vmatprep.mubr.bf16.mxu0 %v1568
    %2667 = vmatmul.mubr.bf16.gmra.mrb[0].mxu0 %v1567
    %v2668 = vpop.f32.mrb[0].mxu0
    %v2669 = vadd.f32 %v2252, %v2668
    %v2670 = vpop.f32.mrb[0].mxu0
    %v2671 = vpop.f32.mrb[0].mxu0
    %v2672 = vadd.f32 %v2255, %v2671
    %v2673 = vpop.f32.mrb[0].mxu0
    %2674 = vmatprep.mubr.bf16.mxu0 %v1574
    %2675 = vmatmul.mubr.bf16.gmra.mrb[0].mxu0 %v1573
    %v2676 = vpop.f32.mrb[0].mxu0
    %v2677 = vadd.f32 %v2260, %v2676
    %v2678 = vpop.f32.mrb[0].mxu0
    %v2679 = vpop.f32.mrb[0].mxu0
    %v2680 = vadd.f32 %v2263, %v2679
    %v2681 = vpop.f32.mrb[0].mxu0
    %2682 = vmatprep.mubr.bf16.mxu0 %v1580
    %2683 = vmatmul.mubr.bf16.gmra.mrb[0].mxu0 %v1579
    %v2684 = vpop.f32.mrb[0].mxu0
    %v2685 = vadd.f32 %v2268, %v2684
    %v2686 = vpop.f32.mrb[0].mxu0
    %v2687 = vpop.f32.mrb[0].mxu0
    %v2688 = vadd.f32 %v2271, %v2687
    %v2689 = vpop.f32.mrb[0].mxu0
    %2690 = vmatprep.mubr.bf16.mxu0 %v1586
    %2691 = vmatmul.mubr.bf16.gmra.mrb[0].mxu0 %v1585
    %v2692 = vpop.f32.mrb[0].mxu0
    %v2693 = vadd.f32 %v2276, %v2692
    %v2694 = vpop.f32.mrb[0].mxu0
    %v2695 = vpop.f32.mrb[0].mxu0
    %v2696 = vadd.f32 %v2279, %v2695
    %v2697 = vpop.f32.mrb[0].mxu0
    %2698 = vmatprep.mubr.bf16.mxu0 %v1592
    %2699 = vmatmul.mubr.bf16.gmra.mrb[0].mxu0 %v1591
    %v2700 = vpop.f32.mrb[0].mxu0
    %v2701 = vadd.f32 %v2284, %v2700
    %v2702 = vpop.f32.mrb[0].mxu0
    %v2703 = vpop.f32.mrb[0].mxu0
    %v2704 = vadd.f32 %v2287, %v2703
    %v2705 = vpop.f32.mrb[0].mxu0
    %2706 = vmatprep.mubr.bf16.mxu0 %v1598
    %2707 = vmatmul.mubr.bf16.gmra.mrb[0].mxu0 %v1597
    %v2708 = vpop.f32.mrb[0].mxu0
    %v2709 = vadd.f32 %v2292, %v2708
    %v2710 = vpop.f32.mrb[0].mxu0
    %v2711 = vpop.f32.mrb[0].mxu0
    %v2712 = vadd.f32 %v2295, %v2711
    %v2713 = vpop.f32.mrb[0].mxu0
    %2714 = vmatprep.mubr.bf16.mxu0 %v1604
    %2715 = vmatmul.mubr.bf16.gmra.mrb[0].mxu0 %v1603
    %v2716 = vpop.f32.mrb[0].mxu0
    %v2717 = vadd.f32 %v2300, %v2716
    %v2718 = vpop.f32.mrb[0].mxu0
    %v2719 = vpop.f32.mrb[0].mxu0
    %v2720 = vadd.f32 %v2303, %v2719
    %v2721 = vpop.f32.mrb[0].mxu0
    %2722 = vmatprep.mubr.bf16.mxu0 %v1610
    %2723 = vmatmul.mubr.bf16.gmra.mrb[0].mxu0 %v1609
    %v2724 = vpop.f32.mrb[0].mxu0
    %v2725 = vadd.f32 %v2308, %v2724
    %v2726 = vpop.f32.mrb[0].mxu0
    %v2727 = vpop.f32.mrb[0].mxu0
    %v2728 = vadd.f32 %v2311, %v2727
    %v2729 = vpop.f32.mrb[0].mxu0
    %2730 = vmatprep.mubr.bf16.mxu0 %v1616
    %2731 = vmatmul.mubr.bf16.gmra.mrb[0].mxu0 %v1615
    %v2732 = vpop.f32.mrb[0].mxu0
    %v2733 = vadd.f32 %v2316, %v2732
    %v2734 = vpop.f32.mrb[0].mxu0
    %v2735 = vpop.f32.mrb[0].mxu0
    %v2736 = vadd.f32 %v2319, %v2735
    %v2737 = vpop.f32.mrb[0].mxu0
    %2738 = vmatprep.mubr.bf16.mxu0 %v1622
    %2739 = vmatmul.mubr.bf16.gmra.mrb[0].mxu0 %v1621
    %v2740 = vpop.f32.mrb[0].mxu0
    %v2741 = vadd.f32 %v2324, %v2740
    %v2742 = vpop.f32.mrb[0].mxu0
    %v2743 = vpop.f32.mrb[0].mxu0
    %v2744 = vadd.f32 %v2327, %v2743
    %v2745 = vpop.f32.mrb[0].mxu0
    %2746 = vdwg.mxu0
    %2747 = vmatprep.subr.bf16.mxu0 0
    %2748 = vmatpush1.bf16.msra.mxu0 %v457
    %2749 = vmatprep.subr.bf16.mxu0 0
    %2750 = vmatpush1.bf16.msra.mxu0 %v458
    %2751 = vmatprep.subr.bf16.mxu0 0
    %2752 = vmatpush1.bf16.msra.mxu0 %v459
    %2753 = vmatprep.subr.bf16.mxu0 0
    %2754 = vmatpush1.bf16.msra.mxu0 %v460
    %2755 = vmatprep.subr.bf16.mxu0 0
    %2756 = vmatpush1.bf16.msra.mxu0 %v461
    %2757 = vmatprep.subr.bf16.mxu0 0
    %2758 = vmatpush1.bf16.msra.mxu0 %v462
    %2759 = vmatprep.subr.bf16.mxu0 0
    %2760 = vmatpush1.bf16.msra.mxu0 %v463
    %2761 = vmatprep.subr.bf16.mxu0 0
    %2762 = vmatpush1.bf16.msra.mxu0 %v464
    %2763 = vmatprep.subr.bf16.mxu0 0
    %2764 = vmatpush1.bf16.msra.mxu0 %v465
    %2765 = vmatprep.subr.bf16.mxu0 0
    %2766 = vmatpush1.bf16.msra.mxu0 %v466
    %2767 = vmatprep.subr.bf16.mxu0 0
    %2768 = vmatpush1.bf16.msra.mxu0 %v467
    %2769 = vmatprep.subr.bf16.mxu0 0
    %2770 = vmatpush1.bf16.msra.mxu0 %v468
    %2771 = vmatprep.subr.bf16.mxu0 0
    %2772 = vmatpush1.bf16.msra.mxu0 %v469
    %2773 = vmatprep.subr.bf16.mxu0 0
    %2774 = vmatpush1.bf16.msra.mxu0 %v470
    %2775 = vmatprep.subr.bf16.mxu0 0
    %2776 = vmatpush1.bf16.msra.mxu0 %v471
    %2777 = vmatprep.subr.bf16.mxu0 0
    %2778 = vmatpush1.bf16.msra.mxu0 %v472
    %2779 = vmatprep.mubr.bf16.mxu0 %v1342
    %2780 = vmatmul.mubr.bf16.gmra.mrb[0].mxu0 %v1341
    %v2781 = vpop.f32.mrb[0].mxu0
    %v2782 = vadd.f32 %v2365, %v2781
    %v2783 = vpop.f32.mrb[0].mxu0
    %v2784 = vpop.f32.mrb[0].mxu0
    %v2785 = vadd.f32 %v2368, %v2784
    %v2786 = vpop.f32.mrb[0].mxu0
    %2787 = vmatprep.mubr.bf16.mxu0 %v1348
    %2788 = vmatmul.mubr.bf16.gmra.mrb[0].mxu0 %v1347
    %v2789 = vpop.f32.mrb[0].mxu0
    %v2790 = vadd.f32 %v2373, %v2789
    %v2791 = vpop.f32.mrb[0].mxu0
    %v2792 = vpop.f32.mrb[0].mxu0
    %v2793 = vadd.f32 %v2376, %v2792
    %v2794 = vpop.f32.mrb[0].mxu0
    %2795 = vmatprep.mubr.bf16.mxu0 %v1354
    %2796 = vmatmul.mubr.bf16.gmra.mrb[0].mxu0 %v1353
    %v2797 = vpop.f32.mrb[0].mxu0
    %v2798 = vadd.f32 %v2381, %v2797
    %v2799 = vpop.f32.mrb[0].mxu0
    %v2800 = vpop.f32.mrb[0].mxu0
    %v2801 = vadd.f32 %v2384, %v2800
    %v2802 = vpop.f32.mrb[0].mxu0
    %2803 = vmatprep.mubr.bf16.mxu0 %v1360
    %2804 = vmatmul.mubr.bf16.gmra.mrb[0].mxu0 %v1359
    %v2805 = vpop.f32.mrb[0].mxu0
    %v2806 = vadd.f32 %v2389, %v2805
    %v2807 = vpop.f32.mrb[0].mxu0
    %v2808 = vpop.f32.mrb[0].mxu0
    %v2809 = vadd.f32 %v2392, %v2808
    %v2810 = vpop.f32.mrb[0].mxu0
    %2811 = vmatprep.mubr.bf16.mxu0 %v1366
    %2812 = vmatmul.mubr.bf16.gmra.mrb[0].mxu0 %v1365
    %v2813 = vpop.f32.mrb[0].mxu0
    %v2814 = vadd.f32 %v2397, %v2813
    %v2815 = vpop.f32.mrb[0].mxu0
    %v2816 = vpop.f32.mrb[0].mxu0
    %v2817 = vadd.f32 %v2400, %v2816
    %v2818 = vpop.f32.mrb[0].mxu0
    %2819 = vmatprep.mubr.bf16.mxu0 %v1372
    %2820 = vmatmul.mubr.bf16.gmra.mrb[0].mxu0 %v1371
    %v2821 = vpop.f32.mrb[0].mxu0
    %v2822 = vadd.f32 %v2405, %v2821
    %v2823 = vpop.f32.mrb[0].mxu0
    %v2824 = vpop.f32.mrb[0].mxu0
    %v2825 = vadd.f32 %v2408, %v2824
    %v2826 = vpop.f32.mrb[0].mxu0
    %2827 = vmatprep.mubr.bf16.mxu0 %v1378
    %2828 = vmatmul.mubr.bf16.gmra.mrb[0].mxu0 %v1377
    %v2829 = vpop.f32.mrb[0].mxu0
    %v2830 = vadd.f32 %v2413, %v2829
    %v2831 = vpop.f32.mrb[0].mxu0
    %v2832 = vpop.f32.mrb[0].mxu0
    %v2833 = vadd.f32 %v2416, %v2832
    %v2834 = vpop.f32.mrb[0].mxu0
    %2835 = vmatprep.mubr.bf16.mxu0 %v1384
    %2836 = vmatmul.mubr.bf16.gmra.mrb[0].mxu0 %v1383
    %v2837 = vpop.f32.mrb[0].mxu0
    %v2838 = vadd.f32 %v2421, %v2837
    %v2839 = vpop.f32.mrb[0].mxu0
    %v2840 = vpop.f32.mrb[0].mxu0
    %v2841 = vadd.f32 %v2424, %v2840
    %v2842 = vpop.f32.mrb[0].mxu0
    %2843 = vmatprep.mubr.bf16.mxu0 %v1390
    %2844 = vmatmul.mubr.bf16.gmra.mrb[0].mxu0 %v1389
    %v2845 = vpop.f32.mrb[0].mxu0
    %v2846 = vadd.f32 %v2429, %v2845
    %v2847 = vpop.f32.mrb[0].mxu0
    %v2848 = vpop.f32.mrb[0].mxu0
    %v2849 = vadd.f32 %v2432, %v2848
    %v2850 = vpop.f32.mrb[0].mxu0
    %2851 = vmatprep.mubr.bf16.mxu0 %v1396
    %2852 = vmatmul.mubr.bf16.gmra.mrb[0].mxu0 %v1395
    %v2853 = vpop.f32.mrb[0].mxu0
    %v2854 = vadd.f32 %v2437, %v2853
    %v2855 = vpop.f32.mrb[0].mxu0
    %v2856 = vpop.f32.mrb[0].mxu0
    %v2857 = vadd.f32 %v2440, %v2856
    %v2858 = vpop.f32.mrb[0].mxu0
    %2859 = vmatprep.mubr.bf16.mxu0 %v1402
    %2860 = vmatmul.mubr.bf16.gmra.mrb[0].mxu0 %v1401
    %v2861 = vpop.f32.mrb[0].mxu0
    %v2862 = vadd.f32 %v2445, %v2861
    %v2863 = vpop.f32.mrb[0].mxu0
    %v2864 = vpop.f32.mrb[0].mxu0
    %v2865 = vadd.f32 %v2448, %v2864
    %v2866 = vpop.f32.mrb[0].mxu0
    %2867 = vmatprep.mubr.bf16.mxu0 %v1408
    %2868 = vmatmul.mubr.bf16.gmra.mrb[0].mxu0 %v1407
    %v2869 = vpop.f32.mrb[0].mxu0
    %v2870 = vadd.f32 %v2453, %v2869
    %v2871 = vpop.f32.mrb[0].mxu0
    %v2872 = vpop.f32.mrb[0].mxu0
    %v2873 = vadd.f32 %v2456, %v2872
    %v2874 = vpop.f32.mrb[0].mxu0
    %2875 = vmatprep.mubr.bf16.mxu0 %v1414
    %2876 = vmatmul.mubr.bf16.gmra.mrb[0].mxu0 %v1413
    %v2877 = vpop.f32.mrb[0].mxu0
    %v2878 = vadd.f32 %v2461, %v2877
    %v2879 = vpop.f32.mrb[0].mxu0
    %v2880 = vpop.f32.mrb[0].mxu0
    %v2881 = vadd.f32 %v2464, %v2880
    %v2882 = vpop.f32.mrb[0].mxu0
    %2883 = vmatprep.mubr.bf16.mxu0 %v1420
    %2884 = vmatmul.mubr.bf16.gmra.mrb[0].mxu0 %v1419
    %v2885 = vpop.f32.mrb[0].mxu0
    %v2886 = vadd.f32 %v2469, %v2885
    %v2887 = vpop.f32.mrb[0].mxu0
    %v2888 = vpop.f32.mrb[0].mxu0
    %v2889 = vadd.f32 %v2472, %v2888
    %v2890 = vpop.f32.mrb[0].mxu0
    %2891 = vmatprep.mubr.bf16.mxu0 %v1426
    %2892 = vmatmul.mubr.bf16.gmra.mrb[0].mxu0 %v1425
    %v2893 = vpop.f32.mrb[0].mxu0
    %v2894 = vadd.f32 %v2477, %v2893
    %v2895 = vpop.f32.mrb[0].mxu0
    %v2896 = vpop.f32.mrb[0].mxu0
    %v2897 = vadd.f32 %v2480, %v2896
    %v2898 = vpop.f32.mrb[0].mxu0
    %2899 = vmatprep.mubr.bf16.mxu0 %v1432
    %2900 = vmatmul.mubr.bf16.gmra.mrb[0].mxu0 %v1431
    %v2901 = vpop.f32.mrb[0].mxu0
    %v2902 = vadd.f32 %v2485, %v2901
    %v2903 = vpop.f32.mrb[0].mxu0
    %v2904 = vpop.f32.mrb[0].mxu0
    %v2905 = vadd.f32 %v2488, %v2904
    %v2906 = vpop.f32.mrb[0].mxu0
    %2907 = vmatprep.mubr.bf16.mxu0 %v1438
    %2908 = vmatmul.mubr.bf16.gmra.mrb[0].mxu0 %v1437
    %v2909 = vpop.f32.mrb[0].mxu0
    %v2910 = vadd.f32 %v2493, %v2909
    %v2911 = vpop.f32.mrb[0].mxu0
    %v2912 = vpop.f32.mrb[0].mxu0
    %v2913 = vadd.f32 %v2496, %v2912
    %v2914 = vpop.f32.mrb[0].mxu0
    %2915 = vmatprep.mubr.bf16.mxu0 %v1444
    %2916 = vmatmul.mubr.bf16.gmra.mrb[0].mxu0 %v1443
    %v2917 = vpop.f32.mrb[0].mxu0
    %v2918 = vadd.f32 %v2501, %v2917
    %v2919 = vpop.f32.mrb[0].mxu0
    %v2920 = vpop.f32.mrb[0].mxu0
    %v2921 = vadd.f32 %v2504, %v2920
    %v2922 = vpop.f32.mrb[0].mxu0
    %2923 = vmatprep.mubr.bf16.mxu0 %v1450
    %2924 = vmatmul.mubr.bf16.gmra.mrb[0].mxu0 %v1449
    %v2925 = vpop.f32.mrb[0].mxu0
    %v2926 = vadd.f32 %v2509, %v2925
    %v2927 = vpop.f32.mrb[0].mxu0
    %v2928 = vpop.f32.mrb[0].mxu0
    %v2929 = vadd.f32 %v2512, %v2928
    %v2930 = vpop.f32.mrb[0].mxu0
    %2931 = vmatprep.mubr.bf16.mxu0 %v1456
    %2932 = vmatmul.mubr.bf16.gmra.mrb[0].mxu0 %v1455
    %v2933 = vpop.f32.mrb[0].mxu0
    %v2934 = vadd.f32 %v2517, %v2933
    %v2935 = vpop.f32.mrb[0].mxu0
    %v2936 = vpop.f32.mrb[0].mxu0
    %v2937 = vadd.f32 %v2520, %v2936
    %v2938 = vpop.f32.mrb[0].mxu0
    %2939 = vmatprep.mubr.bf16.mxu0 %v1462
    %2940 = vmatmul.mubr.bf16.gmra.mrb[0].mxu0 %v1461
    %v2941 = vpop.f32.mrb[0].mxu0
    %v2942 = vadd.f32 %v2525, %v2941
    %v2943 = vpop.f32.mrb[0].mxu0
    %v2944 = vpop.f32.mrb[0].mxu0
    %v2945 = vadd.f32 %v2528, %v2944
    %v2946 = vpop.f32.mrb[0].mxu0
    %2947 = vmatprep.mubr.bf16.mxu0 %v1468
    %2948 = vmatmul.mubr.bf16.gmra.mrb[0].mxu0 %v1467
    %v2949 = vpop.f32.mrb[0].mxu0
    %v2950 = vadd.f32 %v2533, %v2949
    %v2951 = vpop.f32.mrb[0].mxu0
    %v2952 = vpop.f32.mrb[0].mxu0
    %v2953 = vadd.f32 %v2536, %v2952
    %v2954 = vpop.f32.mrb[0].mxu0
    %2955 = vmatprep.mubr.bf16.mxu0 %v1474
    %2956 = vmatmul.mubr.bf16.gmra.mrb[0].mxu0 %v1473
    %v2957 = vpop.f32.mrb[0].mxu0
    %v2958 = vadd.f32 %v2541, %v2957
    %v2959 = vpop.f32.mrb[0].mxu0
    %v2960 = vpop.f32.mrb[0].mxu0
    %v2961 = vadd.f32 %v2544, %v2960
    %v2962 = vpop.f32.mrb[0].mxu0
    %2963 = vmatprep.mubr.bf16.mxu0 %v1480
    %2964 = vmatmul.mubr.bf16.gmra.mrb[0].mxu0 %v1479
    %v2965 = vpop.f32.mrb[0].mxu0
    %v2966 = vadd.f32 %v2549, %v2965
    %v2967 = vpop.f32.mrb[0].mxu0
    %v2968 = vpop.f32.mrb[0].mxu0
    %v2969 = vadd.f32 %v2552, %v2968
    %v2970 = vpop.f32.mrb[0].mxu0
    %2971 = vmatprep.mubr.bf16.mxu0 %v1486
    %2972 = vmatmul.mubr.bf16.gmra.mrb[0].mxu0 %v1485
    %v2973 = vpop.f32.mrb[0].mxu0
    %v2974 = vadd.f32 %v2557, %v2973
    %v2975 = vpop.f32.mrb[0].mxu0
    %v2976 = vpop.f32.mrb[0].mxu0
    %v2977 = vadd.f32 %v2560, %v2976
    %v2978 = vpop.f32.mrb[0].mxu0
    %2979 = vmatprep.mubr.bf16.mxu0 %v1492
    %2980 = vmatmul.mubr.bf16.gmra.mrb[0].mxu0 %v1491
    %v2981 = vpop.f32.mrb[0].mxu0
    %v2982 = vadd.f32 %v2565, %v2981
    %v2983 = vpop.f32.mrb[0].mxu0
    %v2984 = vpop.f32.mrb[0].mxu0
    %v2985 = vadd.f32 %v2568, %v2984
    %v2986 = vpop.f32.mrb[0].mxu0
    %2987 = vmatprep.mubr.bf16.mxu0 %v1498
    %2988 = vmatmul.mubr.bf16.gmra.mrb[0].mxu0 %v1497
    %v2989 = vpop.f32.mrb[0].mxu0
    %v2990 = vadd.f32 %v2573, %v2989
    %v2991 = vpop.f32.mrb[0].mxu0
    %v2992 = vpop.f32.mrb[0].mxu0
    %v2993 = vadd.f32 %v2576, %v2992
    %v2994 = vpop.f32.mrb[0].mxu0
    %2995 = vmatprep.mubr.bf16.mxu0 %v1504
    %2996 = vmatmul.mubr.bf16.gmra.mrb[0].mxu0 %v1503
    %v2997 = vpop.f32.mrb[0].mxu0
    %v2998 = vadd.f32 %v2581, %v2997
    %v2999 = vpop.f32.mrb[0].mxu0
    %v3000 = vpop.f32.mrb[0].mxu0
    %v3001 = vadd.f32 %v2584, %v3000
    %v3002 = vpop.f32.mrb[0].mxu0
    %3003 = vmatprep.mubr.bf16.mxu0 %v1510
    %3004 = vmatmul.mubr.bf16.gmra.mrb[0].mxu0 %v1509
    %v3005 = vpop.f32.mrb[0].mxu0
    %v3006 = vadd.f32 %v2589, %v3005
    %v3007 = vpop.f32.mrb[0].mxu0
    %v3008 = vpop.f32.mrb[0].mxu0
    %v3009 = vadd.f32 %v2592, %v3008
    %v3010 = vpop.f32.mrb[0].mxu0
    %3011 = vmatprep.mubr.bf16.mxu0 %v1516
    %3012 = vmatmul.mubr.bf16.gmra.mrb[0].mxu0 %v1515
    %v3013 = vpop.f32.mrb[0].mxu0
    %v3014 = vadd.f32 %v2597, %v3013
    %v3015 = vpop.f32.mrb[0].mxu0
    %v3016 = vpop.f32.mrb[0].mxu0
    %v3017 = vadd.f32 %v2600, %v3016
    %v3018 = vpop.f32.mrb[0].mxu0
    %3019 = vmatprep.mubr.bf16.mxu0 %v1522
    %3020 = vmatmul.mubr.bf16.gmra.mrb[0].mxu0 %v1521
    %v3021 = vpop.f32.mrb[0].mxu0
    %v3022 = vadd.f32 %v2605, %v3021
    %v3023 = vpop.f32.mrb[0].mxu0
    %v3024 = vpop.f32.mrb[0].mxu0
    %v3025 = vadd.f32 %v2608, %v3024
    %v3026 = vpop.f32.mrb[0].mxu0
    %3027 = vmatprep.mubr.bf16.mxu0 %v1528
    %3028 = vmatmul.mubr.bf16.gmra.mrb[0].mxu0 %v1527
    %v3029 = vpop.f32.mrb[0].mxu0
    %v3030 = vadd.f32 %v2613, %v3029
    %v3031 = vpop.f32.mrb[0].mxu0
    %v3032 = vpop.f32.mrb[0].mxu0
    %v3033 = vadd.f32 %v2616, %v3032
    %v3034 = vpop.f32.mrb[0].mxu0
    %3035 = vmatprep.mubr.bf16.mxu0 %v1534
    %3036 = vmatmul.mubr.bf16.gmra.mrb[0].mxu0 %v1533
    %v3037 = vpop.f32.mrb[0].mxu0
    %v3038 = vadd.f32 %v2621, %v3037
    %v3039 = vpop.f32.mrb[0].mxu0
    %v3040 = vpop.f32.mrb[0].mxu0
    %v3041 = vadd.f32 %v2624, %v3040
    %v3042 = vpop.f32.mrb[0].mxu0
    %3043 = vmatprep.mubr.bf16.mxu0 %v1540
    %3044 = vmatmul.mubr.bf16.gmra.mrb[0].mxu0 %v1539
    %v3045 = vpop.f32.mrb[0].mxu0
    %v3046 = vadd.f32 %v2629, %v3045
    %v3047 = vpop.f32.mrb[0].mxu0
    %v3048 = vpop.f32.mrb[0].mxu0
    %v3049 = vadd.f32 %v2632, %v3048
    %v3050 = vpop.f32.mrb[0].mxu0
    %3051 = vmatprep.mubr.bf16.mxu0 %v1546
    %3052 = vmatmul.mubr.bf16.gmra.mrb[0].mxu0 %v1545
    %v3053 = vpop.f32.mrb[0].mxu0
    %v3054 = vadd.f32 %v2637, %v3053
    %v3055 = vpop.f32.mrb[0].mxu0
    %v3056 = vpop.f32.mrb[0].mxu0
    %v3057 = vadd.f32 %v2640, %v3056
    %v3058 = vpop.f32.mrb[0].mxu0
    %3059 = vmatprep.mubr.bf16.mxu0 %v1552
    %3060 = vmatmul.mubr.bf16.gmra.mrb[0].mxu0 %v1551
    %v3061 = vpop.f32.mrb[0].mxu0
    %v3062 = vadd.f32 %v2645, %v3061
    %v3063 = vpop.f32.mrb[0].mxu0
    %v3064 = vpop.f32.mrb[0].mxu0
    %v3065 = vadd.f32 %v2648, %v3064
    %v3066 = vpop.f32.mrb[0].mxu0
    %3067 = vmatprep.mubr.bf16.mxu0 %v1558
    %3068 = vmatmul.mubr.bf16.gmra.mrb[0].mxu0 %v1557
    %v3069 = vpop.f32.mrb[0].mxu0
    %v3070 = vadd.f32 %v2653, %v3069
    %v3071 = vpop.f32.mrb[0].mxu0
    %v3072 = vpop.f32.mrb[0].mxu0
    %v3073 = vadd.f32 %v2656, %v3072
    %v3074 = vpop.f32.mrb[0].mxu0
    %3075 = vmatprep.mubr.bf16.mxu0 %v1564
    %3076 = vmatmul.mubr.bf16.gmra.mrb[0].mxu0 %v1563
    %v3077 = vpop.f32.mrb[0].mxu0
    %v3078 = vadd.f32 %v2661, %v3077
    %v3079 = vpop.f32.mrb[0].mxu0
    %v3080 = vpop.f32.mrb[0].mxu0
    %v3081 = vadd.f32 %v2664, %v3080
    %v3082 = vpop.f32.mrb[0].mxu0
    %3083 = vmatprep.mubr.bf16.mxu0 %v1570
    %3084 = vmatmul.mubr.bf16.gmra.mrb[0].mxu0 %v1569
    %v3085 = vpop.f32.mrb[0].mxu0
    %v3086 = vadd.f32 %v2669, %v3085
    %v3087 = vpop.f32.mrb[0].mxu0
    %v3088 = vpop.f32.mrb[0].mxu0
    %v3089 = vadd.f32 %v2672, %v3088
    %v3090 = vpop.f32.mrb[0].mxu0
    %3091 = vmatprep.mubr.bf16.mxu0 %v1576
    %3092 = vmatmul.mubr.bf16.gmra.mrb[0].mxu0 %v1575
    %v3093 = vpop.f32.mrb[0].mxu0
    %v3094 = vadd.f32 %v2677, %v3093
    %v3095 = vpop.f32.mrb[0].mxu0
    %v3096 = vpop.f32.mrb[0].mxu0
    %v3097 = vadd.f32 %v2680, %v3096
    %v3098 = vpop.f32.mrb[0].mxu0
    %3099 = vmatprep.mubr.bf16.mxu0 %v1582
    %3100 = vmatmul.mubr.bf16.gmra.mrb[0].mxu0 %v1581
    %v3101 = vpop.f32.mrb[0].mxu0
    %v3102 = vadd.f32 %v2685, %v3101
    %v3103 = vpop.f32.mrb[0].mxu0
    %v3104 = vpop.f32.mrb[0].mxu0
    %v3105 = vadd.f32 %v2688, %v3104
    %v3106 = vpop.f32.mrb[0].mxu0
    %3107 = vmatprep.mubr.bf16.mxu0 %v1588
    %3108 = vmatmul.mubr.bf16.gmra.mrb[0].mxu0 %v1587
    %v3109 = vpop.f32.mrb[0].mxu0
    %v3110 = vadd.f32 %v2693, %v3109
    %v3111 = vpop.f32.mrb[0].mxu0
    %v3112 = vpop.f32.mrb[0].mxu0
    %v3113 = vadd.f32 %v2696, %v3112
    %v3114 = vpop.f32.mrb[0].mxu0
    %3115 = vmatprep.mubr.bf16.mxu0 %v1594
    %3116 = vmatmul.mubr.bf16.gmra.mrb[0].mxu0 %v1593
    %v3117 = vpop.f32.mrb[0].mxu0
    %v3118 = vadd.f32 %v2701, %v3117
    %v3119 = vpop.f32.mrb[0].mxu0
    %v3120 = vpop.f32.mrb[0].mxu0
    %v3121 = vadd.f32 %v2704, %v3120
    %v3122 = vpop.f32.mrb[0].mxu0
    %3123 = vmatprep.mubr.bf16.mxu0 %v1600
    %3124 = vmatmul.mubr.bf16.gmra.mrb[0].mxu0 %v1599
    %v3125 = vpop.f32.mrb[0].mxu0
    %v3126 = vadd.f32 %v2709, %v3125
    %v3127 = vpop.f32.mrb[0].mxu0
    %v3128 = vpop.f32.mrb[0].mxu0
    %v3129 = vadd.f32 %v2712, %v3128
    %v3130 = vpop.f32.mrb[0].mxu0
    %3131 = vmatprep.mubr.bf16.mxu0 %v1606
    %3132 = vmatmul.mubr.bf16.gmra.mrb[0].mxu0 %v1605
    %v3133 = vpop.f32.mrb[0].mxu0
    %v3134 = vadd.f32 %v2717, %v3133
    %v3135 = vpop.f32.mrb[0].mxu0
    %v3136 = vpop.f32.mrb[0].mxu0
    %v3137 = vadd.f32 %v2720, %v3136
    %v3138 = vpop.f32.mrb[0].mxu0
    %3139 = vmatprep.mubr.bf16.mxu0 %v1612
    %3140 = vmatmul.mubr.bf16.gmra.mrb[0].mxu0 %v1611
    %v3141 = vpop.f32.mrb[0].mxu0
    %v3142 = vadd.f32 %v2725, %v3141
    %v3143 = vpop.f32.mrb[0].mxu0
    %v3144 = vpop.f32.mrb[0].mxu0
    %v3145 = vadd.f32 %v2728, %v3144
    %v3146 = vpop.f32.mrb[0].mxu0
    %3147 = vmatprep.mubr.bf16.mxu0 %v1618
    %3148 = vmatmul.mubr.bf16.gmra.mrb[0].mxu0 %v1617
    %v3149 = vpop.f32.mrb[0].mxu0
    %v3150 = vadd.f32 %v2733, %v3149
    %v3151 = vpop.f32.mrb[0].mxu0
    %v3152 = vpop.f32.mrb[0].mxu0
    %v3153 = vadd.f32 %v2736, %v3152
    %v3154 = vpop.f32.mrb[0].mxu0
    %3155 = vmatprep.mubr.bf16.mxu0 %v1624
    %3156 = vmatmul.mubr.bf16.gmra.mrb[0].mxu0 %v1623
    %v3157 = vpop.f32.mrb[0].mxu0
    %v3158 = vadd.f32 %v2741, %v3157
    %v3159 = vpop.f32.mrb[0].mxu0
    %v3160 = vpop.f32.mrb[0].mxu0
    %v3161 = vadd.f32 %v2744, %v3160
    %v3162 = vpop.f32.mrb[0].mxu0
    %3163 = vdwg.mxu0
    %v3164 = vadd.f32 %v329, %v2782
    %v3165 = vadd.f32 %v330, %v2785
    %v3166 = vadd.f32 %v331, %v2790
    %v3167 = vadd.f32 %v332, %v2793
    %v3168 = vadd.f32 %v333, %v2798
    %v3169 = vadd.f32 %v334, %v2801
    %v3170 = vadd.f32 %v335, %v2806
    %v3171 = vadd.f32 %v336, %v2809
    %v3172 = vadd.f32 %v337, %v2814
    %v3173 = vadd.f32 %v338, %v2817
    %v3174 = vadd.f32 %v339, %v2822
    %v3175 = vadd.f32 %v340, %v2825
    %v3176 = vadd.f32 %v341, %v2830
    %v3177 = vadd.f32 %v342, %v2833
    %v3178 = vadd.f32 %v343, %v2838
    %v3179 = vadd.f32 %v344, %v2841
    %v3180 = vadd.f32 %v345, %v2846
    %v3181 = vadd.f32 %v346, %v2849
    %v3182 = vadd.f32 %v347, %v2854
    %v3183 = vadd.f32 %v348, %v2857
    %v3184 = vadd.f32 %v349, %v2862
    %v3185 = vadd.f32 %v350, %v2865
    %v3186 = vadd.f32 %v351, %v2870
    %v3187 = vadd.f32 %v352, %v2873
    %v3188 = vadd.f32 %v353, %v2878
    %v3189 = vadd.f32 %v354, %v2881
    %v3190 = vadd.f32 %v355, %v2886
    %v3191 = vadd.f32 %v356, %v2889
    %v3192 = vadd.f32 %v357, %v2894
    %v3193 = vadd.f32 %v358, %v2897
    %v3194 = vadd.f32 %v359, %v2902
    %v3195 = vadd.f32 %v360, %v2905
    %v3196 = vadd.f32 %v361, %v2910
    %v3197 = vadd.f32 %v362, %v2913
    %v3198 = vadd.f32 %v363, %v2918
    %v3199 = vadd.f32 %v364, %v2921
    %v3200 = vadd.f32 %v365, %v2926
    %v3201 = vadd.f32 %v366, %v2929
    %v3202 = vadd.f32 %v367, %v2934
    %v3203 = vadd.f32 %v368, %v2937
    %v3204 = vadd.f32 %v369, %v2942
    %v3205 = vadd.f32 %v370, %v2945
    %v3206 = vadd.f32 %v371, %v2950
    %v3207 = vadd.f32 %v372, %v2953
    %v3208 = vadd.f32 %v373, %v2958
    %v3209 = vadd.f32 %v374, %v2961
    %v3210 = vadd.f32 %v375, %v2966
    %v3211 = vadd.f32 %v376, %v2969
    %v3212 = vadd.f32 %v377, %v2974
    %v3213 = vadd.f32 %v378, %v2977
    %v3214 = vadd.f32 %v379, %v2982
    %v3215 = vadd.f32 %v380, %v2985
    %v3216 = vadd.f32 %v381, %v2990
    %v3217 = vadd.f32 %v382, %v2993
    %v3218 = vadd.f32 %v383, %v2998
    %v3219 = vadd.f32 %v384, %v3001
    %v3220 = vadd.f32 %v385, %v3006
    %v3221 = vadd.f32 %v386, %v3009
    %v3222 = vadd.f32 %v387, %v3014
    %v3223 = vadd.f32 %v388, %v3017
    %v3224 = vadd.f32 %v389, %v3022
    %v3225 = vadd.f32 %v390, %v3025
    %v3226 = vadd.f32 %v391, %v3030
    %v3227 = vadd.f32 %v392, %v3033
    %v3228 = vadd.f32 %v393, %v3038
    %v3229 = vadd.f32 %v394, %v3041
    %v3230 = vadd.f32 %v395, %v3046
    %v3231 = vadd.f32 %v396, %v3049
    %v3232 = vadd.f32 %v397, %v3054
    %v3233 = vadd.f32 %v398, %v3057
    %v3234 = vadd.f32 %v399, %v3062
    %v3235 = vadd.f32 %v400, %v3065
    %v3236 = vadd.f32 %v401, %v3070
    %v3237 = vadd.f32 %v402, %v3073
    %v3238 = vadd.f32 %v403, %v3078
    %v3239 = vadd.f32 %v404, %v3081
    %v3240 = vadd.f32 %v405, %v3086
    %v3241 = vadd.f32 %v406, %v3089
    %v3242 = vadd.f32 %v407, %v3094
    %v3243 = vadd.f32 %v408, %v3097
    %v3244 = vadd.f32 %v409, %v3102
    %v3245 = vadd.f32 %v410, %v3105
    %v3246 = vadd.f32 %v411, %v3110
    %v3247 = vadd.f32 %v412, %v3113
    %v3248 = vadd.f32 %v413, %v3118
    %v3249 = vadd.f32 %v414, %v3121
    %v3250 = vadd.f32 %v415, %v3126
    %v3251 = vadd.f32 %v416, %v3129
    %v3252 = vadd.f32 %v417, %v3134
    %v3253 = vadd.f32 %v418, %v3137
    %v3254 = vadd.f32 %v419, %v3142
    %v3255 = vadd.f32 %v420, %v3145
    %v3256 = vadd.f32 %v421, %v3150
    %v3257 = vadd.f32 %v422, %v3153
    %v3258 = vadd.f32 %v423, %v3158
    %v3259 = vadd.f32 %v424, %v3161
    %v3260 = vpack.c.bf16 %v2785, %v2782
    %v3261 = vpack.c.bf16 %v2793, %v2790
    %v3262 = vpack.c.bf16 %v2801, %v2798
    %v3263 = vpack.c.bf16 %v2809, %v2806
    %v3264 = vpack.c.bf16 %v2817, %v2814
    %v3265 = vpack.c.bf16 %v2825, %v2822
    %v3266 = vpack.c.bf16 %v2833, %v2830
    %v3267 = vpack.c.bf16 %v2841, %v2838
    %v3268 = vpack.c.bf16 %v2849, %v2846
    %v3269 = vpack.c.bf16 %v2857, %v2854
    %v3270 = vpack.c.bf16 %v2865, %v2862
    %v3271 = vpack.c.bf16 %v2873, %v2870
    %v3272 = vpack.c.bf16 %v2881, %v2878
    %v3273 = vpack.c.bf16 %v2889, %v2886
    %v3274 = vpack.c.bf16 %v2897, %v2894
    %v3275 = vpack.c.bf16 %v2905, %v2902
    %v3276 = vpack.c.bf16 %v2913, %v2910
    %v3277 = vpack.c.bf16 %v2921, %v2918
    %v3278 = vpack.c.bf16 %v2929, %v2926
    %v3279 = vpack.c.bf16 %v2937, %v2934
    %v3280 = vpack.c.bf16 %v2945, %v2942
    %v3281 = vpack.c.bf16 %v2953, %v2950
    %v3282 = vpack.c.bf16 %v2961, %v2958
    %v3283 = vpack.c.bf16 %v2969, %v2966
    %v3284 = vpack.c.bf16 %v2977, %v2974
    %v3285 = vpack.c.bf16 %v2985, %v2982
    %v3286 = vpack.c.bf16 %v2993, %v2990
    %v3287 = vpack.c.bf16 %v3001, %v2998
    %v3288 = vpack.c.bf16 %v3009, %v3006
    %v3289 = vpack.c.bf16 %v3017, %v3014
    %v3290 = vpack.c.bf16 %v3025, %v3022
    %v3291 = vpack.c.bf16 %v3033, %v3030
    %v3292 = vpack.c.bf16 %v3041, %v3038
    %v3293 = vpack.c.bf16 %v3049, %v3046
    %v3294 = vpack.c.bf16 %v3057, %v3054
    %v3295 = vpack.c.bf16 %v3065, %v3062
    %v3296 = vpack.c.bf16 %v3073, %v3070
    %v3297 = vpack.c.bf16 %v3081, %v3078
    %v3298 = vpack.c.bf16 %v3089, %v3086
    %v3299 = vpack.c.bf16 %v3097, %v3094
    %v3300 = vpack.c.bf16 %v3105, %v3102
    %v3301 = vpack.c.bf16 %v3113, %v3110
    %v3302 = vpack.c.bf16 %v3121, %v3118
    %v3303 = vpack.c.bf16 %v3129, %v3126
    %v3304 = vpack.c.bf16 %v3137, %v3134
    %v3305 = vpack.c.bf16 %v3145, %v3142
    %v3306 = vpack.c.bf16 %v3153, %v3150
    %v3307 = vpack.c.bf16 %v3161, %v3158
    %3308 = vmatprep.subr.bf16.mxu0 0
    %3309 = vmatpush1.bf16.msra.mxu0 %v3260
    %3310 = vmatprep.subr.bf16.mxu0 0
    %3311 = vmatpush1.bf16.msra.mxu0 %v3261
    %3312 = vmatprep.subr.bf16.mxu0 0
    %3313 = vmatpush1.bf16.msra.mxu0 %v3262
    %3314 = vmatprep.subr.bf16.mxu0 0
    %3315 = vmatpush1.bf16.msra.mxu0 %v3263
    %3316 = vmatprep.subr.bf16.mxu0 0
    %3317 = vmatpush1.bf16.msra.mxu0 %v3264
    %3318 = vmatprep.subr.bf16.mxu0 0
    %3319 = vmatpush1.bf16.msra.mxu0 %v3265
    %3320 = vmatprep.subr.bf16.mxu0 0
    %3321 = vmatpush1.bf16.msra.mxu0 %v3266
    %3322 = vmatprep.subr.bf16.mxu0 0
    %3323 = vmatpush1.bf16.msra.mxu0 %v3267
    %3324 = vmatprep.subr.bf16.mxu0 0
    %3325 = vmatpush1.bf16.msra.mxu0 %v3268
    %3326 = vmatprep.subr.bf16.mxu0 0
    %3327 = vmatpush1.bf16.msra.mxu0 %v3269
    %3328 = vmatprep.subr.bf16.mxu0 0
    %3329 = vmatpush1.bf16.msra.mxu0 %v3270
    %3330 = vmatprep.subr.bf16.mxu0 0
    %3331 = vmatpush1.bf16.msra.mxu0 %v3271
    %3332 = vmatprep.subr.bf16.mxu0 0
    %3333 = vmatpush1.bf16.msra.mxu0 %v3272
    %3334 = vmatprep.subr.bf16.mxu0 0
    %3335 = vmatpush1.bf16.msra.mxu0 %v3273
    %3336 = vmatprep.subr.bf16.mxu0 0
    %3337 = vmatpush1.bf16.msra.mxu0 %v3274
    %3338 = vmatprep.subr.bf16.mxu0 0
    %3339 = vmatpush1.bf16.msra.mxu0 %v3275
    %3340 = vmatprep.mubr.bf16.mxu0 %v1338
    %3341 = vmatmul.mubr.bf16.gmra.mrb[0].mxu0 %v1337
    %v3342 = vpop.f32.mrb[0].mxu0
    %v3343 = vadd.f32 0.0, %v3342
    %v3344 = vpop.f32.mrb[0].mxu0
    %v3345 = vpop.f32.mrb[0].mxu0
    %v3346 = vadd.f32 0.0, %v3345
    %v3347 = vpop.f32.mrb[0].mxu0
    %3348 = vmatprep.mubr.bf16.mxu0 %v1344
    %3349 = vmatmul.mubr.bf16.gmra.mrb[0].mxu0 %v1343
    %v3350 = vpop.f32.mrb[0].mxu0
    %v3351 = vadd.f32 0.0, %v3350
    %v3352 = vpop.f32.mrb[0].mxu0
    %v3353 = vpop.f32.mrb[0].mxu0
    %v3354 = vadd.f32 0.0, %v3353
    %v3355 = vpop.f32.mrb[0].mxu0
    %3356 = vmatprep.mubr.bf16.mxu0 %v1350
    %3357 = vmatmul.mubr.bf16.gmra.mrb[0].mxu0 %v1349
    %v3358 = vpop.f32.mrb[0].mxu0
    %v3359 = vadd.f32 0.0, %v3358
    %v3360 = vpop.f32.mrb[0].mxu0
    %v3361 = vpop.f32.mrb[0].mxu0
    %v3362 = vadd.f32 0.0, %v3361
    %v3363 = vpop.f32.mrb[0].mxu0
    %3364 = vmatprep.mubr.bf16.mxu0 %v1356
    %3365 = vmatmul.mubr.bf16.gmra.mrb[0].mxu0 %v1355
    %v3366 = vpop.f32.mrb[0].mxu0
    %v3367 = vadd.f32 0.0, %v3366
    %v3368 = vpop.f32.mrb[0].mxu0
    %v3369 = vpop.f32.mrb[0].mxu0
    %v3370 = vadd.f32 0.0, %v3369
    %v3371 = vpop.f32.mrb[0].mxu0
    %3372 = vmatprep.mubr.bf16.mxu0 %v1362
    %3373 = vmatmul.mubr.bf16.gmra.mrb[0].mxu0 %v1361
    %v3374 = vpop.f32.mrb[0].mxu0
    %v3375 = vadd.f32 0.0, %v3374
    %v3376 = vpop.f32.mrb[0].mxu0
    %v3377 = vpop.f32.mrb[0].mxu0
    %v3378 = vadd.f32 0.0, %v3377
    %v3379 = vpop.f32.mrb[0].mxu0
    %3380 = vmatprep.mubr.bf16.mxu0 %v1368
    %3381 = vmatmul.mubr.bf16.gmra.mrb[0].mxu0 %v1367
    %v3382 = vpop.f32.mrb[0].mxu0
    %v3383 = vadd.f32 0.0, %v3382
    %v3384 = vpop.f32.mrb[0].mxu0
    %v3385 = vpop.f32.mrb[0].mxu0
    %v3386 = vadd.f32 0.0, %v3385
    %v3387 = vpop.f32.mrb[0].mxu0
    %3388 = vmatprep.mubr.bf16.mxu0 %v1374
    %3389 = vmatmul.mubr.bf16.gmra.mrb[0].mxu0 %v1373
    %v3390 = vpop.f32.mrb[0].mxu0
    %v3391 = vadd.f32 0.0, %v3390
    %v3392 = vpop.f32.mrb[0].mxu0
    %v3393 = vpop.f32.mrb[0].mxu0
    %v3394 = vadd.f32 0.0, %v3393
    %v3395 = vpop.f32.mrb[0].mxu0
    %3396 = vmatprep.mubr.bf16.mxu0 %v1380
    %3397 = vmatmul.mubr.bf16.gmra.mrb[0].mxu0 %v1379
    %v3398 = vpop.f32.mrb[0].mxu0
    %v3399 = vadd.f32 0.0, %v3398
    %v3400 = vpop.f32.mrb[0].mxu0
    %v3401 = vpop.f32.mrb[0].mxu0
    %v3402 = vadd.f32 0.0, %v3401
    %v3403 = vpop.f32.mrb[0].mxu0
    %3404 = vmatprep.mubr.bf16.mxu0 %v1386
    %3405 = vmatmul.mubr.bf16.gmra.mrb[0].mxu0 %v1385
    %v3406 = vpop.f32.mrb[0].mxu0
    %v3407 = vadd.f32 0.0, %v3406
    %v3408 = vpop.f32.mrb[0].mxu0
    %v3409 = vpop.f32.mrb[0].mxu0
    %v3410 = vadd.f32 0.0, %v3409
    %v3411 = vpop.f32.mrb[0].mxu0
    %3412 = vmatprep.mubr.bf16.mxu0 %v1392
    %3413 = vmatmul.mubr.bf16.gmra.mrb[0].mxu0 %v1391
    %v3414 = vpop.f32.mrb[0].mxu0
    %v3415 = vadd.f32 0.0, %v3414
    %v3416 = vpop.f32.mrb[0].mxu0
    %v3417 = vpop.f32.mrb[0].mxu0
    %v3418 = vadd.f32 0.0, %v3417
    %v3419 = vpop.f32.mrb[0].mxu0
    %3420 = vmatprep.mubr.bf16.mxu0 %v1398
    %3421 = vmatmul.mubr.bf16.gmra.mrb[0].mxu0 %v1397
    %v3422 = vpop.f32.mrb[0].mxu0
    %v3423 = vadd.f32 0.0, %v3422
    %v3424 = vpop.f32.mrb[0].mxu0
    %v3425 = vpop.f32.mrb[0].mxu0
    %v3426 = vadd.f32 0.0, %v3425
    %v3427 = vpop.f32.mrb[0].mxu0
    %3428 = vmatprep.mubr.bf16.mxu0 %v1404
    %3429 = vmatmul.mubr.bf16.gmra.mrb[0].mxu0 %v1403
    %v3430 = vpop.f32.mrb[0].mxu0
    %v3431 = vadd.f32 0.0, %v3430
    %v3432 = vpop.f32.mrb[0].mxu0
    %v3433 = vpop.f32.mrb[0].mxu0
    %v3434 = vadd.f32 0.0, %v3433
    %v3435 = vpop.f32.mrb[0].mxu0
    %3436 = vmatprep.mubr.bf16.mxu0 %v1410
    %3437 = vmatmul.mubr.bf16.gmra.mrb[0].mxu0 %v1409
    %v3438 = vpop.f32.mrb[0].mxu0
    %v3439 = vadd.f32 0.0, %v3438
    %v3440 = vpop.f32.mrb[0].mxu0
    %v3441 = vpop.f32.mrb[0].mxu0
    %v3442 = vadd.f32 0.0, %v3441
    %v3443 = vpop.f32.mrb[0].mxu0
    %3444 = vmatprep.mubr.bf16.mxu0 %v1416
    %3445 = vmatmul.mubr.bf16.gmra.mrb[0].mxu0 %v1415
    %v3446 = vpop.f32.mrb[0].mxu0
    %v3447 = vadd.f32 0.0, %v3446
    %v3448 = vpop.f32.mrb[0].mxu0
    %v3449 = vpop.f32.mrb[0].mxu0
    %v3450 = vadd.f32 0.0, %v3449
    %v3451 = vpop.f32.mrb[0].mxu0
    %3452 = vmatprep.mubr.bf16.mxu0 %v1422
    %3453 = vmatmul.mubr.bf16.gmra.mrb[0].mxu0 %v1421
    %v3454 = vpop.f32.mrb[0].mxu0
    %v3455 = vadd.f32 0.0, %v3454
    %v3456 = vpop.f32.mrb[0].mxu0
    %v3457 = vpop.f32.mrb[0].mxu0
    %v3458 = vadd.f32 0.0, %v3457
    %v3459 = vpop.f32.mrb[0].mxu0
    %3460 = vmatprep.mubr.bf16.mxu0 %v1428
    %3461 = vmatmul.mubr.bf16.gmra.mrb[0].mxu0 %v1427
    %v3462 = vpop.f32.mrb[0].mxu0
    %v3463 = vadd.f32 0.0, %v3462
    %v3464 = vpop.f32.mrb[0].mxu0
    %v3465 = vpop.f32.mrb[0].mxu0
    %v3466 = vadd.f32 0.0, %v3465
    %v3467 = vpop.f32.mrb[0].mxu0
    %3468 = vmatprep.mubr.bf16.mxu0 %v1434
    %3469 = vmatmul.mubr.bf16.gmra.mrb[0].mxu0 %v1433
    %v3470 = vpop.f32.mrb[0].mxu0
    %v3471 = vadd.f32 0.0, %v3470
    %v3472 = vpop.f32.mrb[0].mxu0
    %v3473 = vpop.f32.mrb[0].mxu0
    %v3474 = vadd.f32 0.0, %v3473
    %v3475 = vpop.f32.mrb[0].mxu0
    %3476 = vmatprep.mubr.bf16.mxu0 %v1440
    %3477 = vmatmul.mubr.bf16.gmra.mrb[0].mxu0 %v1439
    %v3478 = vpop.f32.mrb[0].mxu0
    %v3479 = vadd.f32 0.0, %v3478
    %v3480 = vpop.f32.mrb[0].mxu0
    %v3481 = vpop.f32.mrb[0].mxu0
    %v3482 = vadd.f32 0.0, %v3481
    %v3483 = vpop.f32.mrb[0].mxu0
    %3484 = vmatprep.mubr.bf16.mxu0 %v1446
    %3485 = vmatmul.mubr.bf16.gmra.mrb[0].mxu0 %v1445
    %v3486 = vpop.f32.mrb[0].mxu0
    %v3487 = vadd.f32 0.0, %v3486
    %v3488 = vpop.f32.mrb[0].mxu0
    %v3489 = vpop.f32.mrb[0].mxu0
    %v3490 = vadd.f32 0.0, %v3489
    %v3491 = vpop.f32.mrb[0].mxu0
    %3492 = vmatprep.mubr.bf16.mxu0 %v1452
    %3493 = vmatmul.mubr.bf16.gmra.mrb[0].mxu0 %v1451
    %v3494 = vpop.f32.mrb[0].mxu0
    %v3495 = vadd.f32 0.0, %v3494
    %v3496 = vpop.f32.mrb[0].mxu0
    %v3497 = vpop.f32.mrb[0].mxu0
    %v3498 = vadd.f32 0.0, %v3497
    %v3499 = vpop.f32.mrb[0].mxu0
    %3500 = vmatprep.mubr.bf16.mxu0 %v1458
    %3501 = vmatmul.mubr.bf16.gmra.mrb[0].mxu0 %v1457
    %v3502 = vpop.f32.mrb[0].mxu0
    %v3503 = vadd.f32 0.0, %v3502
    %v3504 = vpop.f32.mrb[0].mxu0
    %v3505 = vpop.f32.mrb[0].mxu0
    %v3506 = vadd.f32 0.0, %v3505
    %v3507 = vpop.f32.mrb[0].mxu0
    %3508 = vmatprep.mubr.bf16.mxu0 %v1464
    %3509 = vmatmul.mubr.bf16.gmra.mrb[0].mxu0 %v1463
    %v3510 = vpop.f32.mrb[0].mxu0
    %v3511 = vadd.f32 0.0, %v3510
    %v3512 = vpop.f32.mrb[0].mxu0
    %v3513 = vpop.f32.mrb[0].mxu0
    %v3514 = vadd.f32 0.0, %v3513
    %v3515 = vpop.f32.mrb[0].mxu0
    %3516 = vmatprep.mubr.bf16.mxu0 %v1470
    %3517 = vmatmul.mubr.bf16.gmra.mrb[0].mxu0 %v1469
    %v3518 = vpop.f32.mrb[0].mxu0
    %v3519 = vadd.f32 0.0, %v3518
    %v3520 = vpop.f32.mrb[0].mxu0
    %v3521 = vpop.f32.mrb[0].mxu0
    %v3522 = vadd.f32 0.0, %v3521
    %v3523 = vpop.f32.mrb[0].mxu0
    %3524 = vmatprep.mubr.bf16.mxu0 %v1476
    %3525 = vmatmul.mubr.bf16.gmra.mrb[0].mxu0 %v1475
    %v3526 = vpop.f32.mrb[0].mxu0
    %v3527 = vadd.f32 0.0, %v3526
    %v3528 = vpop.f32.mrb[0].mxu0
    %v3529 = vpop.f32.mrb[0].mxu0
    %v3530 = vadd.f32 0.0, %v3529
    %v3531 = vpop.f32.mrb[0].mxu0
    %3532 = vmatprep.mubr.bf16.mxu0 %v1482
    %3533 = vmatmul.mubr.bf16.gmra.mrb[0].mxu0 %v1481
    %v3534 = vpop.f32.mrb[0].mxu0
    %v3535 = vadd.f32 0.0, %v3534
    %v3536 = vpop.f32.mrb[0].mxu0
    %v3537 = vpop.f32.mrb[0].mxu0
    %v3538 = vadd.f32 0.0, %v3537
    %v3539 = vpop.f32.mrb[0].mxu0
    %3540 = vmatprep.mubr.bf16.mxu0 %v1488
    %3541 = vmatmul.mubr.bf16.gmra.mrb[0].mxu0 %v1487
    %v3542 = vpop.f32.mrb[0].mxu0
    %v3543 = vadd.f32 0.0, %v3542
    %v3544 = vpop.f32.mrb[0].mxu0
    %v3545 = vpop.f32.mrb[0].mxu0
    %v3546 = vadd.f32 0.0, %v3545
    %v3547 = vpop.f32.mrb[0].mxu0
    %3548 = vmatprep.mubr.bf16.mxu0 %v1494
    %3549 = vmatmul.mubr.bf16.gmra.mrb[0].mxu0 %v1493
    %v3550 = vpop.f32.mrb[0].mxu0
    %v3551 = vadd.f32 0.0, %v3550
    %v3552 = vpop.f32.mrb[0].mxu0
    %v3553 = vpop.f32.mrb[0].mxu0
    %v3554 = vadd.f32 0.0, %v3553
    %v3555 = vpop.f32.mrb[0].mxu0
    %3556 = vmatprep.mubr.bf16.mxu0 %v1500
    %3557 = vmatmul.mubr.bf16.gmra.mrb[0].mxu0 %v1499
    %v3558 = vpop.f32.mrb[0].mxu0
    %v3559 = vadd.f32 0.0, %v3558
    %v3560 = vpop.f32.mrb[0].mxu0
    %v3561 = vpop.f32.mrb[0].mxu0
    %v3562 = vadd.f32 0.0, %v3561
    %v3563 = vpop.f32.mrb[0].mxu0
    %3564 = vmatprep.mubr.bf16.mxu0 %v1506
    %3565 = vmatmul.mubr.bf16.gmra.mrb[0].mxu0 %v1505
    %v3566 = vpop.f32.mrb[0].mxu0
    %v3567 = vadd.f32 0.0, %v3566
    %v3568 = vpop.f32.mrb[0].mxu0
    %v3569 = vpop.f32.mrb[0].mxu0
    %v3570 = vadd.f32 0.0, %v3569
    %v3571 = vpop.f32.mrb[0].mxu0
    %3572 = vmatprep.mubr.bf16.mxu0 %v1512
    %3573 = vmatmul.mubr.bf16.gmra.mrb[0].mxu0 %v1511
    %v3574 = vpop.f32.mrb[0].mxu0
    %v3575 = vadd.f32 0.0, %v3574
    %v3576 = vpop.f32.mrb[0].mxu0
    %v3577 = vpop.f32.mrb[0].mxu0
    %v3578 = vadd.f32 0.0, %v3577
    %v3579 = vpop.f32.mrb[0].mxu0
    %3580 = vmatprep.mubr.bf16.mxu0 %v1518
    %3581 = vmatmul.mubr.bf16.gmra.mrb[0].mxu0 %v1517
    %v3582 = vpop.f32.mrb[0].mxu0
    %v3583 = vadd.f32 0.0, %v3582
    %v3584 = vpop.f32.mrb[0].mxu0
    %v3585 = vpop.f32.mrb[0].mxu0
    %v3586 = vadd.f32 0.0, %v3585
    %v3587 = vpop.f32.mrb[0].mxu0
    %3588 = vmatprep.mubr.bf16.mxu0 %v1524
    %3589 = vmatmul.mubr.bf16.gmra.mrb[0].mxu0 %v1523
    %v3590 = vpop.f32.mrb[0].mxu0
    %v3591 = vadd.f32 0.0, %v3590
    %v3592 = vpop.f32.mrb[0].mxu0
    %v3593 = vpop.f32.mrb[0].mxu0
    %v3594 = vadd.f32 0.0, %v3593
    %v3595 = vpop.f32.mrb[0].mxu0
    %3596 = vmatprep.mubr.bf16.mxu0 %v1530
    %3597 = vmatmul.mubr.bf16.gmra.mrb[0].mxu0 %v1529
    %v3598 = vpop.f32.mrb[0].mxu0
    %v3599 = vadd.f32 0.0, %v3598
    %v3600 = vpop.f32.mrb[0].mxu0
    %v3601 = vpop.f32.mrb[0].mxu0
    %v3602 = vadd.f32 0.0, %v3601
    %v3603 = vpop.f32.mrb[0].mxu0
    %3604 = vmatprep.mubr.bf16.mxu0 %v1536
    %3605 = vmatmul.mubr.bf16.gmra.mrb[0].mxu0 %v1535
    %v3606 = vpop.f32.mrb[0].mxu0
    %v3607 = vadd.f32 0.0, %v3606
    %v3608 = vpop.f32.mrb[0].mxu0
    %v3609 = vpop.f32.mrb[0].mxu0
    %v3610 = vadd.f32 0.0, %v3609
    %v3611 = vpop.f32.mrb[0].mxu0
    %3612 = vmatprep.mubr.bf16.mxu0 %v1542
    %3613 = vmatmul.mubr.bf16.gmra.mrb[0].mxu0 %v1541
    %v3614 = vpop.f32.mrb[0].mxu0
    %v3615 = vadd.f32 0.0, %v3614
    %v3616 = vpop.f32.mrb[0].mxu0
    %v3617 = vpop.f32.mrb[0].mxu0
    %v3618 = vadd.f32 0.0, %v3617
    %v3619 = vpop.f32.mrb[0].mxu0
    %3620 = vmatprep.mubr.bf16.mxu0 %v1548
    %3621 = vmatmul.mubr.bf16.gmra.mrb[0].mxu0 %v1547
    %v3622 = vpop.f32.mrb[0].mxu0
    %v3623 = vadd.f32 0.0, %v3622
    %v3624 = vpop.f32.mrb[0].mxu0
    %v3625 = vpop.f32.mrb[0].mxu0
    %v3626 = vadd.f32 0.0, %v3625
    %v3627 = vpop.f32.mrb[0].mxu0
    %3628 = vmatprep.mubr.bf16.mxu0 %v1554
    %3629 = vmatmul.mubr.bf16.gmra.mrb[0].mxu0 %v1553
    %v3630 = vpop.f32.mrb[0].mxu0
    %v3631 = vadd.f32 0.0, %v3630
    %v3632 = vpop.f32.mrb[0].mxu0
    %v3633 = vpop.f32.mrb[0].mxu0
    %v3634 = vadd.f32 0.0, %v3633
    %v3635 = vpop.f32.mrb[0].mxu0
    %3636 = vmatprep.mubr.bf16.mxu0 %v1560
    %3637 = vmatmul.mubr.bf16.gmra.mrb[0].mxu0 %v1559
    %v3638 = vpop.f32.mrb[0].mxu0
    %v3639 = vadd.f32 0.0, %v3638
    %v3640 = vpop.f32.mrb[0].mxu0
    %v3641 = vpop.f32.mrb[0].mxu0
    %v3642 = vadd.f32 0.0, %v3641
    %v3643 = vpop.f32.mrb[0].mxu0
    %3644 = vmatprep.mubr.bf16.mxu0 %v1566
    %3645 = vmatmul.mubr.bf16.gmra.mrb[0].mxu0 %v1565
    %v3646 = vpop.f32.mrb[0].mxu0
    %v3647 = vadd.f32 0.0, %v3646
    %v3648 = vpop.f32.mrb[0].mxu0
    %v3649 = vpop.f32.mrb[0].mxu0
    %v3650 = vadd.f32 0.0, %v3649
    %v3651 = vpop.f32.mrb[0].mxu0
    %3652 = vmatprep.mubr.bf16.mxu0 %v1572
    %3653 = vmatmul.mubr.bf16.gmra.mrb[0].mxu0 %v1571
    %v3654 = vpop.f32.mrb[0].mxu0
    %v3655 = vadd.f32 0.0, %v3654
    %v3656 = vpop.f32.mrb[0].mxu0
    %v3657 = vpop.f32.mrb[0].mxu0
    %v3658 = vadd.f32 0.0, %v3657
    %v3659 = vpop.f32.mrb[0].mxu0
    %3660 = vmatprep.mubr.bf16.mxu0 %v1578
    %3661 = vmatmul.mubr.bf16.gmra.mrb[0].mxu0 %v1577
    %v3662 = vpop.f32.mrb[0].mxu0
    %v3663 = vadd.f32 0.0, %v3662
    %v3664 = vpop.f32.mrb[0].mxu0
    %v3665 = vpop.f32.mrb[0].mxu0
    %v3666 = vadd.f32 0.0, %v3665
    %v3667 = vpop.f32.mrb[0].mxu0
    %3668 = vmatprep.mubr.bf16.mxu0 %v1584
    %3669 = vmatmul.mubr.bf16.gmra.mrb[0].mxu0 %v1583
    %v3670 = vpop.f32.mrb[0].mxu0
    %v3671 = vadd.f32 0.0, %v3670
    %v3672 = vpop.f32.mrb[0].mxu0
    %v3673 = vpop.f32.mrb[0].mxu0
    %v3674 = vadd.f32 0.0, %v3673
    %v3675 = vpop.f32.mrb[0].mxu0
    %3676 = vmatprep.mubr.bf16.mxu0 %v1590
    %3677 = vmatmul.mubr.bf16.gmra.mrb[0].mxu0 %v1589
    %v3678 = vpop.f32.mrb[0].mxu0
    %v3679 = vadd.f32 0.0, %v3678
    %v3680 = vpop.f32.mrb[0].mxu0
    %v3681 = vpop.f32.mrb[0].mxu0
    %v3682 = vadd.f32 0.0, %v3681
    %v3683 = vpop.f32.mrb[0].mxu0
    %3684 = vmatprep.mubr.bf16.mxu0 %v1596
    %3685 = vmatmul.mubr.bf16.gmra.mrb[0].mxu0 %v1595
    %v3686 = vpop.f32.mrb[0].mxu0
    %v3687 = vadd.f32 0.0, %v3686
    %v3688 = vpop.f32.mrb[0].mxu0
    %v3689 = vpop.f32.mrb[0].mxu0
    %v3690 = vadd.f32 0.0, %v3689
    %v3691 = vpop.f32.mrb[0].mxu0
    %3692 = vmatprep.mubr.bf16.mxu0 %v1602
    %3693 = vmatmul.mubr.bf16.gmra.mrb[0].mxu0 %v1601
    %v3694 = vpop.f32.mrb[0].mxu0
    %v3695 = vadd.f32 0.0, %v3694
    %v3696 = vpop.f32.mrb[0].mxu0
    %v3697 = vpop.f32.mrb[0].mxu0
    %v3698 = vadd.f32 0.0, %v3697
    %v3699 = vpop.f32.mrb[0].mxu0
    %3700 = vmatprep.mubr.bf16.mxu0 %v1608
    %3701 = vmatmul.mubr.bf16.gmra.mrb[0].mxu0 %v1607
    %v3702 = vpop.f32.mrb[0].mxu0
    %v3703 = vadd.f32 0.0, %v3702
    %v3704 = vpop.f32.mrb[0].mxu0
    %v3705 = vpop.f32.mrb[0].mxu0
    %v3706 = vadd.f32 0.0, %v3705
    %v3707 = vpop.f32.mrb[0].mxu0
    %3708 = vmatprep.mubr.bf16.mxu0 %v1614
    %3709 = vmatmul.mubr.bf16.gmra.mrb[0].mxu0 %v1613
    %v3710 = vpop.f32.mrb[0].mxu0
    %v3711 = vadd.f32 0.0, %v3710
    %v3712 = vpop.f32.mrb[0].mxu0
    %v3713 = vpop.f32.mrb[0].mxu0
    %v3714 = vadd.f32 0.0, %v3713
    %v3715 = vpop.f32.mrb[0].mxu0
    %3716 = vmatprep.mubr.bf16.mxu0 %v1620
    %3717 = vmatmul.mubr.bf16.gmra.mrb[0].mxu0 %v1619
    %v3718 = vpop.f32.mrb[0].mxu0
    %v3719 = vadd.f32 0.0, %v3718
    %v3720 = vpop.f32.mrb[0].mxu0
    %v3721 = vpop.f32.mrb[0].mxu0
    %v3722 = vadd.f32 0.0, %v3721
    %v3723 = vpop.f32.mrb[0].mxu0
    %3724 = vdwg.mxu0
    %3725 = vmatprep.subr.bf16.mxu0 0
    %3726 = vmatpush1.bf16.msra.mxu0 %v3276
    %3727 = vmatprep.subr.bf16.mxu0 0
    %3728 = vmatpush1.bf16.msra.mxu0 %v3277
    %3729 = vmatprep.subr.bf16.mxu0 0
    %3730 = vmatpush1.bf16.msra.mxu0 %v3278
    %3731 = vmatprep.subr.bf16.mxu0 0
    %3732 = vmatpush1.bf16.msra.mxu0 %v3279
    %3733 = vmatprep.subr.bf16.mxu0 0
    %3734 = vmatpush1.bf16.msra.mxu0 %v3280
    %3735 = vmatprep.subr.bf16.mxu0 0
    %3736 = vmatpush1.bf16.msra.mxu0 %v3281
    %3737 = vmatprep.subr.bf16.mxu0 0
    %3738 = vmatpush1.bf16.msra.mxu0 %v3282
    %3739 = vmatprep.subr.bf16.mxu0 0
    %3740 = vmatpush1.bf16.msra.mxu0 %v3283
    %3741 = vmatprep.subr.bf16.mxu0 0
    %3742 = vmatpush1.bf16.msra.mxu0 %v3284
    %3743 = vmatprep.subr.bf16.mxu0 0
    %3744 = vmatpush1.bf16.msra.mxu0 %v3285
    %3745 = vmatprep.subr.bf16.mxu0 0
    %3746 = vmatpush1.bf16.msra.mxu0 %v3286
    %3747 = vmatprep.subr.bf16.mxu0 0
    %3748 = vmatpush1.bf16.msra.mxu0 %v3287
    %3749 = vmatprep.subr.bf16.mxu0 0
    %3750 = vmatpush1.bf16.msra.mxu0 %v3288
    %3751 = vmatprep.subr.bf16.mxu0 0
    %3752 = vmatpush1.bf16.msra.mxu0 %v3289
    %3753 = vmatprep.subr.bf16.mxu0 0
    %3754 = vmatpush1.bf16.msra.mxu0 %v3290
    %3755 = vmatprep.subr.bf16.mxu0 0
    %3756 = vmatpush1.bf16.msra.mxu0 %v3291
    %3757 = vmatprep.mubr.bf16.mxu0 %v1340
    %3758 = vmatmul.mubr.bf16.gmra.mrb[0].mxu0 %v1339
    %v3759 = vpop.f32.mrb[0].mxu0
    %v3760 = vadd.f32 %v3343, %v3759
    %v3761 = vpop.f32.mrb[0].mxu0
    %v3762 = vpop.f32.mrb[0].mxu0
    %v3763 = vadd.f32 %v3346, %v3762
    %v3764 = vpop.f32.mrb[0].mxu0
    %3765 = vmatprep.mubr.bf16.mxu0 %v1346
    %3766 = vmatmul.mubr.bf16.gmra.mrb[0].mxu0 %v1345
    %v3767 = vpop.f32.mrb[0].mxu0
    %v3768 = vadd.f32 %v3351, %v3767
    %v3769 = vpop.f32.mrb[0].mxu0
    %v3770 = vpop.f32.mrb[0].mxu0
    %v3771 = vadd.f32 %v3354, %v3770
    %v3772 = vpop.f32.mrb[0].mxu0
    %3773 = vmatprep.mubr.bf16.mxu0 %v1352
    %3774 = vmatmul.mubr.bf16.gmra.mrb[0].mxu0 %v1351
    %v3775 = vpop.f32.mrb[0].mxu0
    %v3776 = vadd.f32 %v3359, %v3775
    %v3777 = vpop.f32.mrb[0].mxu0
    %v3778 = vpop.f32.mrb[0].mxu0
    %v3779 = vadd.f32 %v3362, %v3778
    %v3780 = vpop.f32.mrb[0].mxu0
    %3781 = vmatprep.mubr.bf16.mxu0 %v1358
    %3782 = vmatmul.mubr.bf16.gmra.mrb[0].mxu0 %v1357
    %v3783 = vpop.f32.mrb[0].mxu0
    %v3784 = vadd.f32 %v3367, %v3783
    %v3785 = vpop.f32.mrb[0].mxu0
    %v3786 = vpop.f32.mrb[0].mxu0
    %v3787 = vadd.f32 %v3370, %v3786
    %v3788 = vpop.f32.mrb[0].mxu0
    %3789 = vmatprep.mubr.bf16.mxu0 %v1364
    %3790 = vmatmul.mubr.bf16.gmra.mrb[0].mxu0 %v1363
    %v3791 = vpop.f32.mrb[0].mxu0
    %v3792 = vadd.f32 %v3375, %v3791
    %v3793 = vpop.f32.mrb[0].mxu0
    %v3794 = vpop.f32.mrb[0].mxu0
    %v3795 = vadd.f32 %v3378, %v3794
    %v3796 = vpop.f32.mrb[0].mxu0
    %3797 = vmatprep.mubr.bf16.mxu0 %v1370
    %3798 = vmatmul.mubr.bf16.gmra.mrb[0].mxu0 %v1369
    %v3799 = vpop.f32.mrb[0].mxu0
    %v3800 = vadd.f32 %v3383, %v3799
    %v3801 = vpop.f32.mrb[0].mxu0
    %v3802 = vpop.f32.mrb[0].mxu0
    %v3803 = vadd.f32 %v3386, %v3802
    %v3804 = vpop.f32.mrb[0].mxu0
    %3805 = vmatprep.mubr.bf16.mxu0 %v1376
    %3806 = vmatmul.mubr.bf16.gmra.mrb[0].mxu0 %v1375
    %v3807 = vpop.f32.mrb[0].mxu0
    %v3808 = vadd.f32 %v3391, %v3807
    %v3809 = vpop.f32.mrb[0].mxu0
    %v3810 = vpop.f32.mrb[0].mxu0
    %v3811 = vadd.f32 %v3394, %v3810
    %v3812 = vpop.f32.mrb[0].mxu0
    %3813 = vmatprep.mubr.bf16.mxu0 %v1382
    %3814 = vmatmul.mubr.bf16.gmra.mrb[0].mxu0 %v1381
    %v3815 = vpop.f32.mrb[0].mxu0
    %v3816 = vadd.f32 %v3399, %v3815
    %v3817 = vpop.f32.mrb[0].mxu0
    %v3818 = vpop.f32.mrb[0].mxu0
    %v3819 = vadd.f32 %v3402, %v3818
    %v3820 = vpop.f32.mrb[0].mxu0
    %3821 = vmatprep.mubr.bf16.mxu0 %v1388
    %3822 = vmatmul.mubr.bf16.gmra.mrb[0].mxu0 %v1387
    %v3823 = vpop.f32.mrb[0].mxu0
    %v3824 = vadd.f32 %v3407, %v3823
    %v3825 = vpop.f32.mrb[0].mxu0
    %v3826 = vpop.f32.mrb[0].mxu0
    %v3827 = vadd.f32 %v3410, %v3826
    %v3828 = vpop.f32.mrb[0].mxu0
    %3829 = vmatprep.mubr.bf16.mxu0 %v1394
    %3830 = vmatmul.mubr.bf16.gmra.mrb[0].mxu0 %v1393
    %v3831 = vpop.f32.mrb[0].mxu0
    %v3832 = vadd.f32 %v3415, %v3831
    %v3833 = vpop.f32.mrb[0].mxu0
    %v3834 = vpop.f32.mrb[0].mxu0
    %v3835 = vadd.f32 %v3418, %v3834
    %v3836 = vpop.f32.mrb[0].mxu0
    %3837 = vmatprep.mubr.bf16.mxu0 %v1400
    %3838 = vmatmul.mubr.bf16.gmra.mrb[0].mxu0 %v1399
    %v3839 = vpop.f32.mrb[0].mxu0
    %v3840 = vadd.f32 %v3423, %v3839
    %v3841 = vpop.f32.mrb[0].mxu0
    %v3842 = vpop.f32.mrb[0].mxu0
    %v3843 = vadd.f32 %v3426, %v3842
    %v3844 = vpop.f32.mrb[0].mxu0
    %3845 = vmatprep.mubr.bf16.mxu0 %v1406
    %3846 = vmatmul.mubr.bf16.gmra.mrb[0].mxu0 %v1405
    %v3847 = vpop.f32.mrb[0].mxu0
    %v3848 = vadd.f32 %v3431, %v3847
    %v3849 = vpop.f32.mrb[0].mxu0
    %v3850 = vpop.f32.mrb[0].mxu0
    %v3851 = vadd.f32 %v3434, %v3850
    %v3852 = vpop.f32.mrb[0].mxu0
    %3853 = vmatprep.mubr.bf16.mxu0 %v1412
    %3854 = vmatmul.mubr.bf16.gmra.mrb[0].mxu0 %v1411
    %v3855 = vpop.f32.mrb[0].mxu0
    %v3856 = vadd.f32 %v3439, %v3855
    %v3857 = vpop.f32.mrb[0].mxu0
    %v3858 = vpop.f32.mrb[0].mxu0
    %v3859 = vadd.f32 %v3442, %v3858
    %v3860 = vpop.f32.mrb[0].mxu0
    %3861 = vmatprep.mubr.bf16.mxu0 %v1418
    %3862 = vmatmul.mubr.bf16.gmra.mrb[0].mxu0 %v1417
    %v3863 = vpop.f32.mrb[0].mxu0
    %v3864 = vadd.f32 %v3447, %v3863
    %v3865 = vpop.f32.mrb[0].mxu0
    %v3866 = vpop.f32.mrb[0].mxu0
    %v3867 = vadd.f32 %v3450, %v3866
    %v3868 = vpop.f32.mrb[0].mxu0
    %3869 = vmatprep.mubr.bf16.mxu0 %v1424
    %3870 = vmatmul.mubr.bf16.gmra.mrb[0].mxu0 %v1423
    %v3871 = vpop.f32.mrb[0].mxu0
    %v3872 = vadd.f32 %v3455, %v3871
    %v3873 = vpop.f32.mrb[0].mxu0
    %v3874 = vpop.f32.mrb[0].mxu0
    %v3875 = vadd.f32 %v3458, %v3874
    %v3876 = vpop.f32.mrb[0].mxu0
    %3877 = vmatprep.mubr.bf16.mxu0 %v1430
    %3878 = vmatmul.mubr.bf16.gmra.mrb[0].mxu0 %v1429
    %v3879 = vpop.f32.mrb[0].mxu0
    %v3880 = vadd.f32 %v3463, %v3879
    %v3881 = vpop.f32.mrb[0].mxu0
    %v3882 = vpop.f32.mrb[0].mxu0
    %v3883 = vadd.f32 %v3466, %v3882
    %v3884 = vpop.f32.mrb[0].mxu0
    %3885 = vmatprep.mubr.bf16.mxu0 %v1436
    %3886 = vmatmul.mubr.bf16.gmra.mrb[0].mxu0 %v1435
    %v3887 = vpop.f32.mrb[0].mxu0
    %v3888 = vadd.f32 %v3471, %v3887
    %v3889 = vpop.f32.mrb[0].mxu0
    %v3890 = vpop.f32.mrb[0].mxu0
    %v3891 = vadd.f32 %v3474, %v3890
    %v3892 = vpop.f32.mrb[0].mxu0
    %3893 = vmatprep.mubr.bf16.mxu0 %v1442
    %3894 = vmatmul.mubr.bf16.gmra.mrb[0].mxu0 %v1441
    %v3895 = vpop.f32.mrb[0].mxu0
    %v3896 = vadd.f32 %v3479, %v3895
    %v3897 = vpop.f32.mrb[0].mxu0
    %v3898 = vpop.f32.mrb[0].mxu0
    %v3899 = vadd.f32 %v3482, %v3898
    %v3900 = vpop.f32.mrb[0].mxu0
    %3901 = vmatprep.mubr.bf16.mxu0 %v1448
    %3902 = vmatmul.mubr.bf16.gmra.mrb[0].mxu0 %v1447
    %v3903 = vpop.f32.mrb[0].mxu0
    %v3904 = vadd.f32 %v3487, %v3903
    %v3905 = vpop.f32.mrb[0].mxu0
    %v3906 = vpop.f32.mrb[0].mxu0
    %v3907 = vadd.f32 %v3490, %v3906
    %v3908 = vpop.f32.mrb[0].mxu0
    %3909 = vmatprep.mubr.bf16.mxu0 %v1454
    %3910 = vmatmul.mubr.bf16.gmra.mrb[0].mxu0 %v1453
    %v3911 = vpop.f32.mrb[0].mxu0
    %v3912 = vadd.f32 %v3495, %v3911
    %v3913 = vpop.f32.mrb[0].mxu0
    %v3914 = vpop.f32.mrb[0].mxu0
    %v3915 = vadd.f32 %v3498, %v3914
    %v3916 = vpop.f32.mrb[0].mxu0
    %3917 = vmatprep.mubr.bf16.mxu0 %v1460
    %3918 = vmatmul.mubr.bf16.gmra.mrb[0].mxu0 %v1459
    %v3919 = vpop.f32.mrb[0].mxu0
    %v3920 = vadd.f32 %v3503, %v3919
    %v3921 = vpop.f32.mrb[0].mxu0
    %v3922 = vpop.f32.mrb[0].mxu0
    %v3923 = vadd.f32 %v3506, %v3922
    %v3924 = vpop.f32.mrb[0].mxu0
    %3925 = vmatprep.mubr.bf16.mxu0 %v1466
    %3926 = vmatmul.mubr.bf16.gmra.mrb[0].mxu0 %v1465
    %v3927 = vpop.f32.mrb[0].mxu0
    %v3928 = vadd.f32 %v3511, %v3927
    %v3929 = vpop.f32.mrb[0].mxu0
    %v3930 = vpop.f32.mrb[0].mxu0
    %v3931 = vadd.f32 %v3514, %v3930
    %v3932 = vpop.f32.mrb[0].mxu0
    %3933 = vmatprep.mubr.bf16.mxu0 %v1472
    %3934 = vmatmul.mubr.bf16.gmra.mrb[0].mxu0 %v1471
    %v3935 = vpop.f32.mrb[0].mxu0
    %v3936 = vadd.f32 %v3519, %v3935
    %v3937 = vpop.f32.mrb[0].mxu0
    %v3938 = vpop.f32.mrb[0].mxu0
    %v3939 = vadd.f32 %v3522, %v3938
    %v3940 = vpop.f32.mrb[0].mxu0
    %3941 = vmatprep.mubr.bf16.mxu0 %v1478
    %3942 = vmatmul.mubr.bf16.gmra.mrb[0].mxu0 %v1477
    %v3943 = vpop.f32.mrb[0].mxu0
    %v3944 = vadd.f32 %v3527, %v3943
    %v3945 = vpop.f32.mrb[0].mxu0
    %v3946 = vpop.f32.mrb[0].mxu0
    %v3947 = vadd.f32 %v3530, %v3946
    %v3948 = vpop.f32.mrb[0].mxu0
    %3949 = vmatprep.mubr.bf16.mxu0 %v1484
    %3950 = vmatmul.mubr.bf16.gmra.mrb[0].mxu0 %v1483
    %v3951 = vpop.f32.mrb[0].mxu0
    %v3952 = vadd.f32 %v3535, %v3951
    %v3953 = vpop.f32.mrb[0].mxu0
    %v3954 = vpop.f32.mrb[0].mxu0
    %v3955 = vadd.f32 %v3538, %v3954
    %v3956 = vpop.f32.mrb[0].mxu0
    %3957 = vmatprep.mubr.bf16.mxu0 %v1490
    %3958 = vmatmul.mubr.bf16.gmra.mrb[0].mxu0 %v1489
    %v3959 = vpop.f32.mrb[0].mxu0
    %v3960 = vadd.f32 %v3543, %v3959
    %v3961 = vpop.f32.mrb[0].mxu0
    %v3962 = vpop.f32.mrb[0].mxu0
    %v3963 = vadd.f32 %v3546, %v3962
    %v3964 = vpop.f32.mrb[0].mxu0
    %3965 = vmatprep.mubr.bf16.mxu0 %v1496
    %3966 = vmatmul.mubr.bf16.gmra.mrb[0].mxu0 %v1495
    %v3967 = vpop.f32.mrb[0].mxu0
    %v3968 = vadd.f32 %v3551, %v3967
    %v3969 = vpop.f32.mrb[0].mxu0
    %v3970 = vpop.f32.mrb[0].mxu0
    %v3971 = vadd.f32 %v3554, %v3970
    %v3972 = vpop.f32.mrb[0].mxu0
    %3973 = vmatprep.mubr.bf16.mxu0 %v1502
    %3974 = vmatmul.mubr.bf16.gmra.mrb[0].mxu0 %v1501
    %v3975 = vpop.f32.mrb[0].mxu0
    %v3976 = vadd.f32 %v3559, %v3975
    %v3977 = vpop.f32.mrb[0].mxu0
    %v3978 = vpop.f32.mrb[0].mxu0
    %v3979 = vadd.f32 %v3562, %v3978
    %v3980 = vpop.f32.mrb[0].mxu0
    %3981 = vmatprep.mubr.bf16.mxu0 %v1508
    %3982 = vmatmul.mubr.bf16.gmra.mrb[0].mxu0 %v1507
    %v3983 = vpop.f32.mrb[0].mxu0
    %v3984 = vadd.f32 %v3567, %v3983
    %v3985 = vpop.f32.mrb[0].mxu0
    %v3986 = vpop.f32.mrb[0].mxu0
    %v3987 = vadd.f32 %v3570, %v3986
    %v3988 = vpop.f32.mrb[0].mxu0
    %3989 = vmatprep.mubr.bf16.mxu0 %v1514
    %3990 = vmatmul.mubr.bf16.gmra.mrb[0].mxu0 %v1513
    %v3991 = vpop.f32.mrb[0].mxu0
    %v3992 = vadd.f32 %v3575, %v3991
    %v3993 = vpop.f32.mrb[0].mxu0
    %v3994 = vpop.f32.mrb[0].mxu0
    %v3995 = vadd.f32 %v3578, %v3994
    %v3996 = vpop.f32.mrb[0].mxu0
    %3997 = vmatprep.mubr.bf16.mxu0 %v1520
    %3998 = vmatmul.mubr.bf16.gmra.mrb[0].mxu0 %v1519
    %v3999 = vpop.f32.mrb[0].mxu0
    %v4000 = vadd.f32 %v3583, %v3999
    %v4001 = vpop.f32.mrb[0].mxu0
    %v4002 = vpop.f32.mrb[0].mxu0
    %v4003 = vadd.f32 %v3586, %v4002
    %v4004 = vpop.f32.mrb[0].mxu0
    %4005 = vmatprep.mubr.bf16.mxu0 %v1526
    %4006 = vmatmul.mubr.bf16.gmra.mrb[0].mxu0 %v1525
    %v4007 = vpop.f32.mrb[0].mxu0
    %v4008 = vadd.f32 %v3591, %v4007
    %v4009 = vpop.f32.mrb[0].mxu0
    %v4010 = vpop.f32.mrb[0].mxu0
    %v4011 = vadd.f32 %v3594, %v4010
    %v4012 = vpop.f32.mrb[0].mxu0
    %4013 = vmatprep.mubr.bf16.mxu0 %v1532
    %4014 = vmatmul.mubr.bf16.gmra.mrb[0].mxu0 %v1531
    %v4015 = vpop.f32.mrb[0].mxu0
    %v4016 = vadd.f32 %v3599, %v4015
    %v4017 = vpop.f32.mrb[0].mxu0
    %v4018 = vpop.f32.mrb[0].mxu0
    %v4019 = vadd.f32 %v3602, %v4018
    %v4020 = vpop.f32.mrb[0].mxu0
    %4021 = vmatprep.mubr.bf16.mxu0 %v1538
    %4022 = vmatmul.mubr.bf16.gmra.mrb[0].mxu0 %v1537
    %v4023 = vpop.f32.mrb[0].mxu0
    %v4024 = vadd.f32 %v3607, %v4023
    %v4025 = vpop.f32.mrb[0].mxu0
    %v4026 = vpop.f32.mrb[0].mxu0
    %v4027 = vadd.f32 %v3610, %v4026
    %v4028 = vpop.f32.mrb[0].mxu0
    %4029 = vmatprep.mubr.bf16.mxu0 %v1544
    %4030 = vmatmul.mubr.bf16.gmra.mrb[0].mxu0 %v1543
    %v4031 = vpop.f32.mrb[0].mxu0
    %v4032 = vadd.f32 %v3615, %v4031
    %v4033 = vpop.f32.mrb[0].mxu0
    %v4034 = vpop.f32.mrb[0].mxu0
    %v4035 = vadd.f32 %v3618, %v4034
    %v4036 = vpop.f32.mrb[0].mxu0
    %4037 = vmatprep.mubr.bf16.mxu0 %v1550
    %4038 = vmatmul.mubr.bf16.gmra.mrb[0].mxu0 %v1549
    %v4039 = vpop.f32.mrb[0].mxu0
    %v4040 = vadd.f32 %v3623, %v4039
    %v4041 = vpop.f32.mrb[0].mxu0
    %v4042 = vpop.f32.mrb[0].mxu0
    %v4043 = vadd.f32 %v3626, %v4042
    %v4044 = vpop.f32.mrb[0].mxu0
    %4045 = vmatprep.mubr.bf16.mxu0 %v1556
    %4046 = vmatmul.mubr.bf16.gmra.mrb[0].mxu0 %v1555
    %v4047 = vpop.f32.mrb[0].mxu0
    %v4048 = vadd.f32 %v3631, %v4047
    %v4049 = vpop.f32.mrb[0].mxu0
    %v4050 = vpop.f32.mrb[0].mxu0
    %v4051 = vadd.f32 %v3634, %v4050
    %v4052 = vpop.f32.mrb[0].mxu0
    %4053 = vmatprep.mubr.bf16.mxu0 %v1562
    %4054 = vmatmul.mubr.bf16.gmra.mrb[0].mxu0 %v1561
    %v4055 = vpop.f32.mrb[0].mxu0
    %v4056 = vadd.f32 %v3639, %v4055
    %v4057 = vpop.f32.mrb[0].mxu0
    %v4058 = vpop.f32.mrb[0].mxu0
    %v4059 = vadd.f32 %v3642, %v4058
    %v4060 = vpop.f32.mrb[0].mxu0
    %4061 = vmatprep.mubr.bf16.mxu0 %v1568
    %4062 = vmatmul.mubr.bf16.gmra.mrb[0].mxu0 %v1567
    %v4063 = vpop.f32.mrb[0].mxu0
    %v4064 = vadd.f32 %v3647, %v4063
    %v4065 = vpop.f32.mrb[0].mxu0
    %v4066 = vpop.f32.mrb[0].mxu0
    %v4067 = vadd.f32 %v3650, %v4066
    %v4068 = vpop.f32.mrb[0].mxu0
    %4069 = vmatprep.mubr.bf16.mxu0 %v1574
    %4070 = vmatmul.mubr.bf16.gmra.mrb[0].mxu0 %v1573
    %v4071 = vpop.f32.mrb[0].mxu0
    %v4072 = vadd.f32 %v3655, %v4071
    %v4073 = vpop.f32.mrb[0].mxu0
    %v4074 = vpop.f32.mrb[0].mxu0
    %v4075 = vadd.f32 %v3658, %v4074
    %v4076 = vpop.f32.mrb[0].mxu0
    %4077 = vmatprep.mubr.bf16.mxu0 %v1580
    %4078 = vmatmul.mubr.bf16.gmra.mrb[0].mxu0 %v1579
    %v4079 = vpop.f32.mrb[0].mxu0
    %v4080 = vadd.f32 %v3663, %v4079
    %v4081 = vpop.f32.mrb[0].mxu0
    %v4082 = vpop.f32.mrb[0].mxu0
    %v4083 = vadd.f32 %v3666, %v4082
    %v4084 = vpop.f32.mrb[0].mxu0
    %4085 = vmatprep.mubr.bf16.mxu0 %v1586
    %4086 = vmatmul.mubr.bf16.gmra.mrb[0].mxu0 %v1585
    %v4087 = vpop.f32.mrb[0].mxu0
    %v4088 = vadd.f32 %v3671, %v4087
    %v4089 = vpop.f32.mrb[0].mxu0
    %v4090 = vpop.f32.mrb[0].mxu0
    %v4091 = vadd.f32 %v3674, %v4090
    %v4092 = vpop.f32.mrb[0].mxu0
    %4093 = vmatprep.mubr.bf16.mxu0 %v1592
    %4094 = vmatmul.mubr.bf16.gmra.mrb[0].mxu0 %v1591
    %v4095 = vpop.f32.mrb[0].mxu0
    %v4096 = vadd.f32 %v3679, %v4095
    %v4097 = vpop.f32.mrb[0].mxu0
    %v4098 = vpop.f32.mrb[0].mxu0
    %v4099 = vadd.f32 %v3682, %v4098
    %v4100 = vpop.f32.mrb[0].mxu0
    %4101 = vmatprep.mubr.bf16.mxu0 %v1598
    %4102 = vmatmul.mubr.bf16.gmra.mrb[0].mxu0 %v1597
    %v4103 = vpop.f32.mrb[0].mxu0
    %v4104 = vadd.f32 %v3687, %v4103
    %v4105 = vpop.f32.mrb[0].mxu0
    %v4106 = vpop.f32.mrb[0].mxu0
    %v4107 = vadd.f32 %v3690, %v4106
    %v4108 = vpop.f32.mrb[0].mxu0
    %4109 = vmatprep.mubr.bf16.mxu0 %v1604
    %4110 = vmatmul.mubr.bf16.gmra.mrb[0].mxu0 %v1603
    %v4111 = vpop.f32.mrb[0].mxu0
    %v4112 = vadd.f32 %v3695, %v4111
    %v4113 = vpop.f32.mrb[0].mxu0
    %v4114 = vpop.f32.mrb[0].mxu0
    %v4115 = vadd.f32 %v3698, %v4114
    %v4116 = vpop.f32.mrb[0].mxu0
    %4117 = vmatprep.mubr.bf16.mxu0 %v1610
    %4118 = vmatmul.mubr.bf16.gmra.mrb[0].mxu0 %v1609
    %v4119 = vpop.f32.mrb[0].mxu0
    %v4120 = vadd.f32 %v3703, %v4119
    %v4121 = vpop.f32.mrb[0].mxu0
    %v4122 = vpop.f32.mrb[0].mxu0
    %v4123 = vadd.f32 %v3706, %v4122
    %v4124 = vpop.f32.mrb[0].mxu0
    %4125 = vmatprep.mubr.bf16.mxu0 %v1616
    %4126 = vmatmul.mubr.bf16.gmra.mrb[0].mxu0 %v1615
    %v4127 = vpop.f32.mrb[0].mxu0
    %v4128 = vadd.f32 %v3711, %v4127
    %v4129 = vpop.f32.mrb[0].mxu0
    %v4130 = vpop.f32.mrb[0].mxu0
    %v4131 = vadd.f32 %v3714, %v4130
    %v4132 = vpop.f32.mrb[0].mxu0
    %4133 = vmatprep.mubr.bf16.mxu0 %v1622
    %4134 = vmatmul.mubr.bf16.gmra.mrb[0].mxu0 %v1621
    %v4135 = vpop.f32.mrb[0].mxu0
    %v4136 = vadd.f32 %v3719, %v4135
    %v4137 = vpop.f32.mrb[0].mxu0
    %v4138 = vpop.f32.mrb[0].mxu0
    %v4139 = vadd.f32 %v3722, %v4138
    %v4140 = vpop.f32.mrb[0].mxu0
    %4141 = vdwg.mxu0
    %4142 = vmatprep.subr.bf16.mxu0 0
    %4143 = vmatpush1.bf16.msra.mxu0 %v3292
    %4144 = vmatprep.subr.bf16.mxu0 0
    %4145 = vmatpush1.bf16.msra.mxu0 %v3293
    %4146 = vmatprep.subr.bf16.mxu0 0
    %4147 = vmatpush1.bf16.msra.mxu0 %v3294
    %4148 = vmatprep.subr.bf16.mxu0 0
    %4149 = vmatpush1.bf16.msra.mxu0 %v3295
    %4150 = vmatprep.subr.bf16.mxu0 0
    %4151 = vmatpush1.bf16.msra.mxu0 %v3296
    %4152 = vmatprep.subr.bf16.mxu0 0
    %4153 = vmatpush1.bf16.msra.mxu0 %v3297
    %4154 = vmatprep.subr.bf16.mxu0 0
    %4155 = vmatpush1.bf16.msra.mxu0 %v3298
    %4156 = vmatprep.subr.bf16.mxu0 0
    %4157 = vmatpush1.bf16.msra.mxu0 %v3299
    %4158 = vmatprep.subr.bf16.mxu0 0
    %4159 = vmatpush1.bf16.msra.mxu0 %v3300
    %4160 = vmatprep.subr.bf16.mxu0 0
    %4161 = vmatpush1.bf16.msra.mxu0 %v3301
    %4162 = vmatprep.subr.bf16.mxu0 0
    %4163 = vmatpush1.bf16.msra.mxu0 %v3302
    %4164 = vmatprep.subr.bf16.mxu0 0
    %4165 = vmatpush1.bf16.msra.mxu0 %v3303
    %4166 = vmatprep.subr.bf16.mxu0 0
    %4167 = vmatpush1.bf16.msra.mxu0 %v3304
    %4168 = vmatprep.subr.bf16.mxu0 0
    %4169 = vmatpush1.bf16.msra.mxu0 %v3305
    %4170 = vmatprep.subr.bf16.mxu0 0
    %4171 = vmatpush1.bf16.msra.mxu0 %v3306
    %4172 = vmatprep.subr.bf16.mxu0 0
    %4173 = vmatpush1.bf16.msra.mxu0 %v3307
    %4174 = vmatprep.mubr.bf16.mxu0 %v1342
    %4175 = vmatmul.mubr.bf16.gmra.mrb[0].mxu0 %v1341
    %v4176 = vpop.f32.mrb[0].mxu0
    %v4177 = vadd.f32 %v3760, %v4176
    %v4178 = vpop.f32.mrb[0].mxu0
    %v4179 = vpop.f32.mrb[0].mxu0
    %v4180 = vadd.f32 %v3763, %v4179
    %v4181 = vpop.f32.mrb[0].mxu0
    %4182 = vmatprep.mubr.bf16.mxu0 %v1348
    %4183 = vmatmul.mubr.bf16.gmra.mrb[0].mxu0 %v1347
    %v4184 = vpop.f32.mrb[0].mxu0
    %v4185 = vadd.f32 %v3768, %v4184
    %v4186 = vpop.f32.mrb[0].mxu0
    %v4187 = vpop.f32.mrb[0].mxu0
    %v4188 = vadd.f32 %v3771, %v4187
    %v4189 = vpop.f32.mrb[0].mxu0
    %4190 = vmatprep.mubr.bf16.mxu0 %v1354
    %4191 = vmatmul.mubr.bf16.gmra.mrb[0].mxu0 %v1353
    %v4192 = vpop.f32.mrb[0].mxu0
    %v4193 = vadd.f32 %v3776, %v4192
    %v4194 = vpop.f32.mrb[0].mxu0
    %v4195 = vpop.f32.mrb[0].mxu0
    %v4196 = vadd.f32 %v3779, %v4195
    %v4197 = vpop.f32.mrb[0].mxu0
    %4198 = vmatprep.mubr.bf16.mxu0 %v1360
    %4199 = vmatmul.mubr.bf16.gmra.mrb[0].mxu0 %v1359
    %v4200 = vpop.f32.mrb[0].mxu0
    %v4201 = vadd.f32 %v3784, %v4200
    %v4202 = vpop.f32.mrb[0].mxu0
    %v4203 = vpop.f32.mrb[0].mxu0
    %v4204 = vadd.f32 %v3787, %v4203
    %v4205 = vpop.f32.mrb[0].mxu0
    %4206 = vmatprep.mubr.bf16.mxu0 %v1366
    %4207 = vmatmul.mubr.bf16.gmra.mrb[0].mxu0 %v1365
    %v4208 = vpop.f32.mrb[0].mxu0
    %v4209 = vadd.f32 %v3792, %v4208
    %v4210 = vpop.f32.mrb[0].mxu0
    %v4211 = vpop.f32.mrb[0].mxu0
    %v4212 = vadd.f32 %v3795, %v4211
    %v4213 = vpop.f32.mrb[0].mxu0
    %4214 = vmatprep.mubr.bf16.mxu0 %v1372
    %4215 = vmatmul.mubr.bf16.gmra.mrb[0].mxu0 %v1371
    %v4216 = vpop.f32.mrb[0].mxu0
    %v4217 = vadd.f32 %v3800, %v4216
    %v4218 = vpop.f32.mrb[0].mxu0
    %v4219 = vpop.f32.mrb[0].mxu0
    %v4220 = vadd.f32 %v3803, %v4219
    %v4221 = vpop.f32.mrb[0].mxu0
    %4222 = vmatprep.mubr.bf16.mxu0 %v1378
    %4223 = vmatmul.mubr.bf16.gmra.mrb[0].mxu0 %v1377
    %v4224 = vpop.f32.mrb[0].mxu0
    %v4225 = vadd.f32 %v3808, %v4224
    %v4226 = vpop.f32.mrb[0].mxu0
    %v4227 = vpop.f32.mrb[0].mxu0
    %v4228 = vadd.f32 %v3811, %v4227
    %v4229 = vpop.f32.mrb[0].mxu0
    %4230 = vmatprep.mubr.bf16.mxu0 %v1384
    %4231 = vmatmul.mubr.bf16.gmra.mrb[0].mxu0 %v1383
    %v4232 = vpop.f32.mrb[0].mxu0
    %v4233 = vadd.f32 %v3816, %v4232
    %v4234 = vpop.f32.mrb[0].mxu0
    %v4235 = vpop.f32.mrb[0].mxu0
    %v4236 = vadd.f32 %v3819, %v4235
    %v4237 = vpop.f32.mrb[0].mxu0
    %4238 = vmatprep.mubr.bf16.mxu0 %v1390
    %4239 = vmatmul.mubr.bf16.gmra.mrb[0].mxu0 %v1389
    %v4240 = vpop.f32.mrb[0].mxu0
    %v4241 = vadd.f32 %v3824, %v4240
    %v4242 = vpop.f32.mrb[0].mxu0
    %v4243 = vpop.f32.mrb[0].mxu0
    %v4244 = vadd.f32 %v3827, %v4243
    %v4245 = vpop.f32.mrb[0].mxu0
    %4246 = vmatprep.mubr.bf16.mxu0 %v1396
    %4247 = vmatmul.mubr.bf16.gmra.mrb[0].mxu0 %v1395
    %v4248 = vpop.f32.mrb[0].mxu0
    %v4249 = vadd.f32 %v3832, %v4248
    %v4250 = vpop.f32.mrb[0].mxu0
    %v4251 = vpop.f32.mrb[0].mxu0
    %v4252 = vadd.f32 %v3835, %v4251
    %v4253 = vpop.f32.mrb[0].mxu0
    %4254 = vmatprep.mubr.bf16.mxu0 %v1402
    %4255 = vmatmul.mubr.bf16.gmra.mrb[0].mxu0 %v1401
    %v4256 = vpop.f32.mrb[0].mxu0
    %v4257 = vadd.f32 %v3840, %v4256
    %v4258 = vpop.f32.mrb[0].mxu0
    %v4259 = vpop.f32.mrb[0].mxu0
    %v4260 = vadd.f32 %v3843, %v4259
    %v4261 = vpop.f32.mrb[0].mxu0
    %4262 = vmatprep.mubr.bf16.mxu0 %v1408
    %4263 = vmatmul.mubr.bf16.gmra.mrb[0].mxu0 %v1407
    %v4264 = vpop.f32.mrb[0].mxu0
    %v4265 = vadd.f32 %v3848, %v4264
    %v4266 = vpop.f32.mrb[0].mxu0
    %v4267 = vpop.f32.mrb[0].mxu0
    %v4268 = vadd.f32 %v3851, %v4267
    %v4269 = vpop.f32.mrb[0].mxu0
    %4270 = vmatprep.mubr.bf16.mxu0 %v1414
    %4271 = vmatmul.mubr.bf16.gmra.mrb[0].mxu0 %v1413
    %v4272 = vpop.f32.mrb[0].mxu0
    %v4273 = vadd.f32 %v3856, %v4272
    %v4274 = vpop.f32.mrb[0].mxu0
    %v4275 = vpop.f32.mrb[0].mxu0
    %v4276 = vadd.f32 %v3859, %v4275
    %v4277 = vpop.f32.mrb[0].mxu0
    %4278 = vmatprep.mubr.bf16.mxu0 %v1420
    %4279 = vmatmul.mubr.bf16.gmra.mrb[0].mxu0 %v1419
    %v4280 = vpop.f32.mrb[0].mxu0
    %v4281 = vadd.f32 %v3864, %v4280
    %v4282 = vpop.f32.mrb[0].mxu0
    %v4283 = vpop.f32.mrb[0].mxu0
    %v4284 = vadd.f32 %v3867, %v4283
    %v4285 = vpop.f32.mrb[0].mxu0
    %4286 = vmatprep.mubr.bf16.mxu0 %v1426
    %4287 = vmatmul.mubr.bf16.gmra.mrb[0].mxu0 %v1425
    %v4288 = vpop.f32.mrb[0].mxu0
    %v4289 = vadd.f32 %v3872, %v4288
    %v4290 = vpop.f32.mrb[0].mxu0
    %v4291 = vpop.f32.mrb[0].mxu0
    %v4292 = vadd.f32 %v3875, %v4291
    %v4293 = vpop.f32.mrb[0].mxu0
    %4294 = vmatprep.mubr.bf16.mxu0 %v1432
    %4295 = vmatmul.mubr.bf16.gmra.mrb[0].mxu0 %v1431
    %v4296 = vpop.f32.mrb[0].mxu0
    %v4297 = vadd.f32 %v3880, %v4296
    %v4298 = vpop.f32.mrb[0].mxu0
    %v4299 = vpop.f32.mrb[0].mxu0
    %v4300 = vadd.f32 %v3883, %v4299
    %v4301 = vpop.f32.mrb[0].mxu0
    %4302 = vmatprep.mubr.bf16.mxu0 %v1438
    %4303 = vmatmul.mubr.bf16.gmra.mrb[0].mxu0 %v1437
    %v4304 = vpop.f32.mrb[0].mxu0
    %v4305 = vadd.f32 %v3888, %v4304
    %v4306 = vpop.f32.mrb[0].mxu0
    %v4307 = vpop.f32.mrb[0].mxu0
    %v4308 = vadd.f32 %v3891, %v4307
    %v4309 = vpop.f32.mrb[0].mxu0
    %4310 = vmatprep.mubr.bf16.mxu0 %v1444
    %4311 = vmatmul.mubr.bf16.gmra.mrb[0].mxu0 %v1443
    %v4312 = vpop.f32.mrb[0].mxu0
    %v4313 = vadd.f32 %v3896, %v4312
    %v4314 = vpop.f32.mrb[0].mxu0
    %v4315 = vpop.f32.mrb[0].mxu0
    %v4316 = vadd.f32 %v3899, %v4315
    %v4317 = vpop.f32.mrb[0].mxu0
    %4318 = vmatprep.mubr.bf16.mxu0 %v1450
    %4319 = vmatmul.mubr.bf16.gmra.mrb[0].mxu0 %v1449
    %v4320 = vpop.f32.mrb[0].mxu0
    %v4321 = vadd.f32 %v3904, %v4320
    %v4322 = vpop.f32.mrb[0].mxu0
    %v4323 = vpop.f32.mrb[0].mxu0
    %v4324 = vadd.f32 %v3907, %v4323
    %v4325 = vpop.f32.mrb[0].mxu0
    %4326 = vmatprep.mubr.bf16.mxu0 %v1456
    %4327 = vmatmul.mubr.bf16.gmra.mrb[0].mxu0 %v1455
    %v4328 = vpop.f32.mrb[0].mxu0
    %v4329 = vadd.f32 %v3912, %v4328
    %v4330 = vpop.f32.mrb[0].mxu0
    %v4331 = vpop.f32.mrb[0].mxu0
    %v4332 = vadd.f32 %v3915, %v4331
    %v4333 = vpop.f32.mrb[0].mxu0
    %4334 = vmatprep.mubr.bf16.mxu0 %v1462
    %4335 = vmatmul.mubr.bf16.gmra.mrb[0].mxu0 %v1461
    %v4336 = vpop.f32.mrb[0].mxu0
    %v4337 = vadd.f32 %v3920, %v4336
    %v4338 = vpop.f32.mrb[0].mxu0
    %v4339 = vpop.f32.mrb[0].mxu0
    %v4340 = vadd.f32 %v3923, %v4339
    %v4341 = vpop.f32.mrb[0].mxu0
    %4342 = vmatprep.mubr.bf16.mxu0 %v1468
    %4343 = vmatmul.mubr.bf16.gmra.mrb[0].mxu0 %v1467
    %v4344 = vpop.f32.mrb[0].mxu0
    %v4345 = vadd.f32 %v3928, %v4344
    %v4346 = vpop.f32.mrb[0].mxu0
    %v4347 = vpop.f32.mrb[0].mxu0
    %v4348 = vadd.f32 %v3931, %v4347
    %v4349 = vpop.f32.mrb[0].mxu0
    %4350 = vmatprep.mubr.bf16.mxu0 %v1474
    %4351 = vmatmul.mubr.bf16.gmra.mrb[0].mxu0 %v1473
    %v4352 = vpop.f32.mrb[0].mxu0
    %v4353 = vadd.f32 %v3936, %v4352
    %v4354 = vpop.f32.mrb[0].mxu0
    %v4355 = vpop.f32.mrb[0].mxu0
    %v4356 = vadd.f32 %v3939, %v4355
    %v4357 = vpop.f32.mrb[0].mxu0
    %4358 = vmatprep.mubr.bf16.mxu0 %v1480
    %4359 = vmatmul.mubr.bf16.gmra.mrb[0].mxu0 %v1479
    %v4360 = vpop.f32.mrb[0].mxu0
    %v4361 = vadd.f32 %v3944, %v4360
    %v4362 = vpop.f32.mrb[0].mxu0
    %v4363 = vpop.f32.mrb[0].mxu0
    %v4364 = vadd.f32 %v3947, %v4363
    %v4365 = vpop.f32.mrb[0].mxu0
    %4366 = vmatprep.mubr.bf16.mxu0 %v1486
    %4367 = vmatmul.mubr.bf16.gmra.mrb[0].mxu0 %v1485
    %v4368 = vpop.f32.mrb[0].mxu0
    %v4369 = vadd.f32 %v3952, %v4368
    %v4370 = vpop.f32.mrb[0].mxu0
    %v4371 = vpop.f32.mrb[0].mxu0
    %v4372 = vadd.f32 %v3955, %v4371
    %v4373 = vpop.f32.mrb[0].mxu0
    %4374 = vmatprep.mubr.bf16.mxu0 %v1492
    %4375 = vmatmul.mubr.bf16.gmra.mrb[0].mxu0 %v1491
    %v4376 = vpop.f32.mrb[0].mxu0
    %v4377 = vadd.f32 %v3960, %v4376
    %v4378 = vpop.f32.mrb[0].mxu0
    %v4379 = vpop.f32.mrb[0].mxu0
    %v4380 = vadd.f32 %v3963, %v4379
    %v4381 = vpop.f32.mrb[0].mxu0
    %4382 = vmatprep.mubr.bf16.mxu0 %v1498
    %4383 = vmatmul.mubr.bf16.gmra.mrb[0].mxu0 %v1497
    %v4384 = vpop.f32.mrb[0].mxu0
    %v4385 = vadd.f32 %v3968, %v4384
    %v4386 = vpop.f32.mrb[0].mxu0
    %v4387 = vpop.f32.mrb[0].mxu0
    %v4388 = vadd.f32 %v3971, %v4387
    %v4389 = vpop.f32.mrb[0].mxu0
    %4390 = vmatprep.mubr.bf16.mxu0 %v1504
    %4391 = vmatmul.mubr.bf16.gmra.mrb[0].mxu0 %v1503
    %v4392 = vpop.f32.mrb[0].mxu0
    %v4393 = vadd.f32 %v3976, %v4392
    %v4394 = vpop.f32.mrb[0].mxu0
    %v4395 = vpop.f32.mrb[0].mxu0
    %v4396 = vadd.f32 %v3979, %v4395
    %v4397 = vpop.f32.mrb[0].mxu0
    %4398 = vmatprep.mubr.bf16.mxu0 %v1510
    %4399 = vmatmul.mubr.bf16.gmra.mrb[0].mxu0 %v1509
    %v4400 = vpop.f32.mrb[0].mxu0
    %v4401 = vadd.f32 %v3984, %v4400
    %v4402 = vpop.f32.mrb[0].mxu0
    %v4403 = vpop.f32.mrb[0].mxu0
    %v4404 = vadd.f32 %v3987, %v4403
    %v4405 = vpop.f32.mrb[0].mxu0
    %4406 = vmatprep.mubr.bf16.mxu0 %v1516
    %4407 = vmatmul.mubr.bf16.gmra.mrb[0].mxu0 %v1515
    %v4408 = vpop.f32.mrb[0].mxu0
    %v4409 = vadd.f32 %v3992, %v4408
    %v4410 = vpop.f32.mrb[0].mxu0
    %v4411 = vpop.f32.mrb[0].mxu0
    %v4412 = vadd.f32 %v3995, %v4411
    %v4413 = vpop.f32.mrb[0].mxu0
    %4414 = vmatprep.mubr.bf16.mxu0 %v1522
    %4415 = vmatmul.mubr.bf16.gmra.mrb[0].mxu0 %v1521
    %v4416 = vpop.f32.mrb[0].mxu0
    %v4417 = vadd.f32 %v4000, %v4416
    %v4418 = vpop.f32.mrb[0].mxu0
    %v4419 = vpop.f32.mrb[0].mxu0
    %v4420 = vadd.f32 %v4003, %v4419
    %v4421 = vpop.f32.mrb[0].mxu0
    %4422 = vmatprep.mubr.bf16.mxu0 %v1528
    %4423 = vmatmul.mubr.bf16.gmra.mrb[0].mxu0 %v1527
    %v4424 = vpop.f32.mrb[0].mxu0
    %v4425 = vadd.f32 %v4008, %v4424
    %v4426 = vpop.f32.mrb[0].mxu0
    %v4427 = vpop.f32.mrb[0].mxu0
    %v4428 = vadd.f32 %v4011, %v4427
    %v4429 = vpop.f32.mrb[0].mxu0
    %4430 = vmatprep.mubr.bf16.mxu0 %v1534
    %4431 = vmatmul.mubr.bf16.gmra.mrb[0].mxu0 %v1533
    %v4432 = vpop.f32.mrb[0].mxu0
    %v4433 = vadd.f32 %v4016, %v4432
    %v4434 = vpop.f32.mrb[0].mxu0
    %v4435 = vpop.f32.mrb[0].mxu0
    %v4436 = vadd.f32 %v4019, %v4435
    %v4437 = vpop.f32.mrb[0].mxu0
    %4438 = vmatprep.mubr.bf16.mxu0 %v1540
    %4439 = vmatmul.mubr.bf16.gmra.mrb[0].mxu0 %v1539
    %v4440 = vpop.f32.mrb[0].mxu0
    %v4441 = vadd.f32 %v4024, %v4440
    %v4442 = vpop.f32.mrb[0].mxu0
    %v4443 = vpop.f32.mrb[0].mxu0
    %v4444 = vadd.f32 %v4027, %v4443
    %v4445 = vpop.f32.mrb[0].mxu0
    %4446 = vmatprep.mubr.bf16.mxu0 %v1546
    %4447 = vmatmul.mubr.bf16.gmra.mrb[0].mxu0 %v1545
    %v4448 = vpop.f32.mrb[0].mxu0
    %v4449 = vadd.f32 %v4032, %v4448
    %v4450 = vpop.f32.mrb[0].mxu0
    %v4451 = vpop.f32.mrb[0].mxu0
    %v4452 = vadd.f32 %v4035, %v4451
    %v4453 = vpop.f32.mrb[0].mxu0
    %4454 = vmatprep.mubr.bf16.mxu0 %v1552
    %4455 = vmatmul.mubr.bf16.gmra.mrb[0].mxu0 %v1551
    %v4456 = vpop.f32.mrb[0].mxu0
    %v4457 = vadd.f32 %v4040, %v4456
    %v4458 = vpop.f32.mrb[0].mxu0
    %v4459 = vpop.f32.mrb[0].mxu0
    %v4460 = vadd.f32 %v4043, %v4459
    %v4461 = vpop.f32.mrb[0].mxu0
    %4462 = vmatprep.mubr.bf16.mxu0 %v1558
    %4463 = vmatmul.mubr.bf16.gmra.mrb[0].mxu0 %v1557
    %v4464 = vpop.f32.mrb[0].mxu0
    %v4465 = vadd.f32 %v4048, %v4464
    %v4466 = vpop.f32.mrb[0].mxu0
    %v4467 = vpop.f32.mrb[0].mxu0
    %v4468 = vadd.f32 %v4051, %v4467
    %v4469 = vpop.f32.mrb[0].mxu0
    %4470 = vmatprep.mubr.bf16.mxu0 %v1564
    %4471 = vmatmul.mubr.bf16.gmra.mrb[0].mxu0 %v1563
    %v4472 = vpop.f32.mrb[0].mxu0
    %v4473 = vadd.f32 %v4056, %v4472
    %v4474 = vpop.f32.mrb[0].mxu0
    %v4475 = vpop.f32.mrb[0].mxu0
    %v4476 = vadd.f32 %v4059, %v4475
    %v4477 = vpop.f32.mrb[0].mxu0
    %4478 = vmatprep.mubr.bf16.mxu0 %v1570
    %4479 = vmatmul.mubr.bf16.gmra.mrb[0].mxu0 %v1569
    %v4480 = vpop.f32.mrb[0].mxu0
    %v4481 = vadd.f32 %v4064, %v4480
    %v4482 = vpop.f32.mrb[0].mxu0
    %v4483 = vpop.f32.mrb[0].mxu0
    %v4484 = vadd.f32 %v4067, %v4483
    %v4485 = vpop.f32.mrb[0].mxu0
    %4486 = vmatprep.mubr.bf16.mxu0 %v1576
    %4487 = vmatmul.mubr.bf16.gmra.mrb[0].mxu0 %v1575
    %v4488 = vpop.f32.mrb[0].mxu0
    %v4489 = vadd.f32 %v4072, %v4488
    %v4490 = vpop.f32.mrb[0].mxu0
    %v4491 = vpop.f32.mrb[0].mxu0
    %v4492 = vadd.f32 %v4075, %v4491
    %v4493 = vpop.f32.mrb[0].mxu0
    %4494 = vmatprep.mubr.bf16.mxu0 %v1582
    %4495 = vmatmul.mubr.bf16.gmra.mrb[0].mxu0 %v1581
    %v4496 = vpop.f32.mrb[0].mxu0
    %v4497 = vadd.f32 %v4080, %v4496
    %v4498 = vpop.f32.mrb[0].mxu0
    %v4499 = vpop.f32.mrb[0].mxu0
    %v4500 = vadd.f32 %v4083, %v4499
    %v4501 = vpop.f32.mrb[0].mxu0
    %4502 = vmatprep.mubr.bf16.mxu0 %v1588
    %4503 = vmatmul.mubr.bf16.gmra.mrb[0].mxu0 %v1587
    %v4504 = vpop.f32.mrb[0].mxu0
    %v4505 = vadd.f32 %v4088, %v4504
    %v4506 = vpop.f32.mrb[0].mxu0
    %v4507 = vpop.f32.mrb[0].mxu0
    %v4508 = vadd.f32 %v4091, %v4507
    %v4509 = vpop.f32.mrb[0].mxu0
    %4510 = vmatprep.mubr.bf16.mxu0 %v1594
    %4511 = vmatmul.mubr.bf16.gmra.mrb[0].mxu0 %v1593
    %v4512 = vpop.f32.mrb[0].mxu0
    %v4513 = vadd.f32 %v4096, %v4512
    %v4514 = vpop.f32.mrb[0].mxu0
    %v4515 = vpop.f32.mrb[0].mxu0
    %v4516 = vadd.f32 %v4099, %v4515
    %v4517 = vpop.f32.mrb[0].mxu0
    %4518 = vmatprep.mubr.bf16.mxu0 %v1600
    %4519 = vmatmul.mubr.bf16.gmra.mrb[0].mxu0 %v1599
    %v4520 = vpop.f32.mrb[0].mxu0
    %v4521 = vadd.f32 %v4104, %v4520
    %v4522 = vpop.f32.mrb[0].mxu0
    %v4523 = vpop.f32.mrb[0].mxu0
    %v4524 = vadd.f32 %v4107, %v4523
    %v4525 = vpop.f32.mrb[0].mxu0
    %4526 = vmatprep.mubr.bf16.mxu0 %v1606
    %4527 = vmatmul.mubr.bf16.gmra.mrb[0].mxu0 %v1605
    %v4528 = vpop.f32.mrb[0].mxu0
    %v4529 = vadd.f32 %v4112, %v4528
    %v4530 = vpop.f32.mrb[0].mxu0
    %v4531 = vpop.f32.mrb[0].mxu0
    %v4532 = vadd.f32 %v4115, %v4531
    %v4533 = vpop.f32.mrb[0].mxu0
    %4534 = vmatprep.mubr.bf16.mxu0 %v1612
    %4535 = vmatmul.mubr.bf16.gmra.mrb[0].mxu0 %v1611
    %v4536 = vpop.f32.mrb[0].mxu0
    %v4537 = vadd.f32 %v4120, %v4536
    %v4538 = vpop.f32.mrb[0].mxu0
    %v4539 = vpop.f32.mrb[0].mxu0
    %v4540 = vadd.f32 %v4123, %v4539
    %v4541 = vpop.f32.mrb[0].mxu0
    %4542 = vmatprep.mubr.bf16.mxu0 %v1618
    %4543 = vmatmul.mubr.bf16.gmra.mrb[0].mxu0 %v1617
    %v4544 = vpop.f32.mrb[0].mxu0
    %v4545 = vadd.f32 %v4128, %v4544
    %v4546 = vpop.f32.mrb[0].mxu0
    %v4547 = vpop.f32.mrb[0].mxu0
    %v4548 = vadd.f32 %v4131, %v4547
    %v4549 = vpop.f32.mrb[0].mxu0
    %4550 = vmatprep.mubr.bf16.mxu0 %v1624
    %4551 = vmatmul.mubr.bf16.gmra.mrb[0].mxu0 %v1623
    %v4552 = vpop.f32.mrb[0].mxu0
    %v4553 = vadd.f32 %v4136, %v4552
    %v4554 = vpop.f32.mrb[0].mxu0
    %v4555 = vpop.f32.mrb[0].mxu0
    %v4556 = vadd.f32 %v4139, %v4555
    %v4557 = vpop.f32.mrb[0].mxu0
    %4558 = vdwg.mxu0
    %v4559 = vadd.f32 %v3164, %v4177
    %v4560 = vadd.f32 %v3165, %v4180
    %v4561 = vadd.f32 %v3166, %v4185
    %v4562 = vadd.f32 %v3167, %v4188
    %v4563 = vadd.f32 %v3168, %v4193
    %v4564 = vadd.f32 %v3169, %v4196
    %v4565 = vadd.f32 %v3170, %v4201
    %v4566 = vadd.f32 %v3171, %v4204
    %v4567 = vadd.f32 %v3172, %v4209
    %v4568 = vadd.f32 %v3173, %v4212
    %v4569 = vadd.f32 %v3174, %v4217
    %v4570 = vadd.f32 %v3175, %v4220
    %v4571 = vadd.f32 %v3176, %v4225
    %v4572 = vadd.f32 %v3177, %v4228
    %v4573 = vadd.f32 %v3178, %v4233
    %v4574 = vadd.f32 %v3179, %v4236
    %v4575 = vadd.f32 %v3180, %v4241
    %v4576 = vadd.f32 %v3181, %v4244
    %v4577 = vadd.f32 %v3182, %v4249
    %v4578 = vadd.f32 %v3183, %v4252
    %v4579 = vadd.f32 %v3184, %v4257
    %v4580 = vadd.f32 %v3185, %v4260
    %v4581 = vadd.f32 %v3186, %v4265
    %v4582 = vadd.f32 %v3187, %v4268
    %v4583 = vadd.f32 %v3188, %v4273
    %v4584 = vadd.f32 %v3189, %v4276
    %v4585 = vadd.f32 %v3190, %v4281
    %v4586 = vadd.f32 %v3191, %v4284
    %v4587 = vadd.f32 %v3192, %v4289
    %v4588 = vadd.f32 %v3193, %v4292
    %v4589 = vadd.f32 %v3194, %v4297
    %v4590 = vadd.f32 %v3195, %v4300
    %v4591 = vadd.f32 %v3196, %v4305
    %v4592 = vadd.f32 %v3197, %v4308
    %v4593 = vadd.f32 %v3198, %v4313
    %v4594 = vadd.f32 %v3199, %v4316
    %v4595 = vadd.f32 %v3200, %v4321
    %v4596 = vadd.f32 %v3201, %v4324
    %v4597 = vadd.f32 %v3202, %v4329
    %v4598 = vadd.f32 %v3203, %v4332
    %v4599 = vadd.f32 %v3204, %v4337
    %v4600 = vadd.f32 %v3205, %v4340
    %v4601 = vadd.f32 %v3206, %v4345
    %v4602 = vadd.f32 %v3207, %v4348
    %v4603 = vadd.f32 %v3208, %v4353
    %v4604 = vadd.f32 %v3209, %v4356
    %v4605 = vadd.f32 %v3210, %v4361
    %v4606 = vadd.f32 %v3211, %v4364
    %v4607 = vadd.f32 %v3212, %v4369
    %v4608 = vadd.f32 %v3213, %v4372
    %v4609 = vadd.f32 %v3214, %v4377
    %v4610 = vadd.f32 %v3215, %v4380
    %v4611 = vadd.f32 %v3216, %v4385
    %v4612 = vadd.f32 %v3217, %v4388
    %v4613 = vadd.f32 %v3218, %v4393
    %v4614 = vadd.f32 %v3219, %v4396
    %v4615 = vadd.f32 %v3220, %v4401
    %v4616 = vadd.f32 %v3221, %v4404
    %v4617 = vadd.f32 %v3222, %v4409
    %v4618 = vadd.f32 %v3223, %v4412
    %v4619 = vadd.f32 %v3224, %v4417
    %v4620 = vadd.f32 %v3225, %v4420
    %v4621 = vadd.f32 %v3226, %v4425
    %v4622 = vadd.f32 %v3227, %v4428
    %v4623 = vadd.f32 %v3228, %v4433
    %v4624 = vadd.f32 %v3229, %v4436
    %v4625 = vadd.f32 %v3230, %v4441
    %v4626 = vadd.f32 %v3231, %v4444
    %v4627 = vadd.f32 %v3232, %v4449
    %v4628 = vadd.f32 %v3233, %v4452
    %v4629 = vadd.f32 %v3234, %v4457
    %v4630 = vadd.f32 %v3235, %v4460
    %v4631 = vadd.f32 %v3236, %v4465
    %v4632 = vadd.f32 %v3237, %v4468
    %v4633 = vadd.f32 %v3238, %v4473
    %v4634 = vadd.f32 %v3239, %v4476
    %v4635 = vadd.f32 %v3240, %v4481
    %v4636 = vadd.f32 %v3241, %v4484
    %v4637 = vadd.f32 %v3242, %v4489
    %v4638 = vadd.f32 %v3243, %v4492
    %v4639 = vadd.f32 %v3244, %v4497
    %v4640 = vadd.f32 %v3245, %v4500
    %v4641 = vadd.f32 %v3246, %v4505
    %v4642 = vadd.f32 %v3247, %v4508
    %v4643 = vadd.f32 %v3248, %v4513
    %v4644 = vadd.f32 %v3249, %v4516
    %v4645 = vadd.f32 %v3250, %v4521
    %v4646 = vadd.f32 %v3251, %v4524
    %v4647 = vadd.f32 %v3252, %v4529
    %v4648 = vadd.f32 %v3253, %v4532
    %v4649 = vadd.f32 %v3254, %v4537
    %v4650 = vadd.f32 %v3255, %v4540
    %v4651 = vadd.f32 %v3256, %v4545
    %v4652 = vadd.f32 %v3257, %v4548
    %v4653 = vadd.f32 %v3258, %v4553
    %v4654 = vadd.f32 %v3259, %v4556
    %v4655 = vpack.c.bf16 %v4180, %v4177
    %v4656 = vpack.c.bf16 %v4188, %v4185
    %v4657 = vpack.c.bf16 %v4196, %v4193
    %v4658 = vpack.c.bf16 %v4204, %v4201
    %v4659 = vpack.c.bf16 %v4212, %v4209
    %v4660 = vpack.c.bf16 %v4220, %v4217
    %v4661 = vpack.c.bf16 %v4228, %v4225
    %v4662 = vpack.c.bf16 %v4236, %v4233
    %v4663 = vpack.c.bf16 %v4244, %v4241
    %v4664 = vpack.c.bf16 %v4252, %v4249
    %v4665 = vpack.c.bf16 %v4260, %v4257
    %v4666 = vpack.c.bf16 %v4268, %v4265
    %v4667 = vpack.c.bf16 %v4276, %v4273
    %v4668 = vpack.c.bf16 %v4284, %v4281
    %v4669 = vpack.c.bf16 %v4292, %v4289
    %v4670 = vpack.c.bf16 %v4300, %v4297
    %v4671 = vpack.c.bf16 %v4308, %v4305
    %v4672 = vpack.c.bf16 %v4316, %v4313
    %v4673 = vpack.c.bf16 %v4324, %v4321
    %v4674 = vpack.c.bf16 %v4332, %v4329
    %v4675 = vpack.c.bf16 %v4340, %v4337
    %v4676 = vpack.c.bf16 %v4348, %v4345
    %v4677 = vpack.c.bf16 %v4356, %v4353
    %v4678 = vpack.c.bf16 %v4364, %v4361
    %v4679 = vpack.c.bf16 %v4372, %v4369
    %v4680 = vpack.c.bf16 %v4380, %v4377
    %v4681 = vpack.c.bf16 %v4388, %v4385
    %v4682 = vpack.c.bf16 %v4396, %v4393
    %v4683 = vpack.c.bf16 %v4404, %v4401
    %v4684 = vpack.c.bf16 %v4412, %v4409
    %v4685 = vpack.c.bf16 %v4420, %v4417
    %v4686 = vpack.c.bf16 %v4428, %v4425
    %v4687 = vpack.c.bf16 %v4436, %v4433
    %v4688 = vpack.c.bf16 %v4444, %v4441
    %v4689 = vpack.c.bf16 %v4452, %v4449
    %v4690 = vpack.c.bf16 %v4460, %v4457
    %v4691 = vpack.c.bf16 %v4468, %v4465
    %v4692 = vpack.c.bf16 %v4476, %v4473
    %v4693 = vpack.c.bf16 %v4484, %v4481
    %v4694 = vpack.c.bf16 %v4492, %v4489
    %v4695 = vpack.c.bf16 %v4500, %v4497
    %v4696 = vpack.c.bf16 %v4508, %v4505
    %v4697 = vpack.c.bf16 %v4516, %v4513
    %v4698 = vpack.c.bf16 %v4524, %v4521
    %v4699 = vpack.c.bf16 %v4532, %v4529
    %v4700 = vpack.c.bf16 %v4540, %v4537
    %v4701 = vpack.c.bf16 %v4548, %v4545
    %v4702 = vpack.c.bf16 %v4556, %v4553
    %4703 = vmatprep.subr.bf16.mxu0 0
    %4704 = vmatpush1.bf16.msra.mxu0 %v4655
    %4705 = vmatprep.subr.bf16.mxu0 0
    %4706 = vmatpush1.bf16.msra.mxu0 %v4656
    %4707 = vmatprep.subr.bf16.mxu0 0
    %4708 = vmatpush1.bf16.msra.mxu0 %v4657
    %4709 = vmatprep.subr.bf16.mxu0 0
    %4710 = vmatpush1.bf16.msra.mxu0 %v4658
    %4711 = vmatprep.subr.bf16.mxu0 0
    %4712 = vmatpush1.bf16.msra.mxu0 %v4659
    %4713 = vmatprep.subr.bf16.mxu0 0
    %4714 = vmatpush1.bf16.msra.mxu0 %v4660
    %4715 = vmatprep.subr.bf16.mxu0 0
    %4716 = vmatpush1.bf16.msra.mxu0 %v4661
    %4717 = vmatprep.subr.bf16.mxu0 0
    %4718 = vmatpush1.bf16.msra.mxu0 %v4662
    %4719 = vmatprep.subr.bf16.mxu0 0
    %4720 = vmatpush1.bf16.msra.mxu0 %v4663
    %4721 = vmatprep.subr.bf16.mxu0 0
    %4722 = vmatpush1.bf16.msra.mxu0 %v4664
    %4723 = vmatprep.subr.bf16.mxu0 0
    %4724 = vmatpush1.bf16.msra.mxu0 %v4665
    %4725 = vmatprep.subr.bf16.mxu0 0
    %4726 = vmatpush1.bf16.msra.mxu0 %v4666
    %4727 = vmatprep.subr.bf16.mxu0 0
    %4728 = vmatpush1.bf16.msra.mxu0 %v4667
    %4729 = vmatprep.subr.bf16.mxu0 0
    %4730 = vmatpush1.bf16.msra.mxu0 %v4668
    %4731 = vmatprep.subr.bf16.mxu0 0
    %4732 = vmatpush1.bf16.msra.mxu0 %v4669
    %4733 = vmatprep.subr.bf16.mxu0 0
    %4734 = vmatpush1.bf16.msra.mxu0 %v4670
    %4735 = vmatprep.mubr.bf16.mxu0 %v1338
    %4736 = vmatmul.mubr.bf16.gmra.mrb[0].mxu0 %v1337
    %v4737 = vpop.f32.mrb[0].mxu0
    %v4738 = vadd.f32 0.0, %v4737
    %v4739 = vpop.f32.mrb[0].mxu0
    %v4740 = vpop.f32.mrb[0].mxu0
    %v4741 = vadd.f32 0.0, %v4740
    %v4742 = vpop.f32.mrb[0].mxu0
    %4743 = vmatprep.mubr.bf16.mxu0 %v1344
    %4744 = vmatmul.mubr.bf16.gmra.mrb[0].mxu0 %v1343
    %v4745 = vpop.f32.mrb[0].mxu0
    %v4746 = vadd.f32 0.0, %v4745
    %v4747 = vpop.f32.mrb[0].mxu0
    %v4748 = vpop.f32.mrb[0].mxu0
    %v4749 = vadd.f32 0.0, %v4748
    %v4750 = vpop.f32.mrb[0].mxu0
    %4751 = vmatprep.mubr.bf16.mxu0 %v1350
    %4752 = vmatmul.mubr.bf16.gmra.mrb[0].mxu0 %v1349
    %v4753 = vpop.f32.mrb[0].mxu0
    %v4754 = vadd.f32 0.0, %v4753
    %v4755 = vpop.f32.mrb[0].mxu0
    %v4756 = vpop.f32.mrb[0].mxu0
    %v4757 = vadd.f32 0.0, %v4756
    %v4758 = vpop.f32.mrb[0].mxu0
    %4759 = vmatprep.mubr.bf16.mxu0 %v1356
    %4760 = vmatmul.mubr.bf16.gmra.mrb[0].mxu0 %v1355
    %v4761 = vpop.f32.mrb[0].mxu0
    %v4762 = vadd.f32 0.0, %v4761
    %v4763 = vpop.f32.mrb[0].mxu0
    %v4764 = vpop.f32.mrb[0].mxu0
    %v4765 = vadd.f32 0.0, %v4764
    %v4766 = vpop.f32.mrb[0].mxu0
    %4767 = vmatprep.mubr.bf16.mxu0 %v1362
    %4768 = vmatmul.mubr.bf16.gmra.mrb[0].mxu0 %v1361
    %v4769 = vpop.f32.mrb[0].mxu0
    %v4770 = vadd.f32 0.0, %v4769
    %v4771 = vpop.f32.mrb[0].mxu0
    %v4772 = vpop.f32.mrb[0].mxu0
    %v4773 = vadd.f32 0.0, %v4772
    %v4774 = vpop.f32.mrb[0].mxu0
    %4775 = vmatprep.mubr.bf16.mxu0 %v1368
    %4776 = vmatmul.mubr.bf16.gmra.mrb[0].mxu0 %v1367
    %v4777 = vpop.f32.mrb[0].mxu0
    %v4778 = vadd.f32 0.0, %v4777
    %v4779 = vpop.f32.mrb[0].mxu0
    %v4780 = vpop.f32.mrb[0].mxu0
    %v4781 = vadd.f32 0.0, %v4780
    %v4782 = vpop.f32.mrb[0].mxu0
    %4783 = vmatprep.mubr.bf16.mxu0 %v1374
    %4784 = vmatmul.mubr.bf16.gmra.mrb[0].mxu0 %v1373
    %v4785 = vpop.f32.mrb[0].mxu0
    %v4786 = vadd.f32 0.0, %v4785
    %v4787 = vpop.f32.mrb[0].mxu0
    %v4788 = vpop.f32.mrb[0].mxu0
    %v4789 = vadd.f32 0.0, %v4788
    %v4790 = vpop.f32.mrb[0].mxu0
    %4791 = vmatprep.mubr.bf16.mxu0 %v1380
    %4792 = vmatmul.mubr.bf16.gmra.mrb[0].mxu0 %v1379
    %v4793 = vpop.f32.mrb[0].mxu0
    %v4794 = vadd.f32 0.0, %v4793
    %v4795 = vpop.f32.mrb[0].mxu0
    %v4796 = vpop.f32.mrb[0].mxu0
    %v4797 = vadd.f32 0.0, %v4796
    %v4798 = vpop.f32.mrb[0].mxu0
    %4799 = vmatprep.mubr.bf16.mxu0 %v1386
    %4800 = vmatmul.mubr.bf16.gmra.mrb[0].mxu0 %v1385
    %v4801 = vpop.f32.mrb[0].mxu0
    %v4802 = vadd.f32 0.0, %v4801
    %v4803 = vpop.f32.mrb[0].mxu0
    %v4804 = vpop.f32.mrb[0].mxu0
    %v4805 = vadd.f32 0.0, %v4804
    %v4806 = vpop.f32.mrb[0].mxu0
    %4807 = vmatprep.mubr.bf16.mxu0 %v1392
    %4808 = vmatmul.mubr.bf16.gmra.mrb[0].mxu0 %v1391
    %v4809 = vpop.f32.mrb[0].mxu0
    %v4810 = vadd.f32 0.0, %v4809
    %v4811 = vpop.f32.mrb[0].mxu0
    %v4812 = vpop.f32.mrb[0].mxu0
    %v4813 = vadd.f32 0.0, %v4812
    %v4814 = vpop.f32.mrb[0].mxu0
    %4815 = vmatprep.mubr.bf16.mxu0 %v1398
    %4816 = vmatmul.mubr.bf16.gmra.mrb[0].mxu0 %v1397
    %v4817 = vpop.f32.mrb[0].mxu0
    %v4818 = vadd.f32 0.0, %v4817
    %v4819 = vpop.f32.mrb[0].mxu0
    %v4820 = vpop.f32.mrb[0].mxu0
    %v4821 = vadd.f32 0.0, %v4820
    %v4822 = vpop.f32.mrb[0].mxu0
    %4823 = vmatprep.mubr.bf16.mxu0 %v1404
    %4824 = vmatmul.mubr.bf16.gmra.mrb[0].mxu0 %v1403
    %v4825 = vpop.f32.mrb[0].mxu0
    %v4826 = vadd.f32 0.0, %v4825
    %v4827 = vpop.f32.mrb[0].mxu0
    %v4828 = vpop.f32.mrb[0].mxu0
    %v4829 = vadd.f32 0.0, %v4828
    %v4830 = vpop.f32.mrb[0].mxu0
    %4831 = vmatprep.mubr.bf16.mxu0 %v1410
    %4832 = vmatmul.mubr.bf16.gmra.mrb[0].mxu0 %v1409
    %v4833 = vpop.f32.mrb[0].mxu0
    %v4834 = vadd.f32 0.0, %v4833
    %v4835 = vpop.f32.mrb[0].mxu0
    %v4836 = vpop.f32.mrb[0].mxu0
    %v4837 = vadd.f32 0.0, %v4836
    %v4838 = vpop.f32.mrb[0].mxu0
    %4839 = vmatprep.mubr.bf16.mxu0 %v1416
    %4840 = vmatmul.mubr.bf16.gmra.mrb[0].mxu0 %v1415
    %v4841 = vpop.f32.mrb[0].mxu0
    %v4842 = vadd.f32 0.0, %v4841
    %v4843 = vpop.f32.mrb[0].mxu0
    %v4844 = vpop.f32.mrb[0].mxu0
    %v4845 = vadd.f32 0.0, %v4844
    %v4846 = vpop.f32.mrb[0].mxu0
    %4847 = vmatprep.mubr.bf16.mxu0 %v1422
    %4848 = vmatmul.mubr.bf16.gmra.mrb[0].mxu0 %v1421
    %v4849 = vpop.f32.mrb[0].mxu0
    %v4850 = vadd.f32 0.0, %v4849
    %v4851 = vpop.f32.mrb[0].mxu0
    %v4852 = vpop.f32.mrb[0].mxu0
    %v4853 = vadd.f32 0.0, %v4852
    %v4854 = vpop.f32.mrb[0].mxu0
    %4855 = vmatprep.mubr.bf16.mxu0 %v1428
    %4856 = vmatmul.mubr.bf16.gmra.mrb[0].mxu0 %v1427
    %v4857 = vpop.f32.mrb[0].mxu0
    %v4858 = vadd.f32 0.0, %v4857
    %v4859 = vpop.f32.mrb[0].mxu0
    %v4860 = vpop.f32.mrb[0].mxu0
    %v4861 = vadd.f32 0.0, %v4860
    %v4862 = vpop.f32.mrb[0].mxu0
    %4863 = vmatprep.mubr.bf16.mxu0 %v1434
    %4864 = vmatmul.mubr.bf16.gmra.mrb[0].mxu0 %v1433
    %v4865 = vpop.f32.mrb[0].mxu0
    %v4866 = vadd.f32 0.0, %v4865
    %v4867 = vpop.f32.mrb[0].mxu0
    %v4868 = vpop.f32.mrb[0].mxu0
    %v4869 = vadd.f32 0.0, %v4868
    %v4870 = vpop.f32.mrb[0].mxu0
    %4871 = vmatprep.mubr.bf16.mxu0 %v1440
    %4872 = vmatmul.mubr.bf16.gmra.mrb[0].mxu0 %v1439
    %v4873 = vpop.f32.mrb[0].mxu0
    %v4874 = vadd.f32 0.0, %v4873
    %v4875 = vpop.f32.mrb[0].mxu0
    %v4876 = vpop.f32.mrb[0].mxu0
    %v4877 = vadd.f32 0.0, %v4876
    %v4878 = vpop.f32.mrb[0].mxu0
    %4879 = vmatprep.mubr.bf16.mxu0 %v1446
    %4880 = vmatmul.mubr.bf16.gmra.mrb[0].mxu0 %v1445
    %v4881 = vpop.f32.mrb[0].mxu0
    %v4882 = vadd.f32 0.0, %v4881
    %v4883 = vpop.f32.mrb[0].mxu0
    %v4884 = vpop.f32.mrb[0].mxu0
    %v4885 = vadd.f32 0.0, %v4884
    %v4886 = vpop.f32.mrb[0].mxu0
    %4887 = vmatprep.mubr.bf16.mxu0 %v1452
    %4888 = vmatmul.mubr.bf16.gmra.mrb[0].mxu0 %v1451
    %v4889 = vpop.f32.mrb[0].mxu0
    %v4890 = vadd.f32 0.0, %v4889
    %v4891 = vpop.f32.mrb[0].mxu0
    %v4892 = vpop.f32.mrb[0].mxu0
    %v4893 = vadd.f32 0.0, %v4892
    %v4894 = vpop.f32.mrb[0].mxu0
    %4895 = vmatprep.mubr.bf16.mxu0 %v1458
    %4896 = vmatmul.mubr.bf16.gmra.mrb[0].mxu0 %v1457
    %v4897 = vpop.f32.mrb[0].mxu0
    %v4898 = vadd.f32 0.0, %v4897
    %v4899 = vpop.f32.mrb[0].mxu0
    %v4900 = vpop.f32.mrb[0].mxu0
    %v4901 = vadd.f32 0.0, %v4900
    %v4902 = vpop.f32.mrb[0].mxu0
    %4903 = vmatprep.mubr.bf16.mxu0 %v1464
    %4904 = vmatmul.mubr.bf16.gmra.mrb[0].mxu0 %v1463
    %v4905 = vpop.f32.mrb[0].mxu0
    %v4906 = vadd.f32 0.0, %v4905
    %v4907 = vpop.f32.mrb[0].mxu0
    %v4908 = vpop.f32.mrb[0].mxu0
    %v4909 = vadd.f32 0.0, %v4908
    %v4910 = vpop.f32.mrb[0].mxu0
    %4911 = vmatprep.mubr.bf16.mxu0 %v1470
    %4912 = vmatmul.mubr.bf16.gmra.mrb[0].mxu0 %v1469
    %v4913 = vpop.f32.mrb[0].mxu0
    %v4914 = vadd.f32 0.0, %v4913
    %v4915 = vpop.f32.mrb[0].mxu0
    %v4916 = vpop.f32.mrb[0].mxu0
    %v4917 = vadd.f32 0.0, %v4916
    %v4918 = vpop.f32.mrb[0].mxu0
    %4919 = vmatprep.mubr.bf16.mxu0 %v1476
    %4920 = vmatmul.mubr.bf16.gmra.mrb[0].mxu0 %v1475
    %v4921 = vpop.f32.mrb[0].mxu0
    %v4922 = vadd.f32 0.0, %v4921
    %v4923 = vpop.f32.mrb[0].mxu0
    %v4924 = vpop.f32.mrb[0].mxu0
    %v4925 = vadd.f32 0.0, %v4924
    %v4926 = vpop.f32.mrb[0].mxu0
    %4927 = vmatprep.mubr.bf16.mxu0 %v1482
    %4928 = vmatmul.mubr.bf16.gmra.mrb[0].mxu0 %v1481
    %v4929 = vpop.f32.mrb[0].mxu0
    %v4930 = vadd.f32 0.0, %v4929
    %v4931 = vpop.f32.mrb[0].mxu0
    %v4932 = vpop.f32.mrb[0].mxu0
    %v4933 = vadd.f32 0.0, %v4932
    %v4934 = vpop.f32.mrb[0].mxu0
    %4935 = vmatprep.mubr.bf16.mxu0 %v1488
    %4936 = vmatmul.mubr.bf16.gmra.mrb[0].mxu0 %v1487
    %v4937 = vpop.f32.mrb[0].mxu0
    %v4938 = vadd.f32 0.0, %v4937
    %v4939 = vpop.f32.mrb[0].mxu0
    %v4940 = vpop.f32.mrb[0].mxu0
    %v4941 = vadd.f32 0.0, %v4940
    %v4942 = vpop.f32.mrb[0].mxu0
    %4943 = vmatprep.mubr.bf16.mxu0 %v1494
    %4944 = vmatmul.mubr.bf16.gmra.mrb[0].mxu0 %v1493
    %v4945 = vpop.f32.mrb[0].mxu0
    %v4946 = vadd.f32 0.0, %v4945
    %v4947 = vpop.f32.mrb[0].mxu0
    %v4948 = vpop.f32.mrb[0].mxu0
    %v4949 = vadd.f32 0.0, %v4948
    %v4950 = vpop.f32.mrb[0].mxu0
    %4951 = vmatprep.mubr.bf16.mxu0 %v1500
    %4952 = vmatmul.mubr.bf16.gmra.mrb[0].mxu0 %v1499
    %v4953 = vpop.f32.mrb[0].mxu0
    %v4954 = vadd.f32 0.0, %v4953
    %v4955 = vpop.f32.mrb[0].mxu0
    %v4956 = vpop.f32.mrb[0].mxu0
    %v4957 = vadd.f32 0.0, %v4956
    %v4958 = vpop.f32.mrb[0].mxu0
    %4959 = vmatprep.mubr.bf16.mxu0 %v1506
    %4960 = vmatmul.mubr.bf16.gmra.mrb[0].mxu0 %v1505
    %v4961 = vpop.f32.mrb[0].mxu0
    %v4962 = vadd.f32 0.0, %v4961
    %v4963 = vpop.f32.mrb[0].mxu0
    %v4964 = vpop.f32.mrb[0].mxu0
    %v4965 = vadd.f32 0.0, %v4964
    %v4966 = vpop.f32.mrb[0].mxu0
    %4967 = vmatprep.mubr.bf16.mxu0 %v1512
    %4968 = vmatmul.mubr.bf16.gmra.mrb[0].mxu0 %v1511
    %v4969 = vpop.f32.mrb[0].mxu0
    %v4970 = vadd.f32 0.0, %v4969
    %v4971 = vpop.f32.mrb[0].mxu0
    %v4972 = vpop.f32.mrb[0].mxu0
    %v4973 = vadd.f32 0.0, %v4972
    %v4974 = vpop.f32.mrb[0].mxu0
    %4975 = vmatprep.mubr.bf16.mxu0 %v1518
    %4976 = vmatmul.mubr.bf16.gmra.mrb[0].mxu0 %v1517
    %v4977 = vpop.f32.mrb[0].mxu0
    %v4978 = vadd.f32 0.0, %v4977
    %v4979 = vpop.f32.mrb[0].mxu0
    %v4980 = vpop.f32.mrb[0].mxu0
    %v4981 = vadd.f32 0.0, %v4980
    %v4982 = vpop.f32.mrb[0].mxu0
    %4983 = vmatprep.mubr.bf16.mxu0 %v1524
    %4984 = vmatmul.mubr.bf16.gmra.mrb[0].mxu0 %v1523
    %v4985 = vpop.f32.mrb[0].mxu0
    %v4986 = vadd.f32 0.0, %v4985
    %v4987 = vpop.f32.mrb[0].mxu0
    %v4988 = vpop.f32.mrb[0].mxu0
    %v4989 = vadd.f32 0.0, %v4988
    %v4990 = vpop.f32.mrb[0].mxu0
    %4991 = vmatprep.mubr.bf16.mxu0 %v1530
    %4992 = vmatmul.mubr.bf16.gmra.mrb[0].mxu0 %v1529
    %v4993 = vpop.f32.mrb[0].mxu0
    %v4994 = vadd.f32 0.0, %v4993
    %v4995 = vpop.f32.mrb[0].mxu0
    %v4996 = vpop.f32.mrb[0].mxu0
    %v4997 = vadd.f32 0.0, %v4996
    %v4998 = vpop.f32.mrb[0].mxu0
    %4999 = vmatprep.mubr.bf16.mxu0 %v1536
    %5000 = vmatmul.mubr.bf16.gmra.mrb[0].mxu0 %v1535
    %v5001 = vpop.f32.mrb[0].mxu0
    %v5002 = vadd.f32 0.0, %v5001
    %v5003 = vpop.f32.mrb[0].mxu0
    %v5004 = vpop.f32.mrb[0].mxu0
    %v5005 = vadd.f32 0.0, %v5004
    %v5006 = vpop.f32.mrb[0].mxu0
    %5007 = vmatprep.mubr.bf16.mxu0 %v1542
    %5008 = vmatmul.mubr.bf16.gmra.mrb[0].mxu0 %v1541
    %v5009 = vpop.f32.mrb[0].mxu0
    %v5010 = vadd.f32 0.0, %v5009
    %v5011 = vpop.f32.mrb[0].mxu0
    %v5012 = vpop.f32.mrb[0].mxu0
    %v5013 = vadd.f32 0.0, %v5012
    %v5014 = vpop.f32.mrb[0].mxu0
    %5015 = vmatprep.mubr.bf16.mxu0 %v1548
    %5016 = vmatmul.mubr.bf16.gmra.mrb[0].mxu0 %v1547
    %v5017 = vpop.f32.mrb[0].mxu0
    %v5018 = vadd.f32 0.0, %v5017
    %v5019 = vpop.f32.mrb[0].mxu0
    %v5020 = vpop.f32.mrb[0].mxu0
    %v5021 = vadd.f32 0.0, %v5020
    %v5022 = vpop.f32.mrb[0].mxu0
    %5023 = vmatprep.mubr.bf16.mxu0 %v1554
    %5024 = vmatmul.mubr.bf16.gmra.mrb[0].mxu0 %v1553
    %v5025 = vpop.f32.mrb[0].mxu0
    %v5026 = vadd.f32 0.0, %v5025
    %v5027 = vpop.f32.mrb[0].mxu0
    %v5028 = vpop.f32.mrb[0].mxu0
    %v5029 = vadd.f32 0.0, %v5028
    %v5030 = vpop.f32.mrb[0].mxu0
    %5031 = vmatprep.mubr.bf16.mxu0 %v1560
    %5032 = vmatmul.mubr.bf16.gmra.mrb[0].mxu0 %v1559
    %v5033 = vpop.f32.mrb[0].mxu0
    %v5034 = vadd.f32 0.0, %v5033
    %v5035 = vpop.f32.mrb[0].mxu0
    %v5036 = vpop.f32.mrb[0].mxu0
    %v5037 = vadd.f32 0.0, %v5036
    %v5038 = vpop.f32.mrb[0].mxu0
    %5039 = vmatprep.mubr.bf16.mxu0 %v1566
    %5040 = vmatmul.mubr.bf16.gmra.mrb[0].mxu0 %v1565
    %v5041 = vpop.f32.mrb[0].mxu0
    %v5042 = vadd.f32 0.0, %v5041
    %v5043 = vpop.f32.mrb[0].mxu0
    %v5044 = vpop.f32.mrb[0].mxu0
    %v5045 = vadd.f32 0.0, %v5044
    %v5046 = vpop.f32.mrb[0].mxu0
    %5047 = vmatprep.mubr.bf16.mxu0 %v1572
    %5048 = vmatmul.mubr.bf16.gmra.mrb[0].mxu0 %v1571
    %v5049 = vpop.f32.mrb[0].mxu0
    %v5050 = vadd.f32 0.0, %v5049
    %v5051 = vpop.f32.mrb[0].mxu0
    %v5052 = vpop.f32.mrb[0].mxu0
    %v5053 = vadd.f32 0.0, %v5052
    %v5054 = vpop.f32.mrb[0].mxu0
    %5055 = vmatprep.mubr.bf16.mxu0 %v1578
    %5056 = vmatmul.mubr.bf16.gmra.mrb[0].mxu0 %v1577
    %v5057 = vpop.f32.mrb[0].mxu0
    %v5058 = vadd.f32 0.0, %v5057
    %v5059 = vpop.f32.mrb[0].mxu0
    %v5060 = vpop.f32.mrb[0].mxu0
    %v5061 = vadd.f32 0.0, %v5060
    %v5062 = vpop.f32.mrb[0].mxu0
    %5063 = vmatprep.mubr.bf16.mxu0 %v1584
    %5064 = vmatmul.mubr.bf16.gmra.mrb[0].mxu0 %v1583
    %v5065 = vpop.f32.mrb[0].mxu0
    %v5066 = vadd.f32 0.0, %v5065
    %v5067 = vpop.f32.mrb[0].mxu0
    %v5068 = vpop.f32.mrb[0].mxu0
    %v5069 = vadd.f32 0.0, %v5068
    %v5070 = vpop.f32.mrb[0].mxu0
    %5071 = vmatprep.mubr.bf16.mxu0 %v1590
    %5072 = vmatmul.mubr.bf16.gmra.mrb[0].mxu0 %v1589
    %v5073 = vpop.f32.mrb[0].mxu0
    %v5074 = vadd.f32 0.0, %v5073
    %v5075 = vpop.f32.mrb[0].mxu0
    %v5076 = vpop.f32.mrb[0].mxu0
    %v5077 = vadd.f32 0.0, %v5076
    %v5078 = vpop.f32.mrb[0].mxu0
    %5079 = vmatprep.mubr.bf16.mxu0 %v1596
    %5080 = vmatmul.mubr.bf16.gmra.mrb[0].mxu0 %v1595
    %v5081 = vpop.f32.mrb[0].mxu0
    %v5082 = vadd.f32 0.0, %v5081
    %v5083 = vpop.f32.mrb[0].mxu0
    %v5084 = vpop.f32.mrb[0].mxu0
    %v5085 = vadd.f32 0.0, %v5084
    %v5086 = vpop.f32.mrb[0].mxu0
    %5087 = vmatprep.mubr.bf16.mxu0 %v1602
    %5088 = vmatmul.mubr.bf16.gmra.mrb[0].mxu0 %v1601
    %v5089 = vpop.f32.mrb[0].mxu0
    %v5090 = vadd.f32 0.0, %v5089
    %v5091 = vpop.f32.mrb[0].mxu0
    %v5092 = vpop.f32.mrb[0].mxu0
    %v5093 = vadd.f32 0.0, %v5092
    %v5094 = vpop.f32.mrb[0].mxu0
    %5095 = vmatprep.mubr.bf16.mxu0 %v1608
    %5096 = vmatmul.mubr.bf16.gmra.mrb[0].mxu0 %v1607
    %v5097 = vpop.f32.mrb[0].mxu0
    %v5098 = vadd.f32 0.0, %v5097
    %v5099 = vpop.f32.mrb[0].mxu0
    %v5100 = vpop.f32.mrb[0].mxu0
    %v5101 = vadd.f32 0.0, %v5100
    %v5102 = vpop.f32.mrb[0].mxu0
    %5103 = vmatprep.mubr.bf16.mxu0 %v1614
    %5104 = vmatmul.mubr.bf16.gmra.mrb[0].mxu0 %v1613
    %v5105 = vpop.f32.mrb[0].mxu0
    %v5106 = vadd.f32 0.0, %v5105
    %v5107 = vpop.f32.mrb[0].mxu0
    %v5108 = vpop.f32.mrb[0].mxu0
    %v5109 = vadd.f32 0.0, %v5108
    %v5110 = vpop.f32.mrb[0].mxu0
    %5111 = vmatprep.mubr.bf16.mxu0 %v1620
    %5112 = vmatmul.mubr.bf16.gmra.mrb[0].mxu0 %v1619
    %v5113 = vpop.f32.mrb[0].mxu0
    %v5114 = vadd.f32 0.0, %v5113
    %v5115 = vpop.f32.mrb[0].mxu0
    %v5116 = vpop.f32.mrb[0].mxu0
    %v5117 = vadd.f32 0.0, %v5116
    %v5118 = vpop.f32.mrb[0].mxu0
    %5119 = vdwg.mxu0
    %5120 = vmatprep.subr.bf16.mxu0 0
    %5121 = vmatpush1.bf16.msra.mxu0 %v4671
    %5122 = vmatprep.subr.bf16.mxu0 0
    %5123 = vmatpush1.bf16.msra.mxu0 %v4672
    %5124 = vmatprep.subr.bf16.mxu0 0
    %5125 = vmatpush1.bf16.msra.mxu0 %v4673
    %5126 = vmatprep.subr.bf16.mxu0 0
    %5127 = vmatpush1.bf16.msra.mxu0 %v4674
    %5128 = vmatprep.subr.bf16.mxu0 0
    %5129 = vmatpush1.bf16.msra.mxu0 %v4675
    %5130 = vmatprep.subr.bf16.mxu0 0
    %5131 = vmatpush1.bf16.msra.mxu0 %v4676
    %5132 = vmatprep.subr.bf16.mxu0 0
    %5133 = vmatpush1.bf16.msra.mxu0 %v4677
    %5134 = vmatprep.subr.bf16.mxu0 0
    %5135 = vmatpush1.bf16.msra.mxu0 %v4678
    %5136 = vmatprep.subr.bf16.mxu0 0
    %5137 = vmatpush1.bf16.msra.mxu0 %v4679
    %5138 = vmatprep.subr.bf16.mxu0 0
    %5139 = vmatpush1.bf16.msra.mxu0 %v4680
    %5140 = vmatprep.subr.bf16.mxu0 0
    %5141 = vmatpush1.bf16.msra.mxu0 %v4681
    %5142 = vmatprep.subr.bf16.mxu0 0
    %5143 = vmatpush1.bf16.msra.mxu0 %v4682
    %5144 = vmatprep.subr.bf16.mxu0 0
    %5145 = vmatpush1.bf16.msra.mxu0 %v4683
    %5146 = vmatprep.subr.bf16.mxu0 0
    %5147 = vmatpush1.bf16.msra.mxu0 %v4684
    %5148 = vmatprep.subr.bf16.mxu0 0
    %5149 = vmatpush1.bf16.msra.mxu0 %v4685
    %5150 = vmatprep.subr.bf16.mxu0 0
    %5151 = vmatpush1.bf16.msra.mxu0 %v4686
    %5152 = vmatprep.mubr.bf16.mxu0 %v1340
    %5153 = vmatmul.mubr.bf16.gmra.mrb[0].mxu0 %v1339
    %v5154 = vpop.f32.mrb[0].mxu0
    %v5155 = vadd.f32 %v4738, %v5154
    %v5156 = vpop.f32.mrb[0].mxu0
    %v5157 = vpop.f32.mrb[0].mxu0
    %v5158 = vadd.f32 %v4741, %v5157
    %v5159 = vpop.f32.mrb[0].mxu0
    %5160 = vmatprep.mubr.bf16.mxu0 %v1346
    %5161 = vmatmul.mubr.bf16.gmra.mrb[0].mxu0 %v1345
    %v5162 = vpop.f32.mrb[0].mxu0
    %v5163 = vadd.f32 %v4746, %v5162
    %v5164 = vpop.f32.mrb[0].mxu0
    %v5165 = vpop.f32.mrb[0].mxu0
    %v5166 = vadd.f32 %v4749, %v5165
    %v5167 = vpop.f32.mrb[0].mxu0
    %5168 = vmatprep.mubr.bf16.mxu0 %v1352
    %5169 = vmatmul.mubr.bf16.gmra.mrb[0].mxu0 %v1351
    %v5170 = vpop.f32.mrb[0].mxu0
    %v5171 = vadd.f32 %v4754, %v5170
    %v5172 = vpop.f32.mrb[0].mxu0
    %v5173 = vpop.f32.mrb[0].mxu0
    %v5174 = vadd.f32 %v4757, %v5173
    %v5175 = vpop.f32.mrb[0].mxu0
    %5176 = vmatprep.mubr.bf16.mxu0 %v1358
    %5177 = vmatmul.mubr.bf16.gmra.mrb[0].mxu0 %v1357
    %v5178 = vpop.f32.mrb[0].mxu0
    %v5179 = vadd.f32 %v4762, %v5178
    %v5180 = vpop.f32.mrb[0].mxu0
    %v5181 = vpop.f32.mrb[0].mxu0
    %v5182 = vadd.f32 %v4765, %v5181
    %v5183 = vpop.f32.mrb[0].mxu0
    %5184 = vmatprep.mubr.bf16.mxu0 %v1364
    %5185 = vmatmul.mubr.bf16.gmra.mrb[0].mxu0 %v1363
    %v5186 = vpop.f32.mrb[0].mxu0
    %v5187 = vadd.f32 %v4770, %v5186
    %v5188 = vpop.f32.mrb[0].mxu0
    %v5189 = vpop.f32.mrb[0].mxu0
    %v5190 = vadd.f32 %v4773, %v5189
    %v5191 = vpop.f32.mrb[0].mxu0
    %5192 = vmatprep.mubr.bf16.mxu0 %v1370
    %5193 = vmatmul.mubr.bf16.gmra.mrb[0].mxu0 %v1369
    %v5194 = vpop.f32.mrb[0].mxu0
    %v5195 = vadd.f32 %v4778, %v5194
    %v5196 = vpop.f32.mrb[0].mxu0
    %v5197 = vpop.f32.mrb[0].mxu0
    %v5198 = vadd.f32 %v4781, %v5197
    %v5199 = vpop.f32.mrb[0].mxu0
    %5200 = vmatprep.mubr.bf16.mxu0 %v1376
    %5201 = vmatmul.mubr.bf16.gmra.mrb[0].mxu0 %v1375
    %v5202 = vpop.f32.mrb[0].mxu0
    %v5203 = vadd.f32 %v4786, %v5202
    %v5204 = vpop.f32.mrb[0].mxu0
    %v5205 = vpop.f32.mrb[0].mxu0
    %v5206 = vadd.f32 %v4789, %v5205
    %v5207 = vpop.f32.mrb[0].mxu0
    %5208 = vmatprep.mubr.bf16.mxu0 %v1382
    %5209 = vmatmul.mubr.bf16.gmra.mrb[0].mxu0 %v1381
    %v5210 = vpop.f32.mrb[0].mxu0
    %v5211 = vadd.f32 %v4794, %v5210
    %v5212 = vpop.f32.mrb[0].mxu0
    %v5213 = vpop.f32.mrb[0].mxu0
    %v5214 = vadd.f32 %v4797, %v5213
    %v5215 = vpop.f32.mrb[0].mxu0
    %5216 = vmatprep.mubr.bf16.mxu0 %v1388
    %5217 = vmatmul.mubr.bf16.gmra.mrb[0].mxu0 %v1387
    %v5218 = vpop.f32.mrb[0].mxu0
    %v5219 = vadd.f32 %v4802, %v5218
    %v5220 = vpop.f32.mrb[0].mxu0
    %v5221 = vpop.f32.mrb[0].mxu0
    %v5222 = vadd.f32 %v4805, %v5221
    %v5223 = vpop.f32.mrb[0].mxu0
    %5224 = vmatprep.mubr.bf16.mxu0 %v1394
    %5225 = vmatmul.mubr.bf16.gmra.mrb[0].mxu0 %v1393
    %v5226 = vpop.f32.mrb[0].mxu0
    %v5227 = vadd.f32 %v4810, %v5226
    %v5228 = vpop.f32.mrb[0].mxu0
    %v5229 = vpop.f32.mrb[0].mxu0
    %v5230 = vadd.f32 %v4813, %v5229
    %v5231 = vpop.f32.mrb[0].mxu0
    %5232 = vmatprep.mubr.bf16.mxu0 %v1400
    %5233 = vmatmul.mubr.bf16.gmra.mrb[0].mxu0 %v1399
    %v5234 = vpop.f32.mrb[0].mxu0
    %v5235 = vadd.f32 %v4818, %v5234
    %v5236 = vpop.f32.mrb[0].mxu0
    %v5237 = vpop.f32.mrb[0].mxu0
    %v5238 = vadd.f32 %v4821, %v5237
    %v5239 = vpop.f32.mrb[0].mxu0
    %5240 = vmatprep.mubr.bf16.mxu0 %v1406
    %5241 = vmatmul.mubr.bf16.gmra.mrb[0].mxu0 %v1405
    %v5242 = vpop.f32.mrb[0].mxu0
    %v5243 = vadd.f32 %v4826, %v5242
    %v5244 = vpop.f32.mrb[0].mxu0
    %v5245 = vpop.f32.mrb[0].mxu0
    %v5246 = vadd.f32 %v4829, %v5245
    %v5247 = vpop.f32.mrb[0].mxu0
    %5248 = vmatprep.mubr.bf16.mxu0 %v1412
    %5249 = vmatmul.mubr.bf16.gmra.mrb[0].mxu0 %v1411
    %v5250 = vpop.f32.mrb[0].mxu0
    %v5251 = vadd.f32 %v4834, %v5250
    %v5252 = vpop.f32.mrb[0].mxu0
    %v5253 = vpop.f32.mrb[0].mxu0
    %v5254 = vadd.f32 %v4837, %v5253
    %v5255 = vpop.f32.mrb[0].mxu0
    %5256 = vmatprep.mubr.bf16.mxu0 %v1418
    %5257 = vmatmul.mubr.bf16.gmra.mrb[0].mxu0 %v1417
    %v5258 = vpop.f32.mrb[0].mxu0
    %v5259 = vadd.f32 %v4842, %v5258
    %v5260 = vpop.f32.mrb[0].mxu0
    %v5261 = vpop.f32.mrb[0].mxu0
    %v5262 = vadd.f32 %v4845, %v5261
    %v5263 = vpop.f32.mrb[0].mxu0
    %5264 = vmatprep.mubr.bf16.mxu0 %v1424
    %5265 = vmatmul.mubr.bf16.gmra.mrb[0].mxu0 %v1423
    %v5266 = vpop.f32.mrb[0].mxu0
    %v5267 = vadd.f32 %v4850, %v5266
    %v5268 = vpop.f32.mrb[0].mxu0
    %v5269 = vpop.f32.mrb[0].mxu0
    %v5270 = vadd.f32 %v4853, %v5269
    %v5271 = vpop.f32.mrb[0].mxu0
    %5272 = vmatprep.mubr.bf16.mxu0 %v1430
    %5273 = vmatmul.mubr.bf16.gmra.mrb[0].mxu0 %v1429
    %v5274 = vpop.f32.mrb[0].mxu0
    %v5275 = vadd.f32 %v4858, %v5274
    %v5276 = vpop.f32.mrb[0].mxu0
    %v5277 = vpop.f32.mrb[0].mxu0
    %v5278 = vadd.f32 %v4861, %v5277
    %v5279 = vpop.f32.mrb[0].mxu0
    %5280 = vmatprep.mubr.bf16.mxu0 %v1436
    %5281 = vmatmul.mubr.bf16.gmra.mrb[0].mxu0 %v1435
    %v5282 = vpop.f32.mrb[0].mxu0
    %v5283 = vadd.f32 %v4866, %v5282
    %v5284 = vpop.f32.mrb[0].mxu0
    %v5285 = vpop.f32.mrb[0].mxu0
    %v5286 = vadd.f32 %v4869, %v5285
    %v5287 = vpop.f32.mrb[0].mxu0
    %5288 = vmatprep.mubr.bf16.mxu0 %v1442
    %5289 = vmatmul.mubr.bf16.gmra.mrb[0].mxu0 %v1441
    %v5290 = vpop.f32.mrb[0].mxu0
    %v5291 = vadd.f32 %v4874, %v5290
    %v5292 = vpop.f32.mrb[0].mxu0
    %v5293 = vpop.f32.mrb[0].mxu0
    %v5294 = vadd.f32 %v4877, %v5293
    %v5295 = vpop.f32.mrb[0].mxu0
    %5296 = vmatprep.mubr.bf16.mxu0 %v1448
    %5297 = vmatmul.mubr.bf16.gmra.mrb[0].mxu0 %v1447
    %v5298 = vpop.f32.mrb[0].mxu0
    %v5299 = vadd.f32 %v4882, %v5298
    %v5300 = vpop.f32.mrb[0].mxu0
    %v5301 = vpop.f32.mrb[0].mxu0
    %v5302 = vadd.f32 %v4885, %v5301
    %v5303 = vpop.f32.mrb[0].mxu0
    %5304 = vmatprep.mubr.bf16.mxu0 %v1454
    %5305 = vmatmul.mubr.bf16.gmra.mrb[0].mxu0 %v1453
    %v5306 = vpop.f32.mrb[0].mxu0
    %v5307 = vadd.f32 %v4890, %v5306
    %v5308 = vpop.f32.mrb[0].mxu0
    %v5309 = vpop.f32.mrb[0].mxu0
    %v5310 = vadd.f32 %v4893, %v5309
    %v5311 = vpop.f32.mrb[0].mxu0
    %5312 = vmatprep.mubr.bf16.mxu0 %v1460
    %5313 = vmatmul.mubr.bf16.gmra.mrb[0].mxu0 %v1459
    %v5314 = vpop.f32.mrb[0].mxu0
    %v5315 = vadd.f32 %v4898, %v5314
    %v5316 = vpop.f32.mrb[0].mxu0
    %v5317 = vpop.f32.mrb[0].mxu0
    %v5318 = vadd.f32 %v4901, %v5317
    %v5319 = vpop.f32.mrb[0].mxu0
    %5320 = vmatprep.mubr.bf16.mxu0 %v1466
    %5321 = vmatmul.mubr.bf16.gmra.mrb[0].mxu0 %v1465
    %v5322 = vpop.f32.mrb[0].mxu0
    %v5323 = vadd.f32 %v4906, %v5322
    %v5324 = vpop.f32.mrb[0].mxu0
    %v5325 = vpop.f32.mrb[0].mxu0
    %v5326 = vadd.f32 %v4909, %v5325
    %v5327 = vpop.f32.mrb[0].mxu0
    %5328 = vmatprep.mubr.bf16.mxu0 %v1472
    %5329 = vmatmul.mubr.bf16.gmra.mrb[0].mxu0 %v1471
    %v5330 = vpop.f32.mrb[0].mxu0
    %v5331 = vadd.f32 %v4914, %v5330
    %v5332 = vpop.f32.mrb[0].mxu0
    %v5333 = vpop.f32.mrb[0].mxu0
    %v5334 = vadd.f32 %v4917, %v5333
    %v5335 = vpop.f32.mrb[0].mxu0
    %5336 = vmatprep.mubr.bf16.mxu0 %v1478
    %5337 = vmatmul.mubr.bf16.gmra.mrb[0].mxu0 %v1477
    %v5338 = vpop.f32.mrb[0].mxu0
    %v5339 = vadd.f32 %v4922, %v5338
    %v5340 = vpop.f32.mrb[0].mxu0
    %v5341 = vpop.f32.mrb[0].mxu0
    %v5342 = vadd.f32 %v4925, %v5341
    %v5343 = vpop.f32.mrb[0].mxu0
    %5344 = vmatprep.mubr.bf16.mxu0 %v1484
    %5345 = vmatmul.mubr.bf16.gmra.mrb[0].mxu0 %v1483
    %v5346 = vpop.f32.mrb[0].mxu0
    %v5347 = vadd.f32 %v4930, %v5346
    %v5348 = vpop.f32.mrb[0].mxu0
    %v5349 = vpop.f32.mrb[0].mxu0
    %v5350 = vadd.f32 %v4933, %v5349
    %v5351 = vpop.f32.mrb[0].mxu0
    %5352 = vmatprep.mubr.bf16.mxu0 %v1490
    %5353 = vmatmul.mubr.bf16.gmra.mrb[0].mxu0 %v1489
    %v5354 = vpop.f32.mrb[0].mxu0
    %v5355 = vadd.f32 %v4938, %v5354
    %v5356 = vpop.f32.mrb[0].mxu0
    %v5357 = vpop.f32.mrb[0].mxu0
    %v5358 = vadd.f32 %v4941, %v5357
    %v5359 = vpop.f32.mrb[0].mxu0
    %5360 = vmatprep.mubr.bf16.mxu0 %v1496
    %5361 = vmatmul.mubr.bf16.gmra.mrb[0].mxu0 %v1495
    %v5362 = vpop.f32.mrb[0].mxu0
    %v5363 = vadd.f32 %v4946, %v5362
    %v5364 = vpop.f32.mrb[0].mxu0
    %v5365 = vpop.f32.mrb[0].mxu0
    %v5366 = vadd.f32 %v4949, %v5365
    %v5367 = vpop.f32.mrb[0].mxu0
    %5368 = vmatprep.mubr.bf16.mxu0 %v1502
    %5369 = vmatmul.mubr.bf16.gmra.mrb[0].mxu0 %v1501
    %v5370 = vpop.f32.mrb[0].mxu0
    %v5371 = vadd.f32 %v4954, %v5370
    %v5372 = vpop.f32.mrb[0].mxu0
    %v5373 = vpop.f32.mrb[0].mxu0
    %v5374 = vadd.f32 %v4957, %v5373
    %v5375 = vpop.f32.mrb[0].mxu0
    %5376 = vmatprep.mubr.bf16.mxu0 %v1508
    %5377 = vmatmul.mubr.bf16.gmra.mrb[0].mxu0 %v1507
    %v5378 = vpop.f32.mrb[0].mxu0
    %v5379 = vadd.f32 %v4962, %v5378
    %v5380 = vpop.f32.mrb[0].mxu0
    %v5381 = vpop.f32.mrb[0].mxu0
    %v5382 = vadd.f32 %v4965, %v5381
    %v5383 = vpop.f32.mrb[0].mxu0
    %5384 = vmatprep.mubr.bf16.mxu0 %v1514
    %5385 = vmatmul.mubr.bf16.gmra.mrb[0].mxu0 %v1513
    %v5386 = vpop.f32.mrb[0].mxu0
    %v5387 = vadd.f32 %v4970, %v5386
    %v5388 = vpop.f32.mrb[0].mxu0
    %v5389 = vpop.f32.mrb[0].mxu0
    %v5390 = vadd.f32 %v4973, %v5389
    %v5391 = vpop.f32.mrb[0].mxu0
    %5392 = vmatprep.mubr.bf16.mxu0 %v1520
    %5393 = vmatmul.mubr.bf16.gmra.mrb[0].mxu0 %v1519
    %v5394 = vpop.f32.mrb[0].mxu0
    %v5395 = vadd.f32 %v4978, %v5394
    %v5396 = vpop.f32.mrb[0].mxu0
    %v5397 = vpop.f32.mrb[0].mxu0
    %v5398 = vadd.f32 %v4981, %v5397
    %v5399 = vpop.f32.mrb[0].mxu0
    %5400 = vmatprep.mubr.bf16.mxu0 %v1526
    %5401 = vmatmul.mubr.bf16.gmra.mrb[0].mxu0 %v1525
    %v5402 = vpop.f32.mrb[0].mxu0
    %v5403 = vadd.f32 %v4986, %v5402
    %v5404 = vpop.f32.mrb[0].mxu0
    %v5405 = vpop.f32.mrb[0].mxu0
    %v5406 = vadd.f32 %v4989, %v5405
    %v5407 = vpop.f32.mrb[0].mxu0
    %5408 = vmatprep.mubr.bf16.mxu0 %v1532
    %5409 = vmatmul.mubr.bf16.gmra.mrb[0].mxu0 %v1531
    %v5410 = vpop.f32.mrb[0].mxu0
    %v5411 = vadd.f32 %v4994, %v5410
    %v5412 = vpop.f32.mrb[0].mxu0
    %v5413 = vpop.f32.mrb[0].mxu0
    %v5414 = vadd.f32 %v4997, %v5413
    %v5415 = vpop.f32.mrb[0].mxu0
    %5416 = vmatprep.mubr.bf16.mxu0 %v1538
    %5417 = vmatmul.mubr.bf16.gmra.mrb[0].mxu0 %v1537
    %v5418 = vpop.f32.mrb[0].mxu0
    %v5419 = vadd.f32 %v5002, %v5418
    %v5420 = vpop.f32.mrb[0].mxu0
    %v5421 = vpop.f32.mrb[0].mxu0
    %v5422 = vadd.f32 %v5005, %v5421
    %v5423 = vpop.f32.mrb[0].mxu0
    %5424 = vmatprep.mubr.bf16.mxu0 %v1544
    %5425 = vmatmul.mubr.bf16.gmra.mrb[0].mxu0 %v1543
    %v5426 = vpop.f32.mrb[0].mxu0
    %v5427 = vadd.f32 %v5010, %v5426
    %v5428 = vpop.f32.mrb[0].mxu0
    %v5429 = vpop.f32.mrb[0].mxu0
    %v5430 = vadd.f32 %v5013, %v5429
    %v5431 = vpop.f32.mrb[0].mxu0
    %5432 = vmatprep.mubr.bf16.mxu0 %v1550
    %5433 = vmatmul.mubr.bf16.gmra.mrb[0].mxu0 %v1549
    %v5434 = vpop.f32.mrb[0].mxu0
    %v5435 = vadd.f32 %v5018, %v5434
    %v5436 = vpop.f32.mrb[0].mxu0
    %v5437 = vpop.f32.mrb[0].mxu0
    %v5438 = vadd.f32 %v5021, %v5437
    %v5439 = vpop.f32.mrb[0].mxu0
    %5440 = vmatprep.mubr.bf16.mxu0 %v1556
    %5441 = vmatmul.mubr.bf16.gmra.mrb[0].mxu0 %v1555
    %v5442 = vpop.f32.mrb[0].mxu0
    %v5443 = vadd.f32 %v5026, %v5442
    %v5444 = vpop.f32.mrb[0].mxu0
    %v5445 = vpop.f32.mrb[0].mxu0
    %v5446 = vadd.f32 %v5029, %v5445
    %v5447 = vpop.f32.mrb[0].mxu0
    %5448 = vmatprep.mubr.bf16.mxu0 %v1562
    %5449 = vmatmul.mubr.bf16.gmra.mrb[0].mxu0 %v1561
    %v5450 = vpop.f32.mrb[0].mxu0
    %v5451 = vadd.f32 %v5034, %v5450
    %v5452 = vpop.f32.mrb[0].mxu0
    %v5453 = vpop.f32.mrb[0].mxu0
    %v5454 = vadd.f32 %v5037, %v5453
    %v5455 = vpop.f32.mrb[0].mxu0
    %5456 = vmatprep.mubr.bf16.mxu0 %v1568
    %5457 = vmatmul.mubr.bf16.gmra.mrb[0].mxu0 %v1567
    %v5458 = vpop.f32.mrb[0].mxu0
    %v5459 = vadd.f32 %v5042, %v5458
    %v5460 = vpop.f32.mrb[0].mxu0
    %v5461 = vpop.f32.mrb[0].mxu0
    %v5462 = vadd.f32 %v5045, %v5461
    %v5463 = vpop.f32.mrb[0].mxu0
    %5464 = vmatprep.mubr.bf16.mxu0 %v1574
    %5465 = vmatmul.mubr.bf16.gmra.mrb[0].mxu0 %v1573
    %v5466 = vpop.f32.mrb[0].mxu0
    %v5467 = vadd.f32 %v5050, %v5466
    %v5468 = vpop.f32.mrb[0].mxu0
    %v5469 = vpop.f32.mrb[0].mxu0
    %v5470 = vadd.f32 %v5053, %v5469
    %v5471 = vpop.f32.mrb[0].mxu0
    %5472 = vmatprep.mubr.bf16.mxu0 %v1580
    %5473 = vmatmul.mubr.bf16.gmra.mrb[0].mxu0 %v1579
    %v5474 = vpop.f32.mrb[0].mxu0
    %v5475 = vadd.f32 %v5058, %v5474
    %v5476 = vpop.f32.mrb[0].mxu0
    %v5477 = vpop.f32.mrb[0].mxu0
    %v5478 = vadd.f32 %v5061, %v5477
    %v5479 = vpop.f32.mrb[0].mxu0
    %5480 = vmatprep.mubr.bf16.mxu0 %v1586
    %5481 = vmatmul.mubr.bf16.gmra.mrb[0].mxu0 %v1585
    %v5482 = vpop.f32.mrb[0].mxu0
    %v5483 = vadd.f32 %v5066, %v5482
    %v5484 = vpop.f32.mrb[0].mxu0
    %v5485 = vpop.f32.mrb[0].mxu0
    %v5486 = vadd.f32 %v5069, %v5485
    %v5487 = vpop.f32.mrb[0].mxu0
    %5488 = vmatprep.mubr.bf16.mxu0 %v1592
    %5489 = vmatmul.mubr.bf16.gmra.mrb[0].mxu0 %v1591
    %v5490 = vpop.f32.mrb[0].mxu0
    %v5491 = vadd.f32 %v5074, %v5490
    %v5492 = vpop.f32.mrb[0].mxu0
    %v5493 = vpop.f32.mrb[0].mxu0
    %v5494 = vadd.f32 %v5077, %v5493
    %v5495 = vpop.f32.mrb[0].mxu0
    %5496 = vmatprep.mubr.bf16.mxu0 %v1598
    %5497 = vmatmul.mubr.bf16.gmra.mrb[0].mxu0 %v1597
    %v5498 = vpop.f32.mrb[0].mxu0
    %v5499 = vadd.f32 %v5082, %v5498
    %v5500 = vpop.f32.mrb[0].mxu0
    %v5501 = vpop.f32.mrb[0].mxu0
    %v5502 = vadd.f32 %v5085, %v5501
    %v5503 = vpop.f32.mrb[0].mxu0
    %5504 = vmatprep.mubr.bf16.mxu0 %v1604
    %5505 = vmatmul.mubr.bf16.gmra.mrb[0].mxu0 %v1603
    %v5506 = vpop.f32.mrb[0].mxu0
    %v5507 = vadd.f32 %v5090, %v5506
    %v5508 = vpop.f32.mrb[0].mxu0
    %v5509 = vpop.f32.mrb[0].mxu0
    %v5510 = vadd.f32 %v5093, %v5509
    %v5511 = vpop.f32.mrb[0].mxu0
    %5512 = vmatprep.mubr.bf16.mxu0 %v1610
    %5513 = vmatmul.mubr.bf16.gmra.mrb[0].mxu0 %v1609
    %v5514 = vpop.f32.mrb[0].mxu0
    %v5515 = vadd.f32 %v5098, %v5514
    %v5516 = vpop.f32.mrb[0].mxu0
    %v5517 = vpop.f32.mrb[0].mxu0
    %v5518 = vadd.f32 %v5101, %v5517
    %v5519 = vpop.f32.mrb[0].mxu0
    %5520 = vmatprep.mubr.bf16.mxu0 %v1616
    %5521 = vmatmul.mubr.bf16.gmra.mrb[0].mxu0 %v1615
    %v5522 = vpop.f32.mrb[0].mxu0
    %v5523 = vadd.f32 %v5106, %v5522
    %v5524 = vpop.f32.mrb[0].mxu0
    %v5525 = vpop.f32.mrb[0].mxu0
    %v5526 = vadd.f32 %v5109, %v5525
    %v5527 = vpop.f32.mrb[0].mxu0
    %5528 = vmatprep.mubr.bf16.mxu0 %v1622
    %5529 = vmatmul.mubr.bf16.gmra.mrb[0].mxu0 %v1621
    %v5530 = vpop.f32.mrb[0].mxu0
    %v5531 = vadd.f32 %v5114, %v5530
    %v5532 = vpop.f32.mrb[0].mxu0
    %v5533 = vpop.f32.mrb[0].mxu0
    %v5534 = vadd.f32 %v5117, %v5533
    %v5535 = vpop.f32.mrb[0].mxu0
    %5536 = vdwg.mxu0
    %5537 = vmatprep.subr.bf16.mxu0 0
    %5538 = vmatpush1.bf16.msra.mxu0 %v4687
    %5539 = vmatprep.subr.bf16.mxu0 0
    %5540 = vmatpush1.bf16.msra.mxu0 %v4688
    %5541 = vmatprep.subr.bf16.mxu0 0
    %5542 = vmatpush1.bf16.msra.mxu0 %v4689
    %5543 = vmatprep.subr.bf16.mxu0 0
    %5544 = vmatpush1.bf16.msra.mxu0 %v4690
    %5545 = vmatprep.subr.bf16.mxu0 0
    %5546 = vmatpush1.bf16.msra.mxu0 %v4691
    %5547 = vmatprep.subr.bf16.mxu0 0
    %5548 = vmatpush1.bf16.msra.mxu0 %v4692
    %5549 = vmatprep.subr.bf16.mxu0 0
    %5550 = vmatpush1.bf16.msra.mxu0 %v4693
    %5551 = vmatprep.subr.bf16.mxu0 0
    %5552 = vmatpush1.bf16.msra.mxu0 %v4694
    %5553 = vmatprep.subr.bf16.mxu0 0
    %5554 = vmatpush1.bf16.msra.mxu0 %v4695
    %5555 = vmatprep.subr.bf16.mxu0 0
    %5556 = vmatpush1.bf16.msra.mxu0 %v4696
    %5557 = vmatprep.subr.bf16.mxu0 0
    %5558 = vmatpush1.bf16.msra.mxu0 %v4697
    %5559 = vmatprep.subr.bf16.mxu0 0
    %5560 = vmatpush1.bf16.msra.mxu0 %v4698
    %5561 = vmatprep.subr.bf16.mxu0 0
    %5562 = vmatpush1.bf16.msra.mxu0 %v4699
    %5563 = vmatprep.subr.bf16.mxu0 0
    %5564 = vmatpush1.bf16.msra.mxu0 %v4700
    %5565 = vmatprep.subr.bf16.mxu0 0
    %5566 = vmatpush1.bf16.msra.mxu0 %v4701
    %5567 = vmatprep.subr.bf16.mxu0 0
    %5568 = vmatpush1.bf16.msra.mxu0 %v4702
    %5569 = vmatprep.mubr.bf16.mxu0 %v1342
    %5570 = vmatmul.mubr.bf16.gmra.mrb[0].mxu0 %v1341
    %v5571 = vpop.f32.mrb[0].mxu0
    %v5572 = vadd.f32 %v5155, %v5571
    %v5573 = vpop.f32.mrb[0].mxu0
    %v5574 = vpop.f32.mrb[0].mxu0
    %v5575 = vadd.f32 %v5158, %v5574
    %v5576 = vpop.f32.mrb[0].mxu0
    %5577 = vmatprep.mubr.bf16.mxu0 %v1348
    %5578 = vmatmul.mubr.bf16.gmra.mrb[0].mxu0 %v1347
    %v5579 = vpop.f32.mrb[0].mxu0
    %v5580 = vadd.f32 %v5163, %v5579
    %v5581 = vpop.f32.mrb[0].mxu0
    %v5582 = vpop.f32.mrb[0].mxu0
    %v5583 = vadd.f32 %v5166, %v5582
    %v5584 = vpop.f32.mrb[0].mxu0
    %5585 = vmatprep.mubr.bf16.mxu0 %v1354
    %5586 = vmatmul.mubr.bf16.gmra.mrb[0].mxu0 %v1353
    %v5587 = vpop.f32.mrb[0].mxu0
    %v5588 = vadd.f32 %v5171, %v5587
    %v5589 = vpop.f32.mrb[0].mxu0
    %v5590 = vpop.f32.mrb[0].mxu0
    %v5591 = vadd.f32 %v5174, %v5590
    %v5592 = vpop.f32.mrb[0].mxu0
    %5593 = vmatprep.mubr.bf16.mxu0 %v1360
    %5594 = vmatmul.mubr.bf16.gmra.mrb[0].mxu0 %v1359
    %v5595 = vpop.f32.mrb[0].mxu0
    %v5596 = vadd.f32 %v5179, %v5595
    %v5597 = vpop.f32.mrb[0].mxu0
    %v5598 = vpop.f32.mrb[0].mxu0
    %v5599 = vadd.f32 %v5182, %v5598
    %v5600 = vpop.f32.mrb[0].mxu0
    %5601 = vmatprep.mubr.bf16.mxu0 %v1366
    %5602 = vmatmul.mubr.bf16.gmra.mrb[0].mxu0 %v1365
    %v5603 = vpop.f32.mrb[0].mxu0
    %v5604 = vadd.f32 %v5187, %v5603
    %v5605 = vpop.f32.mrb[0].mxu0
    %v5606 = vpop.f32.mrb[0].mxu0
    %v5607 = vadd.f32 %v5190, %v5606
    %v5608 = vpop.f32.mrb[0].mxu0
    %5609 = vmatprep.mubr.bf16.mxu0 %v1372
    %5610 = vmatmul.mubr.bf16.gmra.mrb[0].mxu0 %v1371
    %v5611 = vpop.f32.mrb[0].mxu0
    %v5612 = vadd.f32 %v5195, %v5611
    %v5613 = vpop.f32.mrb[0].mxu0
    %v5614 = vpop.f32.mrb[0].mxu0
    %v5615 = vadd.f32 %v5198, %v5614
    %v5616 = vpop.f32.mrb[0].mxu0
    %5617 = vmatprep.mubr.bf16.mxu0 %v1378
    %5618 = vmatmul.mubr.bf16.gmra.mrb[0].mxu0 %v1377
    %v5619 = vpop.f32.mrb[0].mxu0
    %v5620 = vadd.f32 %v5203, %v5619
    %v5621 = vpop.f32.mrb[0].mxu0
    %v5622 = vpop.f32.mrb[0].mxu0
    %v5623 = vadd.f32 %v5206, %v5622
    %v5624 = vpop.f32.mrb[0].mxu0
    %5625 = vmatprep.mubr.bf16.mxu0 %v1384
    %5626 = vmatmul.mubr.bf16.gmra.mrb[0].mxu0 %v1383
    %v5627 = vpop.f32.mrb[0].mxu0
    %v5628 = vadd.f32 %v5211, %v5627
    %v5629 = vpop.f32.mrb[0].mxu0
    %v5630 = vpop.f32.mrb[0].mxu0
    %v5631 = vadd.f32 %v5214, %v5630
    %v5632 = vpop.f32.mrb[0].mxu0
    %5633 = vmatprep.mubr.bf16.mxu0 %v1390
    %5634 = vmatmul.mubr.bf16.gmra.mrb[0].mxu0 %v1389
    %v5635 = vpop.f32.mrb[0].mxu0
    %v5636 = vadd.f32 %v5219, %v5635
    %v5637 = vpop.f32.mrb[0].mxu0
    %v5638 = vpop.f32.mrb[0].mxu0
    %v5639 = vadd.f32 %v5222, %v5638
    %v5640 = vpop.f32.mrb[0].mxu0
    %5641 = vmatprep.mubr.bf16.mxu0 %v1396
    %5642 = vmatmul.mubr.bf16.gmra.mrb[0].mxu0 %v1395
    %v5643 = vpop.f32.mrb[0].mxu0
    %v5644 = vadd.f32 %v5227, %v5643
    %v5645 = vpop.f32.mrb[0].mxu0
    %v5646 = vpop.f32.mrb[0].mxu0
    %v5647 = vadd.f32 %v5230, %v5646
    %v5648 = vpop.f32.mrb[0].mxu0
    %5649 = vmatprep.mubr.bf16.mxu0 %v1402
    %5650 = vmatmul.mubr.bf16.gmra.mrb[0].mxu0 %v1401
    %v5651 = vpop.f32.mrb[0].mxu0
    %v5652 = vadd.f32 %v5235, %v5651
    %v5653 = vpop.f32.mrb[0].mxu0
    %v5654 = vpop.f32.mrb[0].mxu0
    %v5655 = vadd.f32 %v5238, %v5654
    %v5656 = vpop.f32.mrb[0].mxu0
    %5657 = vmatprep.mubr.bf16.mxu0 %v1408
    %5658 = vmatmul.mubr.bf16.gmra.mrb[0].mxu0 %v1407
    %v5659 = vpop.f32.mrb[0].mxu0
    %v5660 = vadd.f32 %v5243, %v5659
    %v5661 = vpop.f32.mrb[0].mxu0
    %v5662 = vpop.f32.mrb[0].mxu0
    %v5663 = vadd.f32 %v5246, %v5662
    %v5664 = vpop.f32.mrb[0].mxu0
    %5665 = vmatprep.mubr.bf16.mxu0 %v1414
    %5666 = vmatmul.mubr.bf16.gmra.mrb[0].mxu0 %v1413
    %v5667 = vpop.f32.mrb[0].mxu0
    %v5668 = vadd.f32 %v5251, %v5667
    %v5669 = vpop.f32.mrb[0].mxu0
    %v5670 = vpop.f32.mrb[0].mxu0
    %v5671 = vadd.f32 %v5254, %v5670
    %v5672 = vpop.f32.mrb[0].mxu0
    %5673 = vmatprep.mubr.bf16.mxu0 %v1420
    %5674 = vmatmul.mubr.bf16.gmra.mrb[0].mxu0 %v1419
    %v5675 = vpop.f32.mrb[0].mxu0
    %v5676 = vadd.f32 %v5259, %v5675
    %v5677 = vpop.f32.mrb[0].mxu0
    %v5678 = vpop.f32.mrb[0].mxu0
    %v5679 = vadd.f32 %v5262, %v5678
    %v5680 = vpop.f32.mrb[0].mxu0
    %5681 = vmatprep.mubr.bf16.mxu0 %v1426
    %5682 = vmatmul.mubr.bf16.gmra.mrb[0].mxu0 %v1425
    %v5683 = vpop.f32.mrb[0].mxu0
    %v5684 = vadd.f32 %v5267, %v5683
    %v5685 = vpop.f32.mrb[0].mxu0
    %v5686 = vpop.f32.mrb[0].mxu0
    %v5687 = vadd.f32 %v5270, %v5686
    %v5688 = vpop.f32.mrb[0].mxu0
    %5689 = vmatprep.mubr.bf16.mxu0 %v1432
    %5690 = vmatmul.mubr.bf16.gmra.mrb[0].mxu0 %v1431
    %v5691 = vpop.f32.mrb[0].mxu0
    %v5692 = vadd.f32 %v5275, %v5691
    %v5693 = vpop.f32.mrb[0].mxu0
    %v5694 = vpop.f32.mrb[0].mxu0
    %v5695 = vadd.f32 %v5278, %v5694
    %v5696 = vpop.f32.mrb[0].mxu0
    %5697 = vmatprep.mubr.bf16.mxu0 %v1438
    %5698 = vmatmul.mubr.bf16.gmra.mrb[0].mxu0 %v1437
    %v5699 = vpop.f32.mrb[0].mxu0
    %v5700 = vadd.f32 %v5283, %v5699
    %v5701 = vpop.f32.mrb[0].mxu0
    %v5702 = vpop.f32.mrb[0].mxu0
    %v5703 = vadd.f32 %v5286, %v5702
    %v5704 = vpop.f32.mrb[0].mxu0
    %5705 = vmatprep.mubr.bf16.mxu0 %v1444
    %5706 = vmatmul.mubr.bf16.gmra.mrb[0].mxu0 %v1443
    %v5707 = vpop.f32.mrb[0].mxu0
    %v5708 = vadd.f32 %v5291, %v5707
    %v5709 = vpop.f32.mrb[0].mxu0
    %v5710 = vpop.f32.mrb[0].mxu0
    %v5711 = vadd.f32 %v5294, %v5710
    %v5712 = vpop.f32.mrb[0].mxu0
    %5713 = vmatprep.mubr.bf16.mxu0 %v1450
    %5714 = vmatmul.mubr.bf16.gmra.mrb[0].mxu0 %v1449
    %v5715 = vpop.f32.mrb[0].mxu0
    %v5716 = vadd.f32 %v5299, %v5715
    %v5717 = vpop.f32.mrb[0].mxu0
    %v5718 = vpop.f32.mrb[0].mxu0
    %v5719 = vadd.f32 %v5302, %v5718
    %v5720 = vpop.f32.mrb[0].mxu0
    %5721 = vmatprep.mubr.bf16.mxu0 %v1456
    %5722 = vmatmul.mubr.bf16.gmra.mrb[0].mxu0 %v1455
    %v5723 = vpop.f32.mrb[0].mxu0
    %v5724 = vadd.f32 %v5307, %v5723
    %v5725 = vpop.f32.mrb[0].mxu0
    %v5726 = vpop.f32.mrb[0].mxu0
    %v5727 = vadd.f32 %v5310, %v5726
    %v5728 = vpop.f32.mrb[0].mxu0
    %5729 = vmatprep.mubr.bf16.mxu0 %v1462
    %5730 = vmatmul.mubr.bf16.gmra.mrb[0].mxu0 %v1461
    %v5731 = vpop.f32.mrb[0].mxu0
    %v5732 = vadd.f32 %v5315, %v5731
    %v5733 = vpop.f32.mrb[0].mxu0
    %v5734 = vpop.f32.mrb[0].mxu0
    %v5735 = vadd.f32 %v5318, %v5734
    %v5736 = vpop.f32.mrb[0].mxu0
    %5737 = vmatprep.mubr.bf16.mxu0 %v1468
    %5738 = vmatmul.mubr.bf16.gmra.mrb[0].mxu0 %v1467
    %v5739 = vpop.f32.mrb[0].mxu0
    %v5740 = vadd.f32 %v5323, %v5739
    %v5741 = vpop.f32.mrb[0].mxu0
    %v5742 = vpop.f32.mrb[0].mxu0
    %v5743 = vadd.f32 %v5326, %v5742
    %v5744 = vpop.f32.mrb[0].mxu0
    %5745 = vmatprep.mubr.bf16.mxu0 %v1474
    %5746 = vmatmul.mubr.bf16.gmra.mrb[0].mxu0 %v1473
    %v5747 = vpop.f32.mrb[0].mxu0
    %v5748 = vadd.f32 %v5331, %v5747
    %v5749 = vpop.f32.mrb[0].mxu0
    %v5750 = vpop.f32.mrb[0].mxu0
    %v5751 = vadd.f32 %v5334, %v5750
    %v5752 = vpop.f32.mrb[0].mxu0
    %5753 = vmatprep.mubr.bf16.mxu0 %v1480
    %5754 = vmatmul.mubr.bf16.gmra.mrb[0].mxu0 %v1479
    %v5755 = vpop.f32.mrb[0].mxu0
    %v5756 = vadd.f32 %v5339, %v5755
    %v5757 = vpop.f32.mrb[0].mxu0
    %v5758 = vpop.f32.mrb[0].mxu0
    %v5759 = vadd.f32 %v5342, %v5758
    %v5760 = vpop.f32.mrb[0].mxu0
    %5761 = vmatprep.mubr.bf16.mxu0 %v1486
    %5762 = vmatmul.mubr.bf16.gmra.mrb[0].mxu0 %v1485
    %v5763 = vpop.f32.mrb[0].mxu0
    %v5764 = vadd.f32 %v5347, %v5763
    %v5765 = vpop.f32.mrb[0].mxu0
    %v5766 = vpop.f32.mrb[0].mxu0
    %v5767 = vadd.f32 %v5350, %v5766
    %v5768 = vpop.f32.mrb[0].mxu0
    %5769 = vmatprep.mubr.bf16.mxu0 %v1492
    %5770 = vmatmul.mubr.bf16.gmra.mrb[0].mxu0 %v1491
    %v5771 = vpop.f32.mrb[0].mxu0
    %v5772 = vadd.f32 %v5355, %v5771
    %v5773 = vpop.f32.mrb[0].mxu0
    %v5774 = vpop.f32.mrb[0].mxu0
    %v5775 = vadd.f32 %v5358, %v5774
    %v5776 = vpop.f32.mrb[0].mxu0
    %5777 = vmatprep.mubr.bf16.mxu0 %v1498
    %5778 = vmatmul.mubr.bf16.gmra.mrb[0].mxu0 %v1497
    %v5779 = vpop.f32.mrb[0].mxu0
    %v5780 = vadd.f32 %v5363, %v5779
    %v5781 = vpop.f32.mrb[0].mxu0
    %v5782 = vpop.f32.mrb[0].mxu0
    %v5783 = vadd.f32 %v5366, %v5782
    %v5784 = vpop.f32.mrb[0].mxu0
    %5785 = vmatprep.mubr.bf16.mxu0 %v1504
    %5786 = vmatmul.mubr.bf16.gmra.mrb[0].mxu0 %v1503
    %v5787 = vpop.f32.mrb[0].mxu0
    %v5788 = vadd.f32 %v5371, %v5787
    %v5789 = vpop.f32.mrb[0].mxu0
    %v5790 = vpop.f32.mrb[0].mxu0
    %v5791 = vadd.f32 %v5374, %v5790
    %v5792 = vpop.f32.mrb[0].mxu0
    %5793 = vmatprep.mubr.bf16.mxu0 %v1510
    %5794 = vmatmul.mubr.bf16.gmra.mrb[0].mxu0 %v1509
    %v5795 = vpop.f32.mrb[0].mxu0
    %v5796 = vadd.f32 %v5379, %v5795
    %v5797 = vpop.f32.mrb[0].mxu0
    %v5798 = vpop.f32.mrb[0].mxu0
    %v5799 = vadd.f32 %v5382, %v5798
    %v5800 = vpop.f32.mrb[0].mxu0
    %5801 = vmatprep.mubr.bf16.mxu0 %v1516
    %5802 = vmatmul.mubr.bf16.gmra.mrb[0].mxu0 %v1515
    %v5803 = vpop.f32.mrb[0].mxu0
    %v5804 = vadd.f32 %v5387, %v5803
    %v5805 = vpop.f32.mrb[0].mxu0
    %v5806 = vpop.f32.mrb[0].mxu0
    %v5807 = vadd.f32 %v5390, %v5806
    %v5808 = vpop.f32.mrb[0].mxu0
    %5809 = vmatprep.mubr.bf16.mxu0 %v1522
    %5810 = vmatmul.mubr.bf16.gmra.mrb[0].mxu0 %v1521
    %v5811 = vpop.f32.mrb[0].mxu0
    %v5812 = vadd.f32 %v5395, %v5811
    %v5813 = vpop.f32.mrb[0].mxu0
    %v5814 = vpop.f32.mrb[0].mxu0
    %v5815 = vadd.f32 %v5398, %v5814
    %v5816 = vpop.f32.mrb[0].mxu0
    %5817 = vmatprep.mubr.bf16.mxu0 %v1528
    %5818 = vmatmul.mubr.bf16.gmra.mrb[0].mxu0 %v1527
    %v5819 = vpop.f32.mrb[0].mxu0
    %v5820 = vadd.f32 %v5403, %v5819
    %v5821 = vpop.f32.mrb[0].mxu0
    %v5822 = vpop.f32.mrb[0].mxu0
    %v5823 = vadd.f32 %v5406, %v5822
    %v5824 = vpop.f32.mrb[0].mxu0
    %5825 = vmatprep.mubr.bf16.mxu0 %v1534
    %5826 = vmatmul.mubr.bf16.gmra.mrb[0].mxu0 %v1533
    %v5827 = vpop.f32.mrb[0].mxu0
    %v5828 = vadd.f32 %v5411, %v5827
    %v5829 = vpop.f32.mrb[0].mxu0
    %v5830 = vpop.f32.mrb[0].mxu0
    %v5831 = vadd.f32 %v5414, %v5830
    %v5832 = vpop.f32.mrb[0].mxu0
    %5833 = vmatprep.mubr.bf16.mxu0 %v1540
    %5834 = vmatmul.mubr.bf16.gmra.mrb[0].mxu0 %v1539
    %v5835 = vpop.f32.mrb[0].mxu0
    %v5836 = vadd.f32 %v5419, %v5835
    %v5837 = vpop.f32.mrb[0].mxu0
    %v5838 = vpop.f32.mrb[0].mxu0
    %v5839 = vadd.f32 %v5422, %v5838
    %v5840 = vpop.f32.mrb[0].mxu0
    %5841 = vmatprep.mubr.bf16.mxu0 %v1546
    %5842 = vmatmul.mubr.bf16.gmra.mrb[0].mxu0 %v1545
    %v5843 = vpop.f32.mrb[0].mxu0
    %v5844 = vadd.f32 %v5427, %v5843
    %v5845 = vpop.f32.mrb[0].mxu0
    %v5846 = vpop.f32.mrb[0].mxu0
    %v5847 = vadd.f32 %v5430, %v5846
    %v5848 = vpop.f32.mrb[0].mxu0
    %5849 = vmatprep.mubr.bf16.mxu0 %v1552
    %5850 = vmatmul.mubr.bf16.gmra.mrb[0].mxu0 %v1551
    %v5851 = vpop.f32.mrb[0].mxu0
    %v5852 = vadd.f32 %v5435, %v5851
    %v5853 = vpop.f32.mrb[0].mxu0
    %v5854 = vpop.f32.mrb[0].mxu0
    %v5855 = vadd.f32 %v5438, %v5854
    %v5856 = vpop.f32.mrb[0].mxu0
    %5857 = vmatprep.mubr.bf16.mxu0 %v1558
    %5858 = vmatmul.mubr.bf16.gmra.mrb[0].mxu0 %v1557
    %v5859 = vpop.f32.mrb[0].mxu0
    %v5860 = vadd.f32 %v5443, %v5859
    %v5861 = vpop.f32.mrb[0].mxu0
    %v5862 = vpop.f32.mrb[0].mxu0
    %v5863 = vadd.f32 %v5446, %v5862
    %v5864 = vpop.f32.mrb[0].mxu0
    %5865 = vmatprep.mubr.bf16.mxu0 %v1564
    %5866 = vmatmul.mubr.bf16.gmra.mrb[0].mxu0 %v1563
    %v5867 = vpop.f32.mrb[0].mxu0
    %v5868 = vadd.f32 %v5451, %v5867
    %v5869 = vpop.f32.mrb[0].mxu0
    %v5870 = vpop.f32.mrb[0].mxu0
    %v5871 = vadd.f32 %v5454, %v5870
    %v5872 = vpop.f32.mrb[0].mxu0
    %5873 = vmatprep.mubr.bf16.mxu0 %v1570
    %5874 = vmatmul.mubr.bf16.gmra.mrb[0].mxu0 %v1569
    %v5875 = vpop.f32.mrb[0].mxu0
    %v5876 = vadd.f32 %v5459, %v5875
    %v5877 = vpop.f32.mrb[0].mxu0
    %v5878 = vpop.f32.mrb[0].mxu0
    %v5879 = vadd.f32 %v5462, %v5878
    %v5880 = vpop.f32.mrb[0].mxu0
    %5881 = vmatprep.mubr.bf16.mxu0 %v1576
    %5882 = vmatmul.mubr.bf16.gmra.mrb[0].mxu0 %v1575
    %v5883 = vpop.f32.mrb[0].mxu0
    %v5884 = vadd.f32 %v5467, %v5883
    %v5885 = vpop.f32.mrb[0].mxu0
    %v5886 = vpop.f32.mrb[0].mxu0
    %v5887 = vadd.f32 %v5470, %v5886
    %v5888 = vpop.f32.mrb[0].mxu0
    %5889 = vmatprep.mubr.bf16.mxu0 %v1582
    %5890 = vmatmul.mubr.bf16.gmra.mrb[0].mxu0 %v1581
    %v5891 = vpop.f32.mrb[0].mxu0
    %v5892 = vadd.f32 %v5475, %v5891
    %v5893 = vpop.f32.mrb[0].mxu0
    %v5894 = vpop.f32.mrb[0].mxu0
    %v5895 = vadd.f32 %v5478, %v5894
    %v5896 = vpop.f32.mrb[0].mxu0
    %5897 = vmatprep.mubr.bf16.mxu0 %v1588
    %5898 = vmatmul.mubr.bf16.gmra.mrb[0].mxu0 %v1587
    %v5899 = vpop.f32.mrb[0].mxu0
    %v5900 = vadd.f32 %v5483, %v5899
    %v5901 = vpop.f32.mrb[0].mxu0
    %v5902 = vpop.f32.mrb[0].mxu0
    %v5903 = vadd.f32 %v5486, %v5902
    %v5904 = vpop.f32.mrb[0].mxu0
    %5905 = vmatprep.mubr.bf16.mxu0 %v1594
    %5906 = vmatmul.mubr.bf16.gmra.mrb[0].mxu0 %v1593
    %v5907 = vpop.f32.mrb[0].mxu0
    %v5908 = vadd.f32 %v5491, %v5907
    %v5909 = vpop.f32.mrb[0].mxu0
    %v5910 = vpop.f32.mrb[0].mxu0
    %v5911 = vadd.f32 %v5494, %v5910
    %v5912 = vpop.f32.mrb[0].mxu0
    %5913 = vmatprep.mubr.bf16.mxu0 %v1600
    %5914 = vmatmul.mubr.bf16.gmra.mrb[0].mxu0 %v1599
    %v5915 = vpop.f32.mrb[0].mxu0
    %v5916 = vadd.f32 %v5499, %v5915
    %v5917 = vpop.f32.mrb[0].mxu0
    %v5918 = vpop.f32.mrb[0].mxu0
    %v5919 = vadd.f32 %v5502, %v5918
    %v5920 = vpop.f32.mrb[0].mxu0
    %5921 = vmatprep.mubr.bf16.mxu0 %v1606
    %5922 = vmatmul.mubr.bf16.gmra.mrb[0].mxu0 %v1605
    %v5923 = vpop.f32.mrb[0].mxu0
    %v5924 = vadd.f32 %v5507, %v5923
    %v5925 = vpop.f32.mrb[0].mxu0
    %v5926 = vpop.f32.mrb[0].mxu0
    %v5927 = vadd.f32 %v5510, %v5926
    %v5928 = vpop.f32.mrb[0].mxu0
    %5929 = vmatprep.mubr.bf16.mxu0 %v1612
    %5930 = vmatmul.mubr.bf16.gmra.mrb[0].mxu0 %v1611
    %v5931 = vpop.f32.mrb[0].mxu0
    %v5932 = vadd.f32 %v5515, %v5931
    %v5933 = vpop.f32.mrb[0].mxu0
    %v5934 = vpop.f32.mrb[0].mxu0
    %v5935 = vadd.f32 %v5518, %v5934
    %v5936 = vpop.f32.mrb[0].mxu0
    %5937 = vmatprep.mubr.bf16.mxu0 %v1618
    %5938 = vmatmul.mubr.bf16.gmra.mrb[0].mxu0 %v1617
    %v5939 = vpop.f32.mrb[0].mxu0
    %v5940 = vadd.f32 %v5523, %v5939
    %v5941 = vpop.f32.mrb[0].mxu0
    %v5942 = vpop.f32.mrb[0].mxu0
    %v5943 = vadd.f32 %v5526, %v5942
    %v5944 = vpop.f32.mrb[0].mxu0
    %5945 = vmatprep.mubr.bf16.mxu0 %v1624
    %5946 = vmatmul.mubr.bf16.gmra.mrb[0].mxu0 %v1623
    %v5947 = vpop.f32.mrb[0].mxu0
    %v5948 = vadd.f32 %v5531, %v5947
    %v5949 = vpop.f32.mrb[0].mxu0
    %v5950 = vpop.f32.mrb[0].mxu0
    %v5951 = vadd.f32 %v5534, %v5950
    %v5952 = vpop.f32.mrb[0].mxu0
    %5953 = vdwg.mxu0
    %v5954 = vadd.f32 %v4559, %v5572
    %v5955 = vadd.f32 %v4560, %v5575
    %v5956 = vadd.f32 %v4561, %v5580
    %v5957 = vadd.f32 %v4562, %v5583
    %v5958 = vadd.f32 %v4563, %v5588
    %v5959 = vadd.f32 %v4564, %v5591
    %v5960 = vadd.f32 %v4565, %v5596
    %v5961 = vadd.f32 %v4566, %v5599
    %v5962 = vadd.f32 %v4567, %v5604
    %v5963 = vadd.f32 %v4568, %v5607
    %v5964 = vadd.f32 %v4569, %v5612
    %v5965 = vadd.f32 %v4570, %v5615
    %v5966 = vadd.f32 %v4571, %v5620
    %v5967 = vadd.f32 %v4572, %v5623
    %v5968 = vadd.f32 %v4573, %v5628
    %v5969 = vadd.f32 %v4574, %v5631
    %v5970 = vadd.f32 %v4575, %v5636
    %v5971 = vadd.f32 %v4576, %v5639
    %v5972 = vadd.f32 %v4577, %v5644
    %v5973 = vadd.f32 %v4578, %v5647
    %v5974 = vadd.f32 %v4579, %v5652
    %v5975 = vadd.f32 %v4580, %v5655
    %v5976 = vadd.f32 %v4581, %v5660
    %v5977 = vadd.f32 %v4582, %v5663
    %v5978 = vadd.f32 %v4583, %v5668
    %v5979 = vadd.f32 %v4584, %v5671
    %v5980 = vadd.f32 %v4585, %v5676
    %v5981 = vadd.f32 %v4586, %v5679
    %v5982 = vadd.f32 %v4587, %v5684
    %v5983 = vadd.f32 %v4588, %v5687
    %v5984 = vadd.f32 %v4589, %v5692
    %v5985 = vadd.f32 %v4590, %v5695
    %v5986 = vadd.f32 %v4591, %v5700
    %v5987 = vadd.f32 %v4592, %v5703
    %v5988 = vadd.f32 %v4593, %v5708
    %v5989 = vadd.f32 %v4594, %v5711
    %v5990 = vadd.f32 %v4595, %v5716
    %v5991 = vadd.f32 %v4596, %v5719
    %v5992 = vadd.f32 %v4597, %v5724
    %v5993 = vadd.f32 %v4598, %v5727
    %v5994 = vadd.f32 %v4599, %v5732
    %v5995 = vadd.f32 %v4600, %v5735
    %v5996 = vadd.f32 %v4601, %v5740
    %v5997 = vadd.f32 %v4602, %v5743
    %v5998 = vadd.f32 %v4603, %v5748
    %v5999 = vadd.f32 %v4604, %v5751
    %v6000 = vadd.f32 %v4605, %v5756
    %v6001 = vadd.f32 %v4606, %v5759
    %v6002 = vadd.f32 %v4607, %v5764
    %v6003 = vadd.f32 %v4608, %v5767
    %v6004 = vadd.f32 %v4609, %v5772
    %v6005 = vadd.f32 %v4610, %v5775
    %v6006 = vadd.f32 %v4611, %v5780
    %v6007 = vadd.f32 %v4612, %v5783
    %v6008 = vadd.f32 %v4613, %v5788
    %v6009 = vadd.f32 %v4614, %v5791
    %v6010 = vadd.f32 %v4615, %v5796
    %v6011 = vadd.f32 %v4616, %v5799
    %v6012 = vadd.f32 %v4617, %v5804
    %v6013 = vadd.f32 %v4618, %v5807
    %v6014 = vadd.f32 %v4619, %v5812
    %v6015 = vadd.f32 %v4620, %v5815
    %v6016 = vadd.f32 %v4621, %v5820
    %v6017 = vadd.f32 %v4622, %v5823
    %v6018 = vadd.f32 %v4623, %v5828
    %v6019 = vadd.f32 %v4624, %v5831
    %v6020 = vadd.f32 %v4625, %v5836
    %v6021 = vadd.f32 %v4626, %v5839
    %v6022 = vadd.f32 %v4627, %v5844
    %v6023 = vadd.f32 %v4628, %v5847
    %v6024 = vadd.f32 %v4629, %v5852
    %v6025 = vadd.f32 %v4630, %v5855
    %v6026 = vadd.f32 %v4631, %v5860
    %v6027 = vadd.f32 %v4632, %v5863
    %v6028 = vadd.f32 %v4633, %v5868
    %v6029 = vadd.f32 %v4634, %v5871
    %v6030 = vadd.f32 %v4635, %v5876
    %v6031 = vadd.f32 %v4636, %v5879
    %v6032 = vadd.f32 %v4637, %v5884
    %v6033 = vadd.f32 %v4638, %v5887
    %v6034 = vadd.f32 %v4639, %v5892
    %v6035 = vadd.f32 %v4640, %v5895
    %v6036 = vadd.f32 %v4641, %v5900
    %v6037 = vadd.f32 %v4642, %v5903
    %v6038 = vadd.f32 %v4643, %v5908
    %v6039 = vadd.f32 %v4644, %v5911
    %v6040 = vadd.f32 %v4645, %v5916
    %v6041 = vadd.f32 %v4646, %v5919
    %v6042 = vadd.f32 %v4647, %v5924
    %v6043 = vadd.f32 %v4648, %v5927
    %v6044 = vadd.f32 %v4649, %v5932
    %v6045 = vadd.f32 %v4650, %v5935
    %v6046 = vadd.f32 %v4651, %v5940
    %v6047 = vadd.f32 %v4652, %v5943
    %v6048 = vadd.f32 %v4653, %v5948
    %v6049 = vadd.f32 %v4654, %v5951
    %v6050 = vmul.f32 %v5954, 0.25
    %v6051 = vmul.f32 %v5955, 0.25
    %v6052 = vmul.f32 %v5956, 0.25
    %v6053 = vmul.f32 %v5957, 0.25
    %v6054 = vmul.f32 %v5958, 0.25
    %v6055 = vmul.f32 %v5959, 0.25
    %v6056 = vmul.f32 %v5960, 0.25
    %v6057 = vmul.f32 %v5961, 0.25
    %v6058 = vmul.f32 %v5962, 0.25
    %v6059 = vmul.f32 %v5963, 0.25
    %v6060 = vmul.f32 %v5964, 0.25
    %v6061 = vmul.f32 %v5965, 0.25
    %v6062 = vmul.f32 %v5966, 0.25
    %v6063 = vmul.f32 %v5967, 0.25
    %v6064 = vmul.f32 %v5968, 0.25
    %v6065 = vmul.f32 %v5969, 0.25
    %v6066 = vmul.f32 %v5970, 0.25
    %v6067 = vmul.f32 %v5971, 0.25
    %v6068 = vmul.f32 %v5972, 0.25
    %v6069 = vmul.f32 %v5973, 0.25
    %v6070 = vmul.f32 %v5974, 0.25
    %v6071 = vmul.f32 %v5975, 0.25
    %v6072 = vmul.f32 %v5976, 0.25
    %v6073 = vmul.f32 %v5977, 0.25
    %v6074 = vmul.f32 %v5978, 0.25
    %v6075 = vmul.f32 %v5979, 0.25
    %v6076 = vmul.f32 %v5980, 0.25
    %v6077 = vmul.f32 %v5981, 0.25
    %v6078 = vmul.f32 %v5982, 0.25
    %v6079 = vmul.f32 %v5983, 0.25
    %v6080 = vmul.f32 %v5984, 0.25
    %v6081 = vmul.f32 %v5985, 0.25
    %v6082 = vmul.f32 %v5986, 0.25
    %v6083 = vmul.f32 %v5987, 0.25
    %v6084 = vmul.f32 %v5988, 0.25
    %v6085 = vmul.f32 %v5989, 0.25
    %v6086 = vmul.f32 %v5990, 0.25
    %v6087 = vmul.f32 %v5991, 0.25
    %v6088 = vmul.f32 %v5992, 0.25
    %v6089 = vmul.f32 %v5993, 0.25
    %v6090 = vmul.f32 %v5994, 0.25
    %v6091 = vmul.f32 %v5995, 0.25
    %v6092 = vmul.f32 %v5996, 0.25
    %v6093 = vmul.f32 %v5997, 0.25
    %v6094 = vmul.f32 %v5998, 0.25
    %v6095 = vmul.f32 %v5999, 0.25
    %v6096 = vmul.f32 %v6000, 0.25
    %v6097 = vmul.f32 %v6001, 0.25
    %v6098 = vmul.f32 %v6002, 0.25
    %v6099 = vmul.f32 %v6003, 0.25
    %v6100 = vmul.f32 %v6004, 0.25
    %v6101 = vmul.f32 %v6005, 0.25
    %v6102 = vmul.f32 %v6006, 0.25
    %v6103 = vmul.f32 %v6007, 0.25
    %v6104 = vmul.f32 %v6008, 0.25
    %v6105 = vmul.f32 %v6009, 0.25
    %v6106 = vmul.f32 %v6010, 0.25
    %v6107 = vmul.f32 %v6011, 0.25
    %v6108 = vmul.f32 %v6012, 0.25
    %v6109 = vmul.f32 %v6013, 0.25
    %v6110 = vmul.f32 %v6014, 0.25
    %v6111 = vmul.f32 %v6015, 0.25
    %v6112 = vmul.f32 %v6016, 0.25
    %v6113 = vmul.f32 %v6017, 0.25
    %v6114 = vmul.f32 %v6018, 0.25
    %v6115 = vmul.f32 %v6019, 0.25
    %v6116 = vmul.f32 %v6020, 0.25
    %v6117 = vmul.f32 %v6021, 0.25
    %v6118 = vmul.f32 %v6022, 0.25
    %v6119 = vmul.f32 %v6023, 0.25
    %v6120 = vmul.f32 %v6024, 0.25
    %v6121 = vmul.f32 %v6025, 0.25
    %v6122 = vmul.f32 %v6026, 0.25
    %v6123 = vmul.f32 %v6027, 0.25
    %v6124 = vmul.f32 %v6028, 0.25
    %v6125 = vmul.f32 %v6029, 0.25
    %v6126 = vmul.f32 %v6030, 0.25
    %v6127 = vmul.f32 %v6031, 0.25
    %v6128 = vmul.f32 %v6032, 0.25
    %v6129 = vmul.f32 %v6033, 0.25
    %v6130 = vmul.f32 %v6034, 0.25
    %v6131 = vmul.f32 %v6035, 0.25
    %v6132 = vmul.f32 %v6036, 0.25
    %v6133 = vmul.f32 %v6037, 0.25
    %v6134 = vmul.f32 %v6038, 0.25
    %v6135 = vmul.f32 %v6039, 0.25
    %v6136 = vmul.f32 %v6040, 0.25
    %v6137 = vmul.f32 %v6041, 0.25
    %v6138 = vmul.f32 %v6042, 0.25
    %v6139 = vmul.f32 %v6043, 0.25
    %v6140 = vmul.f32 %v6044, 0.25
    %v6141 = vmul.f32 %v6045, 0.25
    %v6142 = vmul.f32 %v6046, 0.25
    %v6143 = vmul.f32 %v6047, 0.25
    %v6144 = vmul.f32 %v6048, 0.25
    %v6145 = vmul.f32 %v6049, 0.25
    %6146 = vst [vmem:[#allocation7] sm:$0xff] %v6050
    %6147 = vst [vmem:[#allocation7 + $0x8] sm:$0xff] %v6051
    %6148 = vst [vmem:[#allocation7 + $0x10] sm:$0xff] %v6052
    %6149 = vst [vmem:[#allocation7 + $0x18] sm:$0xff] %v6053
    %6150 = vst [vmem:[#allocation7 + $0x20] sm:$0xff] %v6054
    %6151 = vst [vmem:[#allocation7 + $0x28] sm:$0xff] %v6055
    %6152 = vst [vmem:[#allocation7 + $0x30] sm:$0xff] %v6056
    %6153 = vst [vmem:[#allocation7 + $0x38] sm:$0xff] %v6057
    %6154 = vst [vmem:[#allocation7 + $0x40] sm:$0xff] %v6058
    %6155 = vst [vmem:[#allocation7 + $0x48] sm:$0xff] %v6059
    %6156 = vst [vmem:[#allocation7 + $0x50] sm:$0xff] %v6060
    %6157 = vst [vmem:[#allocation7 + $0x58] sm:$0xff] %v6061
    %6158 = vst [vmem:[#allocation7 + $0x60] sm:$0xff] %v6062
    %6159 = vst [vmem:[#allocation7 + $0x68] sm:$0xff] %v6063
    %6160 = vst [vmem:[#allocation7 + $0x70] sm:$0xff] %v6064
    %6161 = vst [vmem:[#allocation7 + $0x78] sm:$0xff] %v6065
    %6162 = vst [vmem:[#allocation7 + $0x80] sm:$0xff] %v6066
    %6163 = vst [vmem:[#allocation7 + $0x88] sm:$0xff] %v6067
    %6164 = vst [vmem:[#allocation7 + $0x90] sm:$0xff] %v6068
    %6165 = vst [vmem:[#allocation7 + $0x98] sm:$0xff] %v6069
    %6166 = vst [vmem:[#allocation7 + $0xa0] sm:$0xff] %v6070
    %6167 = vst [vmem:[#allocation7 + $0xa8] sm:$0xff] %v6071
    %6168 = vst [vmem:[#allocation7 + $0xb0] sm:$0xff] %v6072
    %6169 = vst [vmem:[#allocation7 + $0xb8] sm:$0xff] %v6073
    %6170 = vst [vmem:[#allocation7 + $0xc0] sm:$0xff] %v6074
    %6171 = vst [vmem:[#allocation7 + $0xc8] sm:$0xff] %v6075
    %6172 = vst [vmem:[#allocation7 + $0xd0] sm:$0xff] %v6076
    %6173 = vst [vmem:[#allocation7 + $0xd8] sm:$0xff] %v6077
    %6174 = vst [vmem:[#allocation7 + $0xe0] sm:$0xff] %v6078
    %6175 = vst [vmem:[#allocation7 + $0xe8] sm:$0xff] %v6079
    %6176 = vst [vmem:[#allocation7 + $0xf0] sm:$0xff] %v6080
    %6177 = vst [vmem:[#allocation7 + $0xf8] sm:$0xff] %v6081
    %6178 = vst [vmem:[#allocation7 + $0x100] sm:$0xff] %v6082
    %6179 = vst [vmem:[#allocation7 + $0x108] sm:$0xff] %v6083
    %6180 = vst [vmem:[#allocation7 + $0x110] sm:$0xff] %v6084
    %6181 = vst [vmem:[#allocation7 + $0x118] sm:$0xff] %v6085
    %6182 = vst [vmem:[#allocation7 + $0x120] sm:$0xff] %v6086
    %6183 = vst [vmem:[#allocation7 + $0x128] sm:$0xff] %v6087
    %6184 = vst [vmem:[#allocation7 + $0x130] sm:$0xff] %v6088
    %6185 = vst [vmem:[#allocation7 + $0x138] sm:$0xff] %v6089
    %6186 = vst [vmem:[#allocation7 + $0x140] sm:$0xff] %v6090
    %6187 = vst [vmem:[#allocation7 + $0x148] sm:$0xff] %v6091
    %6188 = vst [vmem:[#allocation7 + $0x150] sm:$0xff] %v6092
    %6189 = vst [vmem:[#allocation7 + $0x158] sm:$0xff] %v6093
    %6190 = vst [vmem:[#allocation7 + $0x160] sm:$0xff] %v6094
    %6191 = vst [vmem:[#allocation7 + $0x168] sm:$0xff] %v6095
    %6192 = vst [vmem:[#allocation7 + $0x170] sm:$0xff] %v6096
    %6193 = vst [vmem:[#allocation7 + $0x178] sm:$0xff] %v6097
    %6194 = vst [vmem:[#allocation7 + $0x180] sm:$0xff] %v6098
    %6195 = vst [vmem:[#allocation7 + $0x188] sm:$0xff] %v6099
    %6196 = vst [vmem:[#allocation7 + $0x190] sm:$0xff] %v6100
    %6197 = vst [vmem:[#allocation7 + $0x198] sm:$0xff] %v6101
    %6198 = vst [vmem:[#allocation7 + $0x1a0] sm:$0xff] %v6102
    %6199 = vst [vmem:[#allocation7 + $0x1a8] sm:$0xff] %v6103
    %6200 = vst [vmem:[#allocation7 + $0x1b0] sm:$0xff] %v6104
    %6201 = vst [vmem:[#allocation7 + $0x1b8] sm:$0xff] %v6105
    %6202 = vst [vmem:[#allocation7 + $0x1c0] sm:$0xff] %v6106
    %6203 = vst [vmem:[#allocation7 + $0x1c8] sm:$0xff] %v6107
    %6204 = vst [vmem:[#allocation7 + $0x1d0] sm:$0xff] %v6108
    %6205 = vst [vmem:[#allocation7 + $0x1d8] sm:$0xff] %v6109
    %6206 = vst [vmem:[#allocation7 + $0x1e0] sm:$0xff] %v6110
    %6207 = vst [vmem:[#allocation7 + $0x1e8] sm:$0xff] %v6111
    %6208 = vst [vmem:[#allocation7 + $0x1f0] sm:$0xff] %v6112
    %6209 = vst [vmem:[#allocation7 + $0x1f8] sm:$0xff] %v6113
    %6210 = vst [vmem:[#allocation7 + $0x200] sm:$0xff] %v6114
    %6211 = vst [vmem:[#allocation7 + $0x208] sm:$0xff] %v6115
    %6212 = vst [vmem:[#allocation7 + $0x210] sm:$0xff] %v6116
    %6213 = vst [vmem:[#allocation7 + $0x218] sm:$0xff] %v6117
    %6214 = vst [vmem:[#allocation7 + $0x220] sm:$0xff] %v6118
    %6215 = vst [vmem:[#allocation7 + $0x228] sm:$0xff] %v6119
    %6216 = vst [vmem:[#allocation7 + $0x230] sm:$0xff] %v6120
    %6217 = vst [vmem:[#allocation7 + $0x238] sm:$0xff] %v6121
    %6218 = vst [vmem:[#allocation7 + $0x240] sm:$0xff] %v6122
    %6219 = vst [vmem:[#allocation7 + $0x248] sm:$0xff] %v6123
    %6220 = vst [vmem:[#allocation7 + $0x250] sm:$0xff] %v6124
    %6221 = vst [vmem:[#allocation7 + $0x258] sm:$0xff] %v6125
    %6222 = vst [vmem:[#allocation7 + $0x260] sm:$0xff] %v6126
    %6223 = vst [vmem:[#allocation7 + $0x268] sm:$0xff] %v6127
    %6224 = vst [vmem:[#allocation7 + $0x270] sm:$0xff] %v6128
    %6225 = vst [vmem:[#allocation7 + $0x278] sm:$0xff] %v6129
    %6226 = vst [vmem:[#allocation7 + $0x280] sm:$0xff] %v6130
    %6227 = vst [vmem:[#allocation7 + $0x288] sm:$0xff] %v6131
    %6228 = vst [vmem:[#allocation7 + $0x290] sm:$0xff] %v6132
    %6229 = vst [vmem:[#allocation7 + $0x298] sm:$0xff] %v6133
    %6230 = vst [vmem:[#allocation7 + $0x2a0] sm:$0xff] %v6134
    %6231 = vst [vmem:[#allocation7 + $0x2a8] sm:$0xff] %v6135
    %6232 = vst [vmem:[#allocation7 + $0x2b0] sm:$0xff] %v6136
    %6233 = vst [vmem:[#allocation7 + $0x2b8] sm:$0xff] %v6137
    %6234 = vst [vmem:[#allocation7 + $0x2c0] sm:$0xff] %v6138
    %6235 = vst [vmem:[#allocation7 + $0x2c8] sm:$0xff] %v6139
    %6236 = vst [vmem:[#allocation7 + $0x2d0] sm:$0xff] %v6140
    %6237 = vst [vmem:[#allocation7 + $0x2d8] sm:$0xff] %v6141
    %6238 = vst [vmem:[#allocation7 + $0x2e0] sm:$0xff] %v6142
    %6239 = vst [vmem:[#allocation7 + $0x2e8] sm:$0xff] %v6143
    %6240 = vst [vmem:[#allocation7 + $0x2f0] sm:$0xff] %v6144
    %6241 = vst [vmem:[#allocation7 + $0x2f8] sm:$0xff] %v6145
    // Predicated region
    $region18: #{tpu_custom_call.1} parent=1 // pred_check
      _
    $region19: #{tpu_custom_call.1} parent=1 // pred_check_branch
      %6243 = sbr.rel (0) target = $region21
    $region20: #{tpu_custom_call.1} parent=1 // pred_region
      %s6245 = ssub.s32 12288, 12288
      %6246 = vsyncadd [#allocation4], %s6245
      %s6247 = sshll.u32 [#allocation7], 4
      %s6248 = int_to_ptr.vmem [resolvable:$true] %s6247
      %6253 = dma.vmem_to_hbm [thread:$0]  %s6248, 12288, %s2, [#allocation4], 128, 128, 8
    $region21: #{tpu_custom_call.1} parent=1 // pred_fallthru
      _
    // Predicated region
    $region22: #{tpu_custom_call.1} parent=1 // pred_check
      _
    $region23: #{tpu_custom_call.1} parent=1 // pred_check_branch
      %6255 = sbr.rel (0) target = $region25
    $region24: #{tpu_custom_call.1} parent=1 // pred_region
      %6256 = dma.done [#allocation4], 12288
    $region25: #{tpu_custom_call.1} parent=1 // pred_fallthru
      _
    %6257 = vsyncpa [#allocation3], 1
    %6258 = vsyncpa [#allocation6], 1
    %6259 = vsyncpa [#allocation4], 1

</llo_original>
